<compile_context>
chip_gen: v6e
topology: v6e:2x2x1
jax: 0.10.0
libtpu: 0.0.40
codegen_flags: <defaults>
</compile_context>

<pallas_src>
import functools

import numpy as np

import jax
import jax.numpy as jnp
from jax import lax
from jax.experimental import pallas as pl
from jax.experimental.pallas import tpu as pltpu


_MATMUL_DTYPE = jnp.float32   # jnp.bfloat16 on v6e/v7x for bandwidth-bound sizes


# ----------------------------------------------------------------------------
# In-kernel pieces
# ----------------------------------------------------------------------------
def _conv3x3_stage(act, w_ref, b_ref, half_w, act_kind):
    """One 3x3 conv (padding=1, stride=1) + bias + activation, all in VMEM/vregs.

    act:    (Cin, Nh) f32, pixels flattened row-major (h-major) on lanes.
    w_ref:  (9, Cout, Cin) VMEM ref, tap-major (kh*3 + kw).
    b_ref:  (Cout, 1) VMEM ref.
    Returns (Cout, Nh) f32.
    """
    cin, nh = act.shape
    cout = w_ref.shape[1]
    # column (w) index of every flattened pixel, for row-boundary masking
    col = lax.broadcasted_iota(jnp.int32, (cin, nh), 1) % half_w

    acc = jnp.zeros((cout, nh), jnp.float32)
    for t in range(9):                       # static unroll over the 9 taps
        dh = t // 3 - 1
        dw = t % 3 - 1
        d = dh * half_w + dw                 # flattened-pixel shift
        if d > 0:
            sh = jnp.concatenate(
                [act[:, d:], jnp.zeros((cin, d), act.dtype)], axis=1)
        elif d < 0:
            sh = jnp.concatenate(
                [jnp.zeros((cin, -d), act.dtype), act[:, :nh + d]], axis=1)
        else:
            sh = act
        # zero out taps that crossed a row boundary (the h boundary is already
        # handled by the zero fill above)
        if dw == 1:
            sh = jnp.where(col < half_w - 1, sh, 0.0)
        elif dw == -1:
            sh = jnp.where(col >= 1, sh, 0.0)
        acc = acc + jnp.dot(w_ref[t].astype(_MATMUL_DTYPE),
                            sh.astype(_MATMUL_DTYPE),
                            preferred_element_type=jnp.float32)

    acc = acc + b_ref[...]                   # (Cout, Nh) + (Cout, 1)
    if act_kind == "relu":
        return jnp.maximum(acc, 0.0)
    # sigmoid (exp lands on the EUP; the divide is negligible at these sizes)
    return 1.0 / (1.0 + jnp.exp(-acc))


def _mfa_fused_kernel(h_ref, x_ref, w1_ref, b1_ref, w2_ref, b2_ref,
                      w3_ref, b3_ref, up_ref, o_ref, *, half_w):
    h = h_ref[0].astype(jnp.float32)                                   # (4c, Nh)
    a = _conv3x3_stage(h, w1_ref, b1_ref, half_w, "relu")              # (c, Nh)
    a = _conv3x3_stage(a, w2_ref, b2_ref, half_w, "relu")              # (c, Nh)
    s = _conv3x3_stage(a, w3_ref, b3_ref, half_w, "sigmoid")           # (c, Nh)
    # bilinear x2 upsample as one MXU dot -> lane-dense (c, Nf)
    up = jnp.dot(s, up_ref[...], preferred_element_type=jnp.float32)   # (c, Nf)
    o_ref[0] = (up * x_ref[0].astype(jnp.float32)).astype(o_ref.dtype)


# ----------------------------------------------------------------------------
# Plain-JAX glue
# ----------------------------------------------------------------------------
def haar_dwt(x):
    """(B, C, H, W) -> (B, 4C, H/2, W/2), standard MWCNN Haar transform."""
    x01 = x[:, :, 0::2, :] / 2.0
    x02 = x[:, :, 1::2, :] / 2.0
    x1 = x01[:, :, :, 0::2]
    x2 = x02[:, :, :, 0::2]
    x3 = x01[:, :, :, 1::2]
    x4 = x02[:, :, :, 1::2]
    ll = x1 + x2 + x3 + x4
    hl = -x1 - x2 + x3 + x4
    lh = -x1 + x2 - x3 + x4
    hh = x1 - x2 - x3 + x4
    return jnp.concatenate([ll, hl, lh, hh], axis=1)


def _up1d_matrix(n):
    """(2n, n): 1-D bilinear x2 (scale_factor=2, align_corners=False)."""
    m = np.zeros((2 * n, n), np.float32)
    for i in range(n):
        m[2 * i, i] += 0.75
        m[2 * i, max(i - 1, 0)] += 0.25
        m[2 * i + 1, i] += 0.75
        m[2 * i + 1, min(i + 1, n - 1)] += 0.25
    return m


def _bilinear_up2_matrix(h2, w2):
    """(h2*w2, 4*h2*w2): 2-D bilinear x2 on row-major-flattened pixels."""
    u = np.kron(_up1d_matrix(h2), _up1d_matrix(w2))   # (H*W, Nh)
    return jnp.asarray(u.T)                            # (Nh, H*W)


def mfa_forward(x, params):
    B, c, H, W = x.shape
    H2, W2 = H // 2, W // 2
    Nh, Nf = H2 * W2, H * W

    h = haar_dwt(x).reshape(B, 4 * c, Nh)              # (B, 4c, Nh), free reshape
    xf = x.reshape(B, c, Nf)                           # (B, c, Nf), free reshape

    def taps(w):                                       # OIHW -> (9, O, I)
        o, i = w.shape[0], w.shape[1]
        return jnp.transpose(w, (2, 3, 0, 1)).reshape(9, o, i).astype(jnp.float32)

    w1, w2, w3 = taps(params["w1"]), taps(params["w2"]), taps(params["w3"])
    b1 = params["b1"].reshape(c, 1).astype(jnp.float32)
    b2 = params["b2"].reshape(c, 1).astype(jnp.float32)
    b3 = params["b3"].reshape(c, 1).astype(jnp.float32)
    up_mat = _bilinear_up2_matrix(H2, W2)              # (Nh, Nf), constant

    const3 = lambda i: (0, 0, 0)
    const2 = lambda i: (0, 0)

    out = pl.pallas_call(
        functools.partial(_mfa_fused_kernel, half_w=W2),
        out_shape=jax.ShapeDtypeStruct((B, c, Nf), x.dtype),
        grid=(B,),
        in_specs=[
            pl.BlockSpec((1, 4 * c, Nh), lambda i: (i, 0, 0)),   # haar coeffs
            pl.BlockSpec((1, c, Nf), lambda i: (i, 0, 0)),       # x (for * x)
            pl.BlockSpec((9, c, 4 * c), const3),                 # w1 taps
            pl.BlockSpec((c, 1), const2),                        # b1
            pl.BlockSpec((9, c, c), const3),                     # w2 taps
            pl.BlockSpec((c, 1), const2),                        # b2
            pl.BlockSpec((9, c, c), const3),                     # w3 taps
            pl.BlockSpec((c, 1), const2),                        # b3
            pl.BlockSpec((Nh, Nf), const2),                      # upsample matrix
        ],
        out_specs=pl.BlockSpec((1, c, Nf), lambda i: (i, 0, 0)),
        compiler_params=pltpu.CompilerParams(
            dimension_semantics=("parallel",)),
    )(h, xf, w1, b1, w2, b2, w3, b3, up_mat)

    return out.reshape(B, c, H, W)


# ----------------------------------------------------------------------------
# Pure-JAX reference (XLA conv + explicit upsample) for the correctness check
# ----------------------------------------------------------------------------
def bilinear_up2(x):
    """F.interpolate(scale_factor=2, mode='bilinear', align_corners=False), NCHW."""
    def up_axis(v, axis):
        n = v.shape[axis]
        first = lax.slice_in_dim(v, 0, 1, axis=axis)
        last = lax.slice_in_dim(v, n - 1, n, axis=axis)
        prev = jnp.concatenate([first, lax.slice_in_dim(v, 0, n - 1, axis=axis)], axis=axis)
        nxt = jnp.concatenate([lax.slice_in_dim(v, 1, n, axis=axis), last], axis=axis)
        even = 0.75 * v + 0.25 * prev     # out[2i]
        odd = 0.75 * v + 0.25 * nxt       # out[2i+1]
        stacked = jnp.stack([even, odd], axis=axis + 1)
        new_shape = list(v.shape)
        new_shape[axis] = 2 * n
        return stacked.reshape(new_shape)

    x = up_axis(x, 2)
    x = up_axis(x, 3)
    return x


def _ref_conv3x3(x, w, b, act):
    y = lax.conv_general_dilated(
        x, w, window_strides=(1, 1), padding="SAME",
        dimension_numbers=("NCHW", "OIHW", "NCHW"))
    y = y + b.reshape(1, -1, 1, 1)
    if act == "relu":
        y = jnp.maximum(y, 0.0)
    else:
        y = 1.0 / (1.0 + jnp.exp(-y))
    return y


def _ref_forward(x, params):
    h = haar_dwt(x)
    a = _ref_conv3x3(h, params["w1"], params["b1"], "relu")
    a = _ref_conv3x3(a, params["w2"], params["b2"], "relu")
    s = _ref_conv3x3(a, params["w3"], params["b3"], "sigmoid")
    return bilinear_up2(s) * x


if __name__ == "__main__":
    B, c, H, W = 2, 4, 16, 16
    key = jax.random.PRNGKey(0)
    kx, k1, k2, k3, k4, k5, k6 = jax.random.split(key, 7)

    x = jax.random.normal(kx, (B, c, H, W), jnp.float32)
    params = {
        "w1": 0.1 * jax.random.normal(k1, (c, 4 * c, 3, 3), jnp.float32),
        "b1": 0.1 * jax.random.normal(k2, (c,), jnp.float32),
        "w2": 0.1 * jax.random.normal(k3, (c, c, 3, 3), jnp.float32),
        "b2": 0.1 * jax.random.normal(k4, (c,), jnp.float32),
        "w3": 0.1 * jax.random.normal(k5, (c, c, 3, 3), jnp.float32),
        "b3": 0.1 * jax.random.normal(k6, (c,), jnp.float32),
    }

    y = jax.jit(mfa_forward)(x, params)
    jax.block_until_ready(y)

    y_ref = _ref_forward(x, params)
    assert y.shape == x.shape
    # With full f32 MXU passes the observed mismatch is ~1e-6; the tolerance
    # is kept conservative so the check is robust to platform-default matmul
    # pass-precision differences between the Pallas dots and the XLA conv ref.
    assert jnp.allclose(y, y_ref, rtol=2e-2, atol=2e-2), "Pallas vs reference mismatch"

    print("KERNEL_OK")
</pallas_src>

<mosaic_0001>
module attributes {stable_mosaic.version = 11 : i64} {
  func.func @_mfa_fused_kernel(%arg0: i32, %arg1: memref<1x16x64xf32, #tpu.memory_space<vmem>>, %arg2: memref<1x4x256xf32, #tpu.memory_space<vmem>>, %arg3: memref<9x4x16xf32, #tpu.memory_space<vmem>>, %arg4: memref<4x1xf32, #tpu.memory_space<vmem>>, %arg5: memref<9x4x4xf32, #tpu.memory_space<vmem>>, %arg6: memref<4x1xf32, #tpu.memory_space<vmem>>, %arg7: memref<9x4x4xf32, #tpu.memory_space<vmem>>, %arg8: memref<4x1xf32, #tpu.memory_space<vmem>>, %arg9: memref<64x256xf32, #tpu.memory_space<vmem>>, %arg10: memref<1x4x256xf32, #tpu.memory_space<vmem>>) attributes {dimension_semantics = [#tpu.dimension_semantics<parallel>], iteration_bounds = array<i64: 2>, scalar_prefetch = 0 : i64, scratch_operands = 0 : i64, tpu.core_type = #tpu.core_type<tc>, window_params = [{transform_indices = @transform_0, window_bounds = array<i64: 1, 16, 64>}, {transform_indices = @transform_1, window_bounds = array<i64: 1, 4, 256>}, {pipeline_mode = #tpu.pipeline_mode<synchronous>, transform_indices = @transform_2, window_bounds = array<i64: 9, 4, 16>}, {pipeline_mode = #tpu.pipeline_mode<synchronous>, transform_indices = @transform_3, window_bounds = array<i64: 4, 1>}, {pipeline_mode = #tpu.pipeline_mode<synchronous>, transform_indices = @transform_4, window_bounds = array<i64: 9, 4, 4>}, {pipeline_mode = #tpu.pipeline_mode<synchronous>, transform_indices = @transform_5, window_bounds = array<i64: 4, 1>}, {pipeline_mode = #tpu.pipeline_mode<synchronous>, transform_indices = @transform_6, window_bounds = array<i64: 9, 4, 4>}, {pipeline_mode = #tpu.pipeline_mode<synchronous>, transform_indices = @transform_7, window_bounds = array<i64: 4, 1>}, {pipeline_mode = #tpu.pipeline_mode<synchronous>, transform_indices = @transform_8, window_bounds = array<i64: 64, 256>}, {transform_indices = @transform_9, window_bounds = array<i64: 1, 4, 256>}]} {
    %c0 = arith.constant 0 : index
    %c0_0 = arith.constant 0 : index
    %c0_1 = arith.constant 0 : index
    %0 = vector.load %arg1[%c0, %c0_0, %c0_1] : memref<1x16x64xf32, #tpu.memory_space<vmem>>, vector<1x16x64xf32>
    %1 = vector.shape_cast %0 : vector<1x16x64xf32> to vector<16x64xf32>
    %2 = tpu.iota {dimensions = array<i32: 1>} : vector<16x64xi32>
    %c8_i32 = arith.constant 8 : i32
    %c0_i32 = arith.constant 0 : i32
    %3 = arith.cmpi eq, %c8_i32, %c0_i32 : i32
    %c1_i32 = arith.constant 1 : i32
    %4 = arith.select %3, %c1_i32, %c8_i32 : i32
    %5 = vector.broadcast %4 : i32 to vector<16x64xi32>
    %6 = arith.remsi %2, %5 : vector<16x64xi32>
    %c0_i32_2 = arith.constant 0 : i32
    %7 = vector.broadcast %c0_i32_2 : i32 to vector<16x64xi32>
    %8 = arith.cmpi ne, %6, %7 : vector<16x64xi32>
    %c0_i32_3 = arith.constant 0 : i32
    %9 = vector.broadcast %c0_i32_3 : i32 to vector<16x64xi32>
    %10 = arith.cmpi slt, %6, %9 : vector<16x64xi32>
    %c0_i32_4 = arith.constant 0 : i32
    %11 = arith.cmpi slt, %4, %c0_i32_4 : i32
    %12 = vector.broadcast %11 : i1 to vector<16x64xi1>
    %13 = vector.broadcast %12 : vector<16x64xi1> to vector<16x64xi1>
    %14 = arith.xori %10, %13 : vector<16x64xi1>
    %15 = arith.andi %14, %8 : vector<16x64xi1>
    %16 = vector.broadcast %4 : i32 to vector<16x64xi32>
    %17 = arith.addi %6, %16 : vector<16x64xi32>
    %18 = arith.select %15, %17, %6 : vector<16x64xi1>, vector<16x64xi32>
    %cst = arith.constant 0.000000e+00 : f32
    %19 = vector.broadcast %cst : f32 to vector<4x64xf32>
    %cst_5 = arith.constant 0.000000e+00 : f32
    %20 = vector.broadcast %cst_5 : f32 to vector<16x9xf32>
    %21 = vector.extract_strided_slice %1 {offsets = [0, 0], sizes = [16, 55], strides = [1, 1]} : vector<16x64xf32> to vector<16x55xf32>
    %22 = tpu.concatenate %20, %21 in 1 : vector<16x9xf32>, vector<16x55xf32> -> vector<16x64xf32>
    %c1_i32_6 = arith.constant 1 : i32
    %23 = vector.broadcast %c1_i32_6 : i32 to vector<16x64xi32>
    %24 = arith.cmpi sge, %18, %23 : vector<16x64xi32>
    %cst_7 = arith.constant 0.000000e+00 : f32
    %25 = vector.broadcast %cst_7 : f32 to vector<16x64xf32>
    %26 = arith.select %24, %22, %25 : vector<16x64xi1>, vector<16x64xf32>
    %c0_8 = arith.constant 0 : index
    %c0_9 = arith.constant 0 : index
    %c0_10 = arith.constant 0 : index
    %27 = vector.load %arg3[%c0_8, %c0_9, %c0_10] : memref<9x4x16xf32, #tpu.memory_space<vmem>>, vector<1x4x16xf32>
    %28 = vector.shape_cast %27 : vector<1x4x16xf32> to vector<4x16xf32>
    %cst_11 = arith.constant dense<0.000000e+00> : vector<4x64xf32>
    %29 = tpu.matmul %28, %26, %cst_11 {dimension_numbers = #tpu.dot_dimension_numbers<[1], [0], [0], [1], [0, 0, 1, 1], [], []>} : vector<4x16xf32>, vector<16x64xf32>, vector<4x64xf32> -> vector<4x64xf32>
    %30 = arith.addf %19, %29 : vector<4x64xf32>
    %cst_12 = arith.constant 0.000000e+00 : f32
    %31 = vector.broadcast %cst_12 : f32 to vector<16x8xf32>
    %32 = vector.extract_strided_slice %1 {offsets = [0, 0], sizes = [16, 56], strides = [1, 1]} : vector<16x64xf32> to vector<16x56xf32>
    %33 = tpu.concatenate %31, %32 in 1 : vector<16x8xf32>, vector<16x56xf32> -> vector<16x64xf32>
    %c1 = arith.constant 1 : index
    %c0_13 = arith.constant 0 : index
    %c0_14 = arith.constant 0 : index
    %34 = vector.load %arg3[%c1, %c0_13, %c0_14] : memref<9x4x16xf32, #tpu.memory_space<vmem>>, vector<1x4x16xf32>
    %35 = vector.shape_cast %34 : vector<1x4x16xf32> to vector<4x16xf32>
    %cst_15 = arith.constant dense<0.000000e+00> : vector<4x64xf32>
    %36 = tpu.matmul %35, %33, %cst_15 {dimension_numbers = #tpu.dot_dimension_numbers<[1], [0], [0], [1], [0, 0, 1, 1], [], []>} : vector<4x16xf32>, vector<16x64xf32>, vector<4x64xf32> -> vector<4x64xf32>
    %37 = arith.addf %30, %36 : vector<4x64xf32>
    %cst_16 = arith.constant 0.000000e+00 : f32
    %38 = vector.broadcast %cst_16 : f32 to vector<16x7xf32>
    %39 = vector.extract_strided_slice %1 {offsets = [0, 0], sizes = [16, 57], strides = [1, 1]} : vector<16x64xf32> to vector<16x57xf32>
    %40 = tpu.concatenate %38, %39 in 1 : vector<16x7xf32>, vector<16x57xf32> -> vector<16x64xf32>
    %c7_i32 = arith.constant 7 : i32
    %41 = vector.broadcast %c7_i32 : i32 to vector<16x64xi32>
    %42 = arith.cmpi slt, %18, %41 : vector<16x64xi32>
    %cst_17 = arith.constant 0.000000e+00 : f32
    %43 = vector.broadcast %cst_17 : f32 to vector<16x64xf32>
    %44 = arith.select %42, %40, %43 : vector<16x64xi1>, vector<16x64xf32>
    %c2 = arith.constant 2 : index
    %c0_18 = arith.constant 0 : index
    %c0_19 = arith.constant 0 : index
    %45 = vector.load %arg3[%c2, %c0_18, %c0_19] : memref<9x4x16xf32, #tpu.memory_space<vmem>>, vector<1x4x16xf32>
    %46 = vector.shape_cast %45 : vector<1x4x16xf32> to vector<4x16xf32>
    %cst_20 = arith.constant dense<0.000000e+00> : vector<4x64xf32>
    %47 = tpu.matmul %46, %44, %cst_20 {dimension_numbers = #tpu.dot_dimension_numbers<[1], [0], [0], [1], [0, 0, 1, 1], [], []>} : vector<4x16xf32>, vector<16x64xf32>, vector<4x64xf32> -> vector<4x64xf32>
    %48 = arith.addf %37, %47 : vector<4x64xf32>
    %cst_21 = arith.constant 0.000000e+00 : f32
    %49 = vector.broadcast %cst_21 : f32 to vector<16x1xf32>
    %50 = vector.extract_strided_slice %1 {offsets = [0, 0], sizes = [16, 63], strides = [1, 1]} : vector<16x64xf32> to vector<16x63xf32>
    %51 = tpu.concatenate %49, %50 in 1 : vector<16x1xf32>, vector<16x63xf32> -> vector<16x64xf32>
    %c1_i32_22 = arith.constant 1 : i32
    %52 = vector.broadcast %c1_i32_22 : i32 to vector<16x64xi32>
    %53 = arith.cmpi sge, %18, %52 : vector<16x64xi32>
    %cst_23 = arith.constant 0.000000e+00 : f32
    %54 = vector.broadcast %cst_23 : f32 to vector<16x64xf32>
    %55 = arith.select %53, %51, %54 : vector<16x64xi1>, vector<16x64xf32>
    %c3 = arith.constant 3 : index
    %c0_24 = arith.constant 0 : index
    %c0_25 = arith.constant 0 : index
    %56 = vector.load %arg3[%c3, %c0_24, %c0_25] : memref<9x4x16xf32, #tpu.memory_space<vmem>>, vector<1x4x16xf32>
    %57 = vector.shape_cast %56 : vector<1x4x16xf32> to vector<4x16xf32>
    %cst_26 = arith.constant dense<0.000000e+00> : vector<4x64xf32>
    %58 = tpu.matmul %57, %55, %cst_26 {dimension_numbers = #tpu.dot_dimension_numbers<[1], [0], [0], [1], [0, 0, 1, 1], [], []>} : vector<4x16xf32>, vector<16x64xf32>, vector<4x64xf32> -> vector<4x64xf32>
    %59 = arith.addf %48, %58 : vector<4x64xf32>
    %c4 = arith.constant 4 : index
    %c0_27 = arith.constant 0 : index
    %c0_28 = arith.constant 0 : index
    %60 = vector.load %arg3[%c4, %c0_27, %c0_28] : memref<9x4x16xf32, #tpu.memory_space<vmem>>, vector<1x4x16xf32>
    %61 = vector.shape_cast %60 : vector<1x4x16xf32> to vector<4x16xf32>
    %cst_29 = arith.constant dense<0.000000e+00> : vector<4x64xf32>
    %62 = tpu.matmul %61, %1, %cst_29 {dimension_numbers = #tpu.dot_dimension_numbers<[1], [0], [0], [1], [0, 0, 1, 1], [], []>} : vector<4x16xf32>, vector<16x64xf32>, vector<4x64xf32> -> vector<4x64xf32>
    %63 = arith.addf %59, %62 : vector<4x64xf32>
    %64 = vector.extract_strided_slice %1 {offsets = [0, 1], sizes = [16, 63], strides = [1, 1]} : vector<16x64xf32> to vector<16x63xf32>
    %cst_30 = arith.constant 0.000000e+00 : f32
    %65 = vector.broadcast %cst_30 : f32 to vector<16x1xf32>
    %66 = tpu.concatenate %64, %65 in 1 : vector<16x63xf32>, vector<16x1xf32> -> vector<16x64xf32>
    %c7_i32_31 = arith.constant 7 : i32
    %67 = vector.broadcast %c7_i32_31 : i32 to vector<16x64xi32>
    %68 = arith.cmpi slt, %18, %67 : vector<16x64xi32>
    %cst_32 = arith.constant 0.000000e+00 : f32
    %69 = vector.broadcast %cst_32 : f32 to vector<16x64xf32>
    %70 = arith.select %68, %66, %69 : vector<16x64xi1>, vector<16x64xf32>
    %c5 = arith.constant 5 : index
    %c0_33 = arith.constant 0 : index
    %c0_34 = arith.constant 0 : index
    %71 = vector.load %arg3[%c5, %c0_33, %c0_34] : memref<9x4x16xf32, #tpu.memory_space<vmem>>, vector<1x4x16xf32>
    %72 = vector.shape_cast %71 : vector<1x4x16xf32> to vector<4x16xf32>
    %cst_35 = arith.constant dense<0.000000e+00> : vector<4x64xf32>
    %73 = tpu.matmul %72, %70, %cst_35 {dimension_numbers = #tpu.dot_dimension_numbers<[1], [0], [0], [1], [0, 0, 1, 1], [], []>} : vector<4x16xf32>, vector<16x64xf32>, vector<4x64xf32> -> vector<4x64xf32>
    %74 = arith.addf %63, %73 : vector<4x64xf32>
    %75 = vector.extract_strided_slice %1 {offsets = [0, 7], sizes = [16, 57], strides = [1, 1]} : vector<16x64xf32> to vector<16x57xf32>
    %cst_36 = arith.constant 0.000000e+00 : f32
    %76 = vector.broadcast %cst_36 : f32 to vector<16x7xf32>
    %77 = tpu.concatenate %75, %76 in 1 : vector<16x57xf32>, vector<16x7xf32> -> vector<16x64xf32>
    %c1_i32_37 = arith.constant 1 : i32
    %78 = vector.broadcast %c1_i32_37 : i32 to vector<16x64xi32>
    %79 = arith.cmpi sge, %18, %78 : vector<16x64xi32>
    %cst_38 = arith.constant 0.000000e+00 : f32
    %80 = vector.broadcast %cst_38 : f32 to vector<16x64xf32>
    %81 = arith.select %79, %77, %80 : vector<16x64xi1>, vector<16x64xf32>
    %c6 = arith.constant 6 : index
    %c0_39 = arith.constant 0 : index
    %c0_40 = arith.constant 0 : index
    %82 = vector.load %arg3[%c6, %c0_39, %c0_40] : memref<9x4x16xf32, #tpu.memory_space<vmem>>, vector<1x4x16xf32>
    %83 = vector.shape_cast %82 : vector<1x4x16xf32> to vector<4x16xf32>
    %cst_41 = arith.constant dense<0.000000e+00> : vector<4x64xf32>
    %84 = tpu.matmul %83, %81, %cst_41 {dimension_numbers = #tpu.dot_dimension_numbers<[1], [0], [0], [1], [0, 0, 1, 1], [], []>} : vector<4x16xf32>, vector<16x64xf32>, vector<4x64xf32> -> vector<4x64xf32>
    %85 = arith.addf %74, %84 : vector<4x64xf32>
    %86 = vector.extract_strided_slice %1 {offsets = [0, 8], sizes = [16, 56], strides = [1, 1]} : vector<16x64xf32> to vector<16x56xf32>
    %cst_42 = arith.constant 0.000000e+00 : f32
    %87 = vector.broadcast %cst_42 : f32 to vector<16x8xf32>
    %88 = tpu.concatenate %86, %87 in 1 : vector<16x56xf32>, vector<16x8xf32> -> vector<16x64xf32>
    %c7 = arith.constant 7 : index
    %c0_43 = arith.constant 0 : index
    %c0_44 = arith.constant 0 : index
    %89 = vector.load %arg3[%c7, %c0_43, %c0_44] : memref<9x4x16xf32, #tpu.memory_space<vmem>>, vector<1x4x16xf32>
    %90 = vector.shape_cast %89 : vector<1x4x16xf32> to vector<4x16xf32>
    %cst_45 = arith.constant dense<0.000000e+00> : vector<4x64xf32>
    %91 = tpu.matmul %90, %88, %cst_45 {dimension_numbers = #tpu.dot_dimension_numbers<[1], [0], [0], [1], [0, 0, 1, 1], [], []>} : vector<4x16xf32>, vector<16x64xf32>, vector<4x64xf32> -> vector<4x64xf32>
    %92 = arith.addf %85, %91 : vector<4x64xf32>
    %93 = vector.extract_strided_slice %1 {offsets = [0, 9], sizes = [16, 55], strides = [1, 1]} : vector<16x64xf32> to vector<16x55xf32>
    %cst_46 = arith.constant 0.000000e+00 : f32
    %94 = vector.broadcast %cst_46 : f32 to vector<16x9xf32>
    %95 = tpu.concatenate %93, %94 in 1 : vector<16x55xf32>, vector<16x9xf32> -> vector<16x64xf32>
    %c7_i32_47 = arith.constant 7 : i32
    %96 = vector.broadcast %c7_i32_47 : i32 to vector<16x64xi32>
    %97 = arith.cmpi slt, %18, %96 : vector<16x64xi32>
    %cst_48 = arith.constant 0.000000e+00 : f32
    %98 = vector.broadcast %cst_48 : f32 to vector<16x64xf32>
    %99 = arith.select %97, %95, %98 : vector<16x64xi1>, vector<16x64xf32>
    %c8 = arith.constant 8 : index
    %c0_49 = arith.constant 0 : index
    %c0_50 = arith.constant 0 : index
    %100 = vector.load %arg3[%c8, %c0_49, %c0_50] : memref<9x4x16xf32, #tpu.memory_space<vmem>>, vector<1x4x16xf32>
    %101 = vector.shape_cast %100 : vector<1x4x16xf32> to vector<4x16xf32>
    %cst_51 = arith.constant dense<0.000000e+00> : vector<4x64xf32>
    %102 = tpu.matmul %101, %99, %cst_51 {dimension_numbers = #tpu.dot_dimension_numbers<[1], [0], [0], [1], [0, 0, 1, 1], [], []>} : vector<4x16xf32>, vector<16x64xf32>, vector<4x64xf32> -> vector<4x64xf32>
    %103 = arith.addf %92, %102 : vector<4x64xf32>
    %c0_52 = arith.constant 0 : index
    %c0_53 = arith.constant 0 : index
    %104 = vector.load %arg4[%c0_52, %c0_53] : memref<4x1xf32, #tpu.memory_space<vmem>>, vector<4x1xf32>
    %105 = vector.broadcast %104 : vector<4x1xf32> to vector<4x64xf32>
    %106 = arith.addf %103, %105 : vector<4x64xf32>
    %cst_54 = arith.constant 0.000000e+00 : f32
    %107 = vector.broadcast %cst_54 : f32 to vector<4x64xf32>
    %108 = arith.maximumf %106, %107 : vector<4x64xf32>
    %109 = tpu.iota {dimensions = array<i32: 1>} : vector<4x64xi32>
    %c8_i32_55 = arith.constant 8 : i32
    %c0_i32_56 = arith.constant 0 : i32
    %110 = arith.cmpi eq, %c8_i32_55, %c0_i32_56 : i32
    %c1_i32_57 = arith.constant 1 : i32
    %111 = arith.select %110, %c1_i32_57, %c8_i32_55 : i32
    %112 = vector.broadcast %111 : i32 to vector<4x64xi32>
    %113 = arith.remsi %109, %112 : vector<4x64xi32>
    %c0_i32_58 = arith.constant 0 : i32
    %114 = vector.broadcast %c0_i32_58 : i32 to vector<4x64xi32>
    %115 = arith.cmpi ne, %113, %114 : vector<4x64xi32>
    %c0_i32_59 = arith.constant 0 : i32
    %116 = vector.broadcast %c0_i32_59 : i32 to vector<4x64xi32>
    %117 = arith.cmpi slt, %113, %116 : vector<4x64xi32>
    %c0_i32_60 = arith.constant 0 : i32
    %118 = arith.cmpi slt, %111, %c0_i32_60 : i32
    %119 = vector.broadcast %118 : i1 to vector<4x64xi1>
    %120 = vector.broadcast %119 : vector<4x64xi1> to vector<4x64xi1>
    %121 = arith.xori %117, %120 : vector<4x64xi1>
    %122 = arith.andi %121, %115 : vector<4x64xi1>
    %123 = vector.broadcast %111 : i32 to vector<4x64xi32>
    %124 = arith.addi %113, %123 : vector<4x64xi32>
    %125 = arith.select %122, %124, %113 : vector<4x64xi1>, vector<4x64xi32>
    %cst_61 = arith.constant 0.000000e+00 : f32
    %126 = vector.broadcast %cst_61 : f32 to vector<4x64xf32>
    %cst_62 = arith.constant 0.000000e+00 : f32
    %127 = vector.broadcast %cst_62 : f32 to vector<4x9xf32>
    %128 = vector.extract_strided_slice %108 {offsets = [0, 0], sizes = [4, 55], strides = [1, 1]} : vector<4x64xf32> to vector<4x55xf32>
    %129 = tpu.concatenate %127, %128 in 1 : vector<4x9xf32>, vector<4x55xf32> -> vector<4x64xf32>
    %c1_i32_63 = arith.constant 1 : i32
    %130 = vector.broadcast %c1_i32_63 : i32 to vector<4x64xi32>
    %131 = arith.cmpi sge, %125, %130 : vector<4x64xi32>
    %cst_64 = arith.constant 0.000000e+00 : f32
    %132 = vector.broadcast %cst_64 : f32 to vector<4x64xf32>
    %133 = arith.select %131, %129, %132 : vector<4x64xi1>, vector<4x64xf32>
    %c0_65 = arith.constant 0 : index
    %c0_66 = arith.constant 0 : index
    %c0_67 = arith.constant 0 : index
    %134 = vector.load %arg5[%c0_65, %c0_66, %c0_67] : memref<9x4x4xf32, #tpu.memory_space<vmem>>, vector<1x4x4xf32>
    %135 = vector.shape_cast %134 : vector<1x4x4xf32> to vector<4x4xf32>
    %cst_68 = arith.constant dense<0.000000e+00> : vector<4x64xf32>
    %136 = tpu.matmul %135, %133, %cst_68 {dimension_numbers = #tpu.dot_dimension_numbers<[1], [0], [0], [1], [0, 0, 1, 1], [], []>} : vector<4x4xf32>, vector<4x64xf32>, vector<4x64xf32> -> vector<4x64xf32>
    %137 = arith.addf %126, %136 : vector<4x64xf32>
    %cst_69 = arith.constant 0.000000e+00 : f32
    %138 = vector.broadcast %cst_69 : f32 to vector<4x8xf32>
    %139 = vector.extract_strided_slice %108 {offsets = [0, 0], sizes = [4, 56], strides = [1, 1]} : vector<4x64xf32> to vector<4x56xf32>
    %140 = tpu.concatenate %138, %139 in 1 : vector<4x8xf32>, vector<4x56xf32> -> vector<4x64xf32>
    %c1_70 = arith.constant 1 : index
    %c0_71 = arith.constant 0 : index
    %c0_72 = arith.constant 0 : index
    %141 = vector.load %arg5[%c1_70, %c0_71, %c0_72] : memref<9x4x4xf32, #tpu.memory_space<vmem>>, vector<1x4x4xf32>
    %142 = vector.shape_cast %141 : vector<1x4x4xf32> to vector<4x4xf32>
    %cst_73 = arith.constant dense<0.000000e+00> : vector<4x64xf32>
    %143 = tpu.matmul %142, %140, %cst_73 {dimension_numbers = #tpu.dot_dimension_numbers<[1], [0], [0], [1], [0, 0, 1, 1], [], []>} : vector<4x4xf32>, vector<4x64xf32>, vector<4x64xf32> -> vector<4x64xf32>
    %144 = arith.addf %137, %143 : vector<4x64xf32>
    %cst_74 = arith.constant 0.000000e+00 : f32
    %145 = vector.broadcast %cst_74 : f32 to vector<4x7xf32>
    %146 = vector.extract_strided_slice %108 {offsets = [0, 0], sizes = [4, 57], strides = [1, 1]} : vector<4x64xf32> to vector<4x57xf32>
    %147 = tpu.concatenate %145, %146 in 1 : vector<4x7xf32>, vector<4x57xf32> -> vector<4x64xf32>
    %c7_i32_75 = arith.constant 7 : i32
    %148 = vector.broadcast %c7_i32_75 : i32 to vector<4x64xi32>
    %149 = arith.cmpi slt, %125, %148 : vector<4x64xi32>
    %cst_76 = arith.constant 0.000000e+00 : f32
    %150 = vector.broadcast %cst_76 : f32 to vector<4x64xf32>
    %151 = arith.select %149, %147, %150 : vector<4x64xi1>, vector<4x64xf32>
    %c2_77 = arith.constant 2 : index
    %c0_78 = arith.constant 0 : index
    %c0_79 = arith.constant 0 : index
    %152 = vector.load %arg5[%c2_77, %c0_78, %c0_79] : memref<9x4x4xf32, #tpu.memory_space<vmem>>, vector<1x4x4xf32>
    %153 = vector.shape_cast %152 : vector<1x4x4xf32> to vector<4x4xf32>
    %cst_80 = arith.constant dense<0.000000e+00> : vector<4x64xf32>
    %154 = tpu.matmul %153, %151, %cst_80 {dimension_numbers = #tpu.dot_dimension_numbers<[1], [0], [0], [1], [0, 0, 1, 1], [], []>} : vector<4x4xf32>, vector<4x64xf32>, vector<4x64xf32> -> vector<4x64xf32>
    %155 = arith.addf %144, %154 : vector<4x64xf32>
    %cst_81 = arith.constant 0.000000e+00 : f32
    %156 = vector.broadcast %cst_81 : f32 to vector<4x1xf32>
    %157 = vector.extract_strided_slice %108 {offsets = [0, 0], sizes = [4, 63], strides = [1, 1]} : vector<4x64xf32> to vector<4x63xf32>
    %158 = tpu.concatenate %156, %157 in 1 : vector<4x1xf32>, vector<4x63xf32> -> vector<4x64xf32>
    %c1_i32_82 = arith.constant 1 : i32
    %159 = vector.broadcast %c1_i32_82 : i32 to vector<4x64xi32>
    %160 = arith.cmpi sge, %125, %159 : vector<4x64xi32>
    %cst_83 = arith.constant 0.000000e+00 : f32
    %161 = vector.broadcast %cst_83 : f32 to vector<4x64xf32>
    %162 = arith.select %160, %158, %161 : vector<4x64xi1>, vector<4x64xf32>
    %c3_84 = arith.constant 3 : index
    %c0_85 = arith.constant 0 : index
    %c0_86 = arith.constant 0 : index
    %163 = vector.load %arg5[%c3_84, %c0_85, %c0_86] : memref<9x4x4xf32, #tpu.memory_space<vmem>>, vector<1x4x4xf32>
    %164 = vector.shape_cast %163 : vector<1x4x4xf32> to vector<4x4xf32>
    %cst_87 = arith.constant dense<0.000000e+00> : vector<4x64xf32>
    %165 = tpu.matmul %164, %162, %cst_87 {dimension_numbers = #tpu.dot_dimension_numbers<[1], [0], [0], [1], [0, 0, 1, 1], [], []>} : vector<4x4xf32>, vector<4x64xf32>, vector<4x64xf32> -> vector<4x64xf32>
    %166 = arith.addf %155, %165 : vector<4x64xf32>
    %c4_88 = arith.constant 4 : index
    %c0_89 = arith.constant 0 : index
    %c0_90 = arith.constant 0 : index
    %167 = vector.load %arg5[%c4_88, %c0_89, %c0_90] : memref<9x4x4xf32, #tpu.memory_space<vmem>>, vector<1x4x4xf32>
    %168 = vector.shape_cast %167 : vector<1x4x4xf32> to vector<4x4xf32>
    %cst_91 = arith.constant dense<0.000000e+00> : vector<4x64xf32>
    %169 = tpu.matmul %168, %108, %cst_91 {dimension_numbers = #tpu.dot_dimension_numbers<[1], [0], [0], [1], [0, 0, 1, 1], [], []>} : vector<4x4xf32>, vector<4x64xf32>, vector<4x64xf32> -> vector<4x64xf32>
    %170 = arith.addf %166, %169 : vector<4x64xf32>
    %171 = vector.extract_strided_slice %108 {offsets = [0, 1], sizes = [4, 63], strides = [1, 1]} : vector<4x64xf32> to vector<4x63xf32>
    %cst_92 = arith.constant 0.000000e+00 : f32
    %172 = vector.broadcast %cst_92 : f32 to vector<4x1xf32>
    %173 = tpu.concatenate %171, %172 in 1 : vector<4x63xf32>, vector<4x1xf32> -> vector<4x64xf32>
    %c7_i32_93 = arith.constant 7 : i32
    %174 = vector.broadcast %c7_i32_93 : i32 to vector<4x64xi32>
    %175 = arith.cmpi slt, %125, %174 : vector<4x64xi32>
    %cst_94 = arith.constant 0.000000e+00 : f32
    %176 = vector.broadcast %cst_94 : f32 to vector<4x64xf32>
    %177 = arith.select %175, %173, %176 : vector<4x64xi1>, vector<4x64xf32>
    %c5_95 = arith.constant 5 : index
    %c0_96 = arith.constant 0 : index
    %c0_97 = arith.constant 0 : index
    %178 = vector.load %arg5[%c5_95, %c0_96, %c0_97] : memref<9x4x4xf32, #tpu.memory_space<vmem>>, vector<1x4x4xf32>
    %179 = vector.shape_cast %178 : vector<1x4x4xf32> to vector<4x4xf32>
    %cst_98 = arith.constant dense<0.000000e+00> : vector<4x64xf32>
    %180 = tpu.matmul %179, %177, %cst_98 {dimension_numbers = #tpu.dot_dimension_numbers<[1], [0], [0], [1], [0, 0, 1, 1], [], []>} : vector<4x4xf32>, vector<4x64xf32>, vector<4x64xf32> -> vector<4x64xf32>
    %181 = arith.addf %170, %180 : vector<4x64xf32>
    %182 = vector.extract_strided_slice %108 {offsets = [0, 7], sizes = [4, 57], strides = [1, 1]} : vector<4x64xf32> to vector<4x57xf32>
    %cst_99 = arith.constant 0.000000e+00 : f32
    %183 = vector.broadcast %cst_99 : f32 to vector<4x7xf32>
    %184 = tpu.concatenate %182, %183 in 1 : vector<4x57xf32>, vector<4x7xf32> -> vector<4x64xf32>
    %c1_i32_100 = arith.constant 1 : i32
    %185 = vector.broadcast %c1_i32_100 : i32 to vector<4x64xi32>
    %186 = arith.cmpi sge, %125, %185 : vector<4x64xi32>
    %cst_101 = arith.constant 0.000000e+00 : f32
    %187 = vector.broadcast %cst_101 : f32 to vector<4x64xf32>
    %188 = arith.select %186, %184, %187 : vector<4x64xi1>, vector<4x64xf32>
    %c6_102 = arith.constant 6 : index
    %c0_103 = arith.constant 0 : index
    %c0_104 = arith.constant 0 : index
    %189 = vector.load %arg5[%c6_102, %c0_103, %c0_104] : memref<9x4x4xf32, #tpu.memory_space<vmem>>, vector<1x4x4xf32>
    %190 = vector.shape_cast %189 : vector<1x4x4xf32> to vector<4x4xf32>
    %cst_105 = arith.constant dense<0.000000e+00> : vector<4x64xf32>
    %191 = tpu.matmul %190, %188, %cst_105 {dimension_numbers = #tpu.dot_dimension_numbers<[1], [0], [0], [1], [0, 0, 1, 1], [], []>} : vector<4x4xf32>, vector<4x64xf32>, vector<4x64xf32> -> vector<4x64xf32>
    %192 = arith.addf %181, %191 : vector<4x64xf32>
    %193 = vector.extract_strided_slice %108 {offsets = [0, 8], sizes = [4, 56], strides = [1, 1]} : vector<4x64xf32> to vector<4x56xf32>
    %cst_106 = arith.constant 0.000000e+00 : f32
    %194 = vector.broadcast %cst_106 : f32 to vector<4x8xf32>
    %195 = tpu.concatenate %193, %194 in 1 : vector<4x56xf32>, vector<4x8xf32> -> vector<4x64xf32>
    %c7_107 = arith.constant 7 : index
    %c0_108 = arith.constant 0 : index
    %c0_109 = arith.constant 0 : index
    %196 = vector.load %arg5[%c7_107, %c0_108, %c0_109] : memref<9x4x4xf32, #tpu.memory_space<vmem>>, vector<1x4x4xf32>
    %197 = vector.shape_cast %196 : vector<1x4x4xf32> to vector<4x4xf32>
    %cst_110 = arith.constant dense<0.000000e+00> : vector<4x64xf32>
    %198 = tpu.matmul %197, %195, %cst_110 {dimension_numbers = #tpu.dot_dimension_numbers<[1], [0], [0], [1], [0, 0, 1, 1], [], []>} : vector<4x4xf32>, vector<4x64xf32>, vector<4x64xf32> -> vector<4x64xf32>
    %199 = arith.addf %192, %198 : vector<4x64xf32>
    %200 = vector.extract_strided_slice %108 {offsets = [0, 9], sizes = [4, 55], strides = [1, 1]} : vector<4x64xf32> to vector<4x55xf32>
    %cst_111 = arith.constant 0.000000e+00 : f32
    %201 = vector.broadcast %cst_111 : f32 to vector<4x9xf32>
    %202 = tpu.concatenate %200, %201 in 1 : vector<4x55xf32>, vector<4x9xf32> -> vector<4x64xf32>
    %c7_i32_112 = arith.constant 7 : i32
    %203 = vector.broadcast %c7_i32_112 : i32 to vector<4x64xi32>
    %204 = arith.cmpi slt, %125, %203 : vector<4x64xi32>
    %cst_113 = arith.constant 0.000000e+00 : f32
    %205 = vector.broadcast %cst_113 : f32 to vector<4x64xf32>
    %206 = arith.select %204, %202, %205 : vector<4x64xi1>, vector<4x64xf32>
    %c8_114 = arith.constant 8 : index
    %c0_115 = arith.constant 0 : index
    %c0_116 = arith.constant 0 : index
    %207 = vector.load %arg5[%c8_114, %c0_115, %c0_116] : memref<9x4x4xf32, #tpu.memory_space<vmem>>, vector<1x4x4xf32>
    %208 = vector.shape_cast %207 : vector<1x4x4xf32> to vector<4x4xf32>
    %cst_117 = arith.constant dense<0.000000e+00> : vector<4x64xf32>
    %209 = tpu.matmul %208, %206, %cst_117 {dimension_numbers = #tpu.dot_dimension_numbers<[1], [0], [0], [1], [0, 0, 1, 1], [], []>} : vector<4x4xf32>, vector<4x64xf32>, vector<4x64xf32> -> vector<4x64xf32>
    %210 = arith.addf %199, %209 : vector<4x64xf32>
    %c0_118 = arith.constant 0 : index
    %c0_119 = arith.constant 0 : index
    %211 = vector.load %arg6[%c0_118, %c0_119] : memref<4x1xf32, #tpu.memory_space<vmem>>, vector<4x1xf32>
    %212 = vector.broadcast %211 : vector<4x1xf32> to vector<4x64xf32>
    %213 = arith.addf %210, %212 : vector<4x64xf32>
    %cst_120 = arith.constant 0.000000e+00 : f32
    %214 = vector.broadcast %cst_120 : f32 to vector<4x64xf32>
    %215 = arith.maximumf %213, %214 : vector<4x64xf32>
    %216 = tpu.iota {dimensions = array<i32: 1>} : vector<4x64xi32>
    %c8_i32_121 = arith.constant 8 : i32
    %c0_i32_122 = arith.constant 0 : i32
    %217 = arith.cmpi eq, %c8_i32_121, %c0_i32_122 : i32
    %c1_i32_123 = arith.constant 1 : i32
    %218 = arith.select %217, %c1_i32_123, %c8_i32_121 : i32
    %219 = vector.broadcast %218 : i32 to vector<4x64xi32>
    %220 = arith.remsi %216, %219 : vector<4x64xi32>
    %c0_i32_124 = arith.constant 0 : i32
    %221 = vector.broadcast %c0_i32_124 : i32 to vector<4x64xi32>
    %222 = arith.cmpi ne, %220, %221 : vector<4x64xi32>
    %c0_i32_125 = arith.constant 0 : i32
    %223 = vector.broadcast %c0_i32_125 : i32 to vector<4x64xi32>
    %224 = arith.cmpi slt, %220, %223 : vector<4x64xi32>
    %c0_i32_126 = arith.constant 0 : i32
    %225 = arith.cmpi slt, %218, %c0_i32_126 : i32
    %226 = vector.broadcast %225 : i1 to vector<4x64xi1>
    %227 = vector.broadcast %226 : vector<4x64xi1> to vector<4x64xi1>
    %228 = arith.xori %224, %227 : vector<4x64xi1>
    %229 = arith.andi %228, %222 : vector<4x64xi1>
    %230 = vector.broadcast %218 : i32 to vector<4x64xi32>
    %231 = arith.addi %220, %230 : vector<4x64xi32>
    %232 = arith.select %229, %231, %220 : vector<4x64xi1>, vector<4x64xi32>
    %cst_127 = arith.constant 0.000000e+00 : f32
    %233 = vector.broadcast %cst_127 : f32 to vector<4x64xf32>
    %cst_128 = arith.constant 0.000000e+00 : f32
    %234 = vector.broadcast %cst_128 : f32 to vector<4x9xf32>
    %235 = vector.extract_strided_slice %215 {offsets = [0, 0], sizes = [4, 55], strides = [1, 1]} : vector<4x64xf32> to vector<4x55xf32>
    %236 = tpu.concatenate %234, %235 in 1 : vector<4x9xf32>, vector<4x55xf32> -> vector<4x64xf32>
    %c1_i32_129 = arith.constant 1 : i32
    %237 = vector.broadcast %c1_i32_129 : i32 to vector<4x64xi32>
    %238 = arith.cmpi sge, %232, %237 : vector<4x64xi32>
    %cst_130 = arith.constant 0.000000e+00 : f32
    %239 = vector.broadcast %cst_130 : f32 to vector<4x64xf32>
    %240 = arith.select %238, %236, %239 : vector<4x64xi1>, vector<4x64xf32>
    %c0_131 = arith.constant 0 : index
    %c0_132 = arith.constant 0 : index
    %c0_133 = arith.constant 0 : index
    %241 = vector.load %arg7[%c0_131, %c0_132, %c0_133] : memref<9x4x4xf32, #tpu.memory_space<vmem>>, vector<1x4x4xf32>
    %242 = vector.shape_cast %241 : vector<1x4x4xf32> to vector<4x4xf32>
    %cst_134 = arith.constant dense<0.000000e+00> : vector<4x64xf32>
    %243 = tpu.matmul %242, %240, %cst_134 {dimension_numbers = #tpu.dot_dimension_numbers<[1], [0], [0], [1], [0, 0, 1, 1], [], []>} : vector<4x4xf32>, vector<4x64xf32>, vector<4x64xf32> -> vector<4x64xf32>
    %244 = arith.addf %233, %243 : vector<4x64xf32>
    %cst_135 = arith.constant 0.000000e+00 : f32
    %245 = vector.broadcast %cst_135 : f32 to vector<4x8xf32>
    %246 = vector.extract_strided_slice %215 {offsets = [0, 0], sizes = [4, 56], strides = [1, 1]} : vector<4x64xf32> to vector<4x56xf32>
    %247 = tpu.concatenate %245, %246 in 1 : vector<4x8xf32>, vector<4x56xf32> -> vector<4x64xf32>
    %c1_136 = arith.constant 1 : index
    %c0_137 = arith.constant 0 : index
    %c0_138 = arith.constant 0 : index
    %248 = vector.load %arg7[%c1_136, %c0_137, %c0_138] : memref<9x4x4xf32, #tpu.memory_space<vmem>>, vector<1x4x4xf32>
    %249 = vector.shape_cast %248 : vector<1x4x4xf32> to vector<4x4xf32>
    %cst_139 = arith.constant dense<0.000000e+00> : vector<4x64xf32>
    %250 = tpu.matmul %249, %247, %cst_139 {dimension_numbers = #tpu.dot_dimension_numbers<[1], [0], [0], [1], [0, 0, 1, 1], [], []>} : vector<4x4xf32>, vector<4x64xf32>, vector<4x64xf32> -> vector<4x64xf32>
    %251 = arith.addf %244, %250 : vector<4x64xf32>
    %cst_140 = arith.constant 0.000000e+00 : f32
    %252 = vector.broadcast %cst_140 : f32 to vector<4x7xf32>
    %253 = vector.extract_strided_slice %215 {offsets = [0, 0], sizes = [4, 57], strides = [1, 1]} : vector<4x64xf32> to vector<4x57xf32>
    %254 = tpu.concatenate %252, %253 in 1 : vector<4x7xf32>, vector<4x57xf32> -> vector<4x64xf32>
    %c7_i32_141 = arith.constant 7 : i32
    %255 = vector.broadcast %c7_i32_141 : i32 to vector<4x64xi32>
    %256 = arith.cmpi slt, %232, %255 : vector<4x64xi32>
    %cst_142 = arith.constant 0.000000e+00 : f32
    %257 = vector.broadcast %cst_142 : f32 to vector<4x64xf32>
    %258 = arith.select %256, %254, %257 : vector<4x64xi1>, vector<4x64xf32>
    %c2_143 = arith.constant 2 : index
    %c0_144 = arith.constant 0 : index
    %c0_145 = arith.constant 0 : index
    %259 = vector.load %arg7[%c2_143, %c0_144, %c0_145] : memref<9x4x4xf32, #tpu.memory_space<vmem>>, vector<1x4x4xf32>
    %260 = vector.shape_cast %259 : vector<1x4x4xf32> to vector<4x4xf32>
    %cst_146 = arith.constant dense<0.000000e+00> : vector<4x64xf32>
    %261 = tpu.matmul %260, %258, %cst_146 {dimension_numbers = #tpu.dot_dimension_numbers<[1], [0], [0], [1], [0, 0, 1, 1], [], []>} : vector<4x4xf32>, vector<4x64xf32>, vector<4x64xf32> -> vector<4x64xf32>
    %262 = arith.addf %251, %261 : vector<4x64xf32>
    %cst_147 = arith.constant 0.000000e+00 : f32
    %263 = vector.broadcast %cst_147 : f32 to vector<4x1xf32>
    %264 = vector.extract_strided_slice %215 {offsets = [0, 0], sizes = [4, 63], strides = [1, 1]} : vector<4x64xf32> to vector<4x63xf32>
    %265 = tpu.concatenate %263, %264 in 1 : vector<4x1xf32>, vector<4x63xf32> -> vector<4x64xf32>
    %c1_i32_148 = arith.constant 1 : i32
    %266 = vector.broadcast %c1_i32_148 : i32 to vector<4x64xi32>
    %267 = arith.cmpi sge, %232, %266 : vector<4x64xi32>
    %cst_149 = arith.constant 0.000000e+00 : f32
    %268 = vector.broadcast %cst_149 : f32 to vector<4x64xf32>
    %269 = arith.select %267, %265, %268 : vector<4x64xi1>, vector<4x64xf32>
    %c3_150 = arith.constant 3 : index
    %c0_151 = arith.constant 0 : index
    %c0_152 = arith.constant 0 : index
    %270 = vector.load %arg7[%c3_150, %c0_151, %c0_152] : memref<9x4x4xf32, #tpu.memory_space<vmem>>, vector<1x4x4xf32>
    %271 = vector.shape_cast %270 : vector<1x4x4xf32> to vector<4x4xf32>
    %cst_153 = arith.constant dense<0.000000e+00> : vector<4x64xf32>
    %272 = tpu.matmul %271, %269, %cst_153 {dimension_numbers = #tpu.dot_dimension_numbers<[1], [0], [0], [1], [0, 0, 1, 1], [], []>} : vector<4x4xf32>, vector<4x64xf32>, vector<4x64xf32> -> vector<4x64xf32>
    %273 = arith.addf %262, %272 : vector<4x64xf32>
    %c4_154 = arith.constant 4 : index
    %c0_155 = arith.constant 0 : index
    %c0_156 = arith.constant 0 : index
    %274 = vector.load %arg7[%c4_154, %c0_155, %c0_156] : memref<9x4x4xf32, #tpu.memory_space<vmem>>, vector<1x4x4xf32>
    %275 = vector.shape_cast %274 : vector<1x4x4xf32> to vector<4x4xf32>
    %cst_157 = arith.constant dense<0.000000e+00> : vector<4x64xf32>
    %276 = tpu.matmul %275, %215, %cst_157 {dimension_numbers = #tpu.dot_dimension_numbers<[1], [0], [0], [1], [0, 0, 1, 1], [], []>} : vector<4x4xf32>, vector<4x64xf32>, vector<4x64xf32> -> vector<4x64xf32>
    %277 = arith.addf %273, %276 : vector<4x64xf32>
    %278 = vector.extract_strided_slice %215 {offsets = [0, 1], sizes = [4, 63], strides = [1, 1]} : vector<4x64xf32> to vector<4x63xf32>
    %cst_158 = arith.constant 0.000000e+00 : f32
    %279 = vector.broadcast %cst_158 : f32 to vector<4x1xf32>
    %280 = tpu.concatenate %278, %279 in 1 : vector<4x63xf32>, vector<4x1xf32> -> vector<4x64xf32>
    %c7_i32_159 = arith.constant 7 : i32
    %281 = vector.broadcast %c7_i32_159 : i32 to vector<4x64xi32>
    %282 = arith.cmpi slt, %232, %281 : vector<4x64xi32>
    %cst_160 = arith.constant 0.000000e+00 : f32
    %283 = vector.broadcast %cst_160 : f32 to vector<4x64xf32>
    %284 = arith.select %282, %280, %283 : vector<4x64xi1>, vector<4x64xf32>
    %c5_161 = arith.constant 5 : index
    %c0_162 = arith.constant 0 : index
    %c0_163 = arith.constant 0 : index
    %285 = vector.load %arg7[%c5_161, %c0_162, %c0_163] : memref<9x4x4xf32, #tpu.memory_space<vmem>>, vector<1x4x4xf32>
    %286 = vector.shape_cast %285 : vector<1x4x4xf32> to vector<4x4xf32>
    %cst_164 = arith.constant dense<0.000000e+00> : vector<4x64xf32>
    %287 = tpu.matmul %286, %284, %cst_164 {dimension_numbers = #tpu.dot_dimension_numbers<[1], [0], [0], [1], [0, 0, 1, 1], [], []>} : vector<4x4xf32>, vector<4x64xf32>, vector<4x64xf32> -> vector<4x64xf32>
    %288 = arith.addf %277, %287 : vector<4x64xf32>
    %289 = vector.extract_strided_slice %215 {offsets = [0, 7], sizes = [4, 57], strides = [1, 1]} : vector<4x64xf32> to vector<4x57xf32>
    %cst_165 = arith.constant 0.000000e+00 : f32
    %290 = vector.broadcast %cst_165 : f32 to vector<4x7xf32>
    %291 = tpu.concatenate %289, %290 in 1 : vector<4x57xf32>, vector<4x7xf32> -> vector<4x64xf32>
    %c1_i32_166 = arith.constant 1 : i32
    %292 = vector.broadcast %c1_i32_166 : i32 to vector<4x64xi32>
    %293 = arith.cmpi sge, %232, %292 : vector<4x64xi32>
    %cst_167 = arith.constant 0.000000e+00 : f32
    %294 = vector.broadcast %cst_167 : f32 to vector<4x64xf32>
    %295 = arith.select %293, %291, %294 : vector<4x64xi1>, vector<4x64xf32>
    %c6_168 = arith.constant 6 : index
    %c0_169 = arith.constant 0 : index
    %c0_170 = arith.constant 0 : index
    %296 = vector.load %arg7[%c6_168, %c0_169, %c0_170] : memref<9x4x4xf32, #tpu.memory_space<vmem>>, vector<1x4x4xf32>
    %297 = vector.shape_cast %296 : vector<1x4x4xf32> to vector<4x4xf32>
    %cst_171 = arith.constant dense<0.000000e+00> : vector<4x64xf32>
    %298 = tpu.matmul %297, %295, %cst_171 {dimension_numbers = #tpu.dot_dimension_numbers<[1], [0], [0], [1], [0, 0, 1, 1], [], []>} : vector<4x4xf32>, vector<4x64xf32>, vector<4x64xf32> -> vector<4x64xf32>
    %299 = arith.addf %288, %298 : vector<4x64xf32>
    %300 = vector.extract_strided_slice %215 {offsets = [0, 8], sizes = [4, 56], strides = [1, 1]} : vector<4x64xf32> to vector<4x56xf32>
    %cst_172 = arith.constant 0.000000e+00 : f32
    %301 = vector.broadcast %cst_172 : f32 to vector<4x8xf32>
    %302 = tpu.concatenate %300, %301 in 1 : vector<4x56xf32>, vector<4x8xf32> -> vector<4x64xf32>
    %c7_173 = arith.constant 7 : index
    %c0_174 = arith.constant 0 : index
    %c0_175 = arith.constant 0 : index
    %303 = vector.load %arg7[%c7_173, %c0_174, %c0_175] : memref<9x4x4xf32, #tpu.memory_space<vmem>>, vector<1x4x4xf32>
    %304 = vector.shape_cast %303 : vector<1x4x4xf32> to vector<4x4xf32>
    %cst_176 = arith.constant dense<0.000000e+00> : vector<4x64xf32>
    %305 = tpu.matmul %304, %302, %cst_176 {dimension_numbers = #tpu.dot_dimension_numbers<[1], [0], [0], [1], [0, 0, 1, 1], [], []>} : vector<4x4xf32>, vector<4x64xf32>, vector<4x64xf32> -> vector<4x64xf32>
    %306 = arith.addf %299, %305 : vector<4x64xf32>
    %307 = vector.extract_strided_slice %215 {offsets = [0, 9], sizes = [4, 55], strides = [1, 1]} : vector<4x64xf32> to vector<4x55xf32>
    %cst_177 = arith.constant 0.000000e+00 : f32
    %308 = vector.broadcast %cst_177 : f32 to vector<4x9xf32>
    %309 = tpu.concatenate %307, %308 in 1 : vector<4x55xf32>, vector<4x9xf32> -> vector<4x64xf32>
    %c7_i32_178 = arith.constant 7 : i32
    %310 = vector.broadcast %c7_i32_178 : i32 to vector<4x64xi32>
    %311 = arith.cmpi slt, %232, %310 : vector<4x64xi32>
    %cst_179 = arith.constant 0.000000e+00 : f32
    %312 = vector.broadcast %cst_179 : f32 to vector<4x64xf32>
    %313 = arith.select %311, %309, %312 : vector<4x64xi1>, vector<4x64xf32>
    %c8_180 = arith.constant 8 : index
    %c0_181 = arith.constant 0 : index
    %c0_182 = arith.constant 0 : index
    %314 = vector.load %arg7[%c8_180, %c0_181, %c0_182] : memref<9x4x4xf32, #tpu.memory_space<vmem>>, vector<1x4x4xf32>
    %315 = vector.shape_cast %314 : vector<1x4x4xf32> to vector<4x4xf32>
    %cst_183 = arith.constant dense<0.000000e+00> : vector<4x64xf32>
    %316 = tpu.matmul %315, %313, %cst_183 {dimension_numbers = #tpu.dot_dimension_numbers<[1], [0], [0], [1], [0, 0, 1, 1], [], []>} : vector<4x4xf32>, vector<4x64xf32>, vector<4x64xf32> -> vector<4x64xf32>
    %317 = arith.addf %306, %316 : vector<4x64xf32>
    %c0_184 = arith.constant 0 : index
    %c0_185 = arith.constant 0 : index
    %318 = vector.load %arg8[%c0_184, %c0_185] : memref<4x1xf32, #tpu.memory_space<vmem>>, vector<4x1xf32>
    %319 = vector.broadcast %318 : vector<4x1xf32> to vector<4x64xf32>
    %320 = arith.addf %317, %319 : vector<4x64xf32>
    %cst_186 = arith.constant 0.000000e+00 : f32
    %321 = vector.broadcast %cst_186 : f32 to vector<4x64xf32>
    %322 = arith.subf %321, %320 : vector<4x64xf32>
    %323 = math.exp %322 : vector<4x64xf32>
    %cst_187 = arith.constant 1.000000e+00 : f32
    %324 = vector.broadcast %cst_187 : f32 to vector<4x64xf32>
    %325 = arith.addf %324, %323 : vector<4x64xf32>
    %cst_188 = arith.constant 1.000000e+00 : f32
    %326 = vector.broadcast %cst_188 : f32 to vector<4x64xf32>
    %327 = arith.divf %326, %325 : vector<4x64xf32>
    %c0_189 = arith.constant 0 : index
    %c0_190 = arith.constant 0 : index
    %328 = vector.load %arg9[%c0_189, %c0_190] : memref<64x256xf32, #tpu.memory_space<vmem>>, vector<64x256xf32>
    %cst_191 = arith.constant dense<0.000000e+00> : vector<4x256xf32>
    %329 = tpu.matmul %327, %328, %cst_191 {dimension_numbers = #tpu.dot_dimension_numbers<[1], [0], [0], [1], [0, 0, 1, 1], [], []>} : vector<4x64xf32>, vector<64x256xf32>, vector<4x256xf32> -> vector<4x256xf32>
    %c0_192 = arith.constant 0 : index
    %c0_193 = arith.constant 0 : index
    %c0_194 = arith.constant 0 : index
    %330 = vector.load %arg2[%c0_192, %c0_193, %c0_194] : memref<1x4x256xf32, #tpu.memory_space<vmem>>, vector<1x4x256xf32>
    %331 = vector.shape_cast %330 : vector<1x4x256xf32> to vector<4x256xf32>
    %332 = arith.mulf %329, %331 : vector<4x256xf32>
    %c0_195 = arith.constant 0 : index
    %c0_196 = arith.constant 0 : index
    %c0_197 = arith.constant 0 : index
    %333 = vector.load %arg10[%c0_195, %c0_196, %c0_197] : memref<1x4x256xf32, #tpu.memory_space<vmem>>, vector<1x4x256xf32>
    %334 = vector.shape_cast %333 : vector<1x4x256xf32> to vector<4x256xf32>
    %335 = vector.shape_cast %332 : vector<4x256xf32> to vector<1x4x256xf32>
    tpu.vector_store %arg10[%c0_195, %c0_196, %c0_197], %335 {strides = array<i32>} : memref<1x4x256xf32, #tpu.memory_space<vmem>>, vector<1x4x256xf32>,
    return
  }
  func.func @transform_0(%arg0: i32) -> (i32, i32, i32) {
    %c0_i32 = arith.constant 0 : i32
    %c0_i32_0 = arith.constant 0 : i32
    %c0_i32_1 = arith.constant 0 : i32
    return %arg0, %c0_i32, %c0_i32_0 : i32, i32, i32
  }
  func.func @transform_1(%arg0: i32) -> (i32, i32, i32) {
    %c0_i32 = arith.constant 0 : i32
    %c0_i32_0 = arith.constant 0 : i32
    %c0_i32_1 = arith.constant 0 : i32
    return %arg0, %c0_i32, %c0_i32_0 : i32, i32, i32
  }
  func.func @transform_2(%arg0: i32) -> (i32, i32, i32) {
    %c0_i32 = arith.constant 0 : i32
    %c0_i32_0 = arith.constant 0 : i32
    %c0_i32_1 = arith.constant 0 : i32
    %c0_i32_2 = arith.constant 0 : i32
    return %c0_i32, %c0_i32_0, %c0_i32_1 : i32, i32, i32
  }
  func.func @transform_3(%arg0: i32) -> (i32, i32) {
    %c0_i32 = arith.constant 0 : i32
    %c0_i32_0 = arith.constant 0 : i32
    %c0_i32_1 = arith.constant 0 : i32
    return %c0_i32, %c0_i32_0 : i32, i32
  }
  func.func @transform_4(%arg0: i32) -> (i32, i32, i32) {
    %c0_i32 = arith.constant 0 : i32
    %c0_i32_0 = arith.constant 0 : i32
    %c0_i32_1 = arith.constant 0 : i32
    %c0_i32_2 = arith.constant 0 : i32
    return %c0_i32, %c0_i32_0, %c0_i32_1 : i32, i32, i32
  }
  func.func @transform_5(%arg0: i32) -> (i32, i32) {
    %c0_i32 = arith.constant 0 : i32
    %c0_i32_0 = arith.constant 0 : i32
    %c0_i32_1 = arith.constant 0 : i32
    return %c0_i32, %c0_i32_0 : i32, i32
  }
  func.func @transform_6(%arg0: i32) -> (i32, i32, i32) {
    %c0_i32 = arith.constant 0 : i32
    %c0_i32_0 = arith.constant 0 : i32
    %c0_i32_1 = arith.constant 0 : i32
    %c0_i32_2 = arith.constant 0 : i32
    return %c0_i32, %c0_i32_0, %c0_i32_1 : i32, i32, i32
  }
  func.func @transform_7(%arg0: i32) -> (i32, i32) {
    %c0_i32 = arith.constant 0 : i32
    %c0_i32_0 = arith.constant 0 : i32
    %c0_i32_1 = arith.constant 0 : i32
    return %c0_i32, %c0_i32_0 : i32, i32
  }
  func.func @transform_8(%arg0: i32) -> (i32, i32) {
    %c0_i32 = arith.constant 0 : i32
    %c0_i32_0 = arith.constant 0 : i32
    %c0_i32_1 = arith.constant 0 : i32
    return %c0_i32, %c0_i32_0 : i32, i32
  }
  func.func @transform_9(%arg0: i32) -> (i32, i32, i32) {
    %c0_i32 = arith.constant 0 : i32
    %c0_i32_0 = arith.constant 0 : i32
    %c0_i32_1 = arith.constant 0 : i32
    return %arg0, %c0_i32, %c0_i32_0 : i32, i32, i32
  }
}

</mosaic_0001>

<llo_original>
// kernel: mfa_forward.1
$region0: #{mfa_forward.1}
  #allocation0 [shape = 'u32[]', space=smem, size = 0x4, offset = 0x4, fixed_abs, tag = 'smem constant byte address 0x4 - core index']
  #allocation1 [shape = 'u32[144,128]{1,0:T(1,128)}', space=vmem, size = 0x12000, scoped, tag = 'internal scratch']
  %s0 = inlined_call_operand.vmem [shape: f32[2,16,64], index: 0, kind: input, shape index: {}]
  %s1 = inlined_call_operand.vmem [shape: f32[2,4,256], index: 1, kind: input, shape index: {}]
  %s2 = inlined_call_operand.vmem [shape: f32[9,4,16], index: 2, kind: input, shape index: {}]
  %s3 = inlined_call_operand.vmem [shape: f32[4,1], index: 3, kind: input, shape index: {}]
  %s4 = inlined_call_operand.vmem [shape: f32[9,4,4], index: 4, kind: input, shape index: {}]
  %s5 = inlined_call_operand.vmem [shape: f32[4,1], index: 5, kind: input, shape index: {}]
  %s6 = inlined_call_operand.vmem [shape: f32[9,4,4], index: 6, kind: input, shape index: {}]
  %s7 = inlined_call_operand.vmem [shape: f32[4,1], index: 7, kind: input, shape index: {}]
  %s8 = inlined_call_operand.vmem [shape: f32[64,256], index: 8, kind: input, shape index: {}]
  %s9 = inlined_call_operand.vmem [shape: f32[2,4,256], index: 9, kind: output, shape index: {}]
  %s10 = sld [smem:[#allocation0]]
  $region69: #{mfa_forward.1} parent=0
    _
  %s12 = ssub.s32 1, %s10
  %s13 = scalar_select 0, %s12, %s10
  loop: start=0, step=1, limit=4
  $region2: #{mfa_forward.1} parent=0 // loop_pre_header
    _
  $region3: #{mfa_forward.1} parent=0 // loop_header
    %s15 = sphi 0, %s19
    %p16 = scmp.ge.s32.totalorder %s15, 4
    %s25 = sphi 0, %s27
    %s28 = sphi 0, %s25
    %s29 = sphi 0, %s28
    %s45 = sphi 0, %s29
    %s51 = sphi 0, %s53
    %s54 = sphi 0, %s51
    %s55 = sphi 0, %s54
    %s71 = sphi 0, %s55
    %s75 = sphi 0, %s75
    %s77 = sphi 0, %s75
    %s78 = sphi 0, %s77
    %s92 = sphi 0, %s78
    %s96 = sphi 0, %s96
    %s98 = sphi 0, %s96
    %s99 = sphi 0, %s98
    %s113 = sphi 0, %s99
    %s117 = sphi 0, %s117
    %s119 = sphi 0, %s117
    %s120 = sphi 0, %s119
    %s134 = sphi 0, %s120
    %s138 = sphi 0, %s138
    %s140 = sphi 0, %s138
    %s141 = sphi 0, %s140
    %s155 = sphi 0, %s141
    %s159 = sphi 0, %s159
    %s161 = sphi 0, %s159
    %s162 = sphi 0, %s161
    %s176 = sphi 0, %s162
    %s180 = sphi 0, %s180
    %s182 = sphi 0, %s180
    %s183 = sphi 0, %s182
    %s197 = sphi 0, %s183
    %s201 = sphi 0, %s201
    %s203 = sphi 0, %s201
    %s204 = sphi 0, %s203
    %s218 = sphi 0, %s204
    %s224 = sphi 0, %s226
    %s227 = sphi 0, %s224
    %s228 = sphi 0, %s227
    %s244 = sphi 0, %s228
  $region4: #{mfa_forward.1} parent=0 // loop_header_branch
    %18 = sbr.rel (%p16) target = $region8
  $region5: #{mfa_forward.1} parent=0 // loop_body
    %s20 = ssub.s32 %s15, 1
    %s21 = ssub.s32 %s15, 2
    %s22 = sadd.s32 %s15, 1
    %s23 = ssub.s32 %s15, %s22
    %p24 = scmp.eq.s32.totalorder %s23, 0
    %s26 = sadd.s32 %s25, 1
    %s27 = scalar_select %p24, %s25, %s26
    %p30 = pneg %p24
    %p31 = scmp.eq.s32.totalorder %s15, 1
    %p32 = por %p30, %p31
    %p33 = scmp.ne.s32.totalorder %s25, %s28
    %p34 = scmp.eq.s32.totalorder %s15, 0
    %p35 = por %p33, %p34
    %p36 = scmp.ne.s32.totalorder %s25, %s28
    %p37 = scmp.eq.s32.totalorder %s20, 1
    %p38 = por %p36, %p37
    %p39 = scmp.ne.s32.totalorder %s28, %s29
    %p40 = scmp.eq.s32.totalorder %s20, 0
    %p41 = por %p39, %p40
    %p42 = scmp.ne.s32.totalorder %s28, %s29
    %p43 = scmp.eq.s32.totalorder %s21, 1
    %p44 = por %p42, %p43
    %p46 = scmp.ne.s32.totalorder %s29, %s45
    %p47 = scmp.eq.s32.totalorder %s21, 0
    %p48 = por %p46, %p47
    %s49 = ssub.s32 %s15, %s22
    %p50 = scmp.eq.s32.totalorder %s49, 0
    %s52 = sadd.s32 %s51, 1
    %s53 = scalar_select %p50, %s51, %s52
    %p56 = pneg %p50
    %p57 = scmp.eq.s32.totalorder %s15, 1
    %p58 = por %p56, %p57
    %p59 = scmp.ne.s32.totalorder %s51, %s54
    %p60 = scmp.eq.s32.totalorder %s15, 0
    %p61 = por %p59, %p60
    %p62 = scmp.ne.s32.totalorder %s51, %s54
    %p63 = scmp.eq.s32.totalorder %s20, 1
    %p64 = por %p62, %p63
    %p65 = scmp.ne.s32.totalorder %s54, %s55
    %p66 = scmp.eq.s32.totalorder %s20, 0
    %p67 = por %p65, %p66
    %p68 = scmp.ne.s32.totalorder %s54, %s55
    %p69 = scmp.eq.s32.totalorder %s21, 1
    %p70 = por %p68, %p69
    %p72 = scmp.ne.s32.totalorder %s55, %s71
    %p73 = scmp.eq.s32.totalorder %s21, 0
    %p74 = por %p72, %p73
    %s76 = sadd.s32 %s75, 1
    %p79 = scmp.eq.s32.totalorder %s15, 1
    %p80 = scmp.ne.s32.totalorder %s75, %s77
    %p81 = scmp.eq.s32.totalorder %s15, 0
    %p82 = por %p80, %p81
    %p83 = scmp.ne.s32.totalorder %s75, %s77
    %p84 = scmp.eq.s32.totalorder %s20, 1
    %p85 = por %p83, %p84
    %p86 = scmp.ne.s32.totalorder %s77, %s78
    %p87 = scmp.eq.s32.totalorder %s20, 0
    %p88 = por %p86, %p87
    %p89 = scmp.ne.s32.totalorder %s77, %s78
    %p90 = scmp.eq.s32.totalorder %s21, 1
    %p91 = por %p89, %p90
    %p93 = scmp.ne.s32.totalorder %s78, %s92
    %p94 = scmp.eq.s32.totalorder %s21, 0
    %p95 = por %p93, %p94
    %s97 = sadd.s32 %s96, 1
    %p100 = scmp.eq.s32.totalorder %s15, 1
    %p101 = scmp.ne.s32.totalorder %s96, %s98
    %p102 = scmp.eq.s32.totalorder %s15, 0
    %p103 = por %p101, %p102
    %p104 = scmp.ne.s32.totalorder %s96, %s98
    %p105 = scmp.eq.s32.totalorder %s20, 1
    %p106 = por %p104, %p105
    %p107 = scmp.ne.s32.totalorder %s98, %s99
    %p108 = scmp.eq.s32.totalorder %s20, 0
    %p109 = por %p107, %p108
    %p110 = scmp.ne.s32.totalorder %s98, %s99
    %p111 = scmp.eq.s32.totalorder %s21, 1
    %p112 = por %p110, %p111
    %p114 = scmp.ne.s32.totalorder %s99, %s113
    %p115 = scmp.eq.s32.totalorder %s21, 0
    %p116 = por %p114, %p115
    %s118 = sadd.s32 %s117, 1
    %p121 = scmp.eq.s32.totalorder %s15, 1
    %p122 = scmp.ne.s32.totalorder %s117, %s119
    %p123 = scmp.eq.s32.totalorder %s15, 0
    %p124 = por %p122, %p123
    %p125 = scmp.ne.s32.totalorder %s117, %s119
    %p126 = scmp.eq.s32.totalorder %s20, 1
    %p127 = por %p125, %p126
    %p128 = scmp.ne.s32.totalorder %s119, %s120
    %p129 = scmp.eq.s32.totalorder %s20, 0
    %p130 = por %p128, %p129
    %p131 = scmp.ne.s32.totalorder %s119, %s120
    %p132 = scmp.eq.s32.totalorder %s21, 1
    %p133 = por %p131, %p132
    %p135 = scmp.ne.s32.totalorder %s120, %s134
    %p136 = scmp.eq.s32.totalorder %s21, 0
    %p137 = por %p135, %p136
    %s139 = sadd.s32 %s138, 1
    %p142 = scmp.eq.s32.totalorder %s15, 1
    %p143 = scmp.ne.s32.totalorder %s138, %s140
    %p144 = scmp.eq.s32.totalorder %s15, 0
    %p145 = por %p143, %p144
    %p146 = scmp.ne.s32.totalorder %s138, %s140
    %p147 = scmp.eq.s32.totalorder %s20, 1
    %p148 = por %p146, %p147
    %p149 = scmp.ne.s32.totalorder %s140, %s141
    %p150 = scmp.eq.s32.totalorder %s20, 0
    %p151 = por %p149, %p150
    %p152 = scmp.ne.s32.totalorder %s140, %s141
    %p153 = scmp.eq.s32.totalorder %s21, 1
    %p154 = por %p152, %p153
    %p156 = scmp.ne.s32.totalorder %s141, %s155
    %p157 = scmp.eq.s32.totalorder %s21, 0
    %p158 = por %p156, %p157
    %s160 = sadd.s32 %s159, 1
    %p163 = scmp.eq.s32.totalorder %s15, 1
    %p164 = scmp.ne.s32.totalorder %s159, %s161
    %p165 = scmp.eq.s32.totalorder %s15, 0
    %p166 = por %p164, %p165
    %p167 = scmp.ne.s32.totalorder %s159, %s161
    %p168 = scmp.eq.s32.totalorder %s20, 1
    %p169 = por %p167, %p168
    %p170 = scmp.ne.s32.totalorder %s161, %s162
    %p171 = scmp.eq.s32.totalorder %s20, 0
    %p172 = por %p170, %p171
    %p173 = scmp.ne.s32.totalorder %s161, %s162
    %p174 = scmp.eq.s32.totalorder %s21, 1
    %p175 = por %p173, %p174
    %p177 = scmp.ne.s32.totalorder %s162, %s176
    %p178 = scmp.eq.s32.totalorder %s21, 0
    %p179 = por %p177, %p178
    %s181 = sadd.s32 %s180, 1
    %p184 = scmp.eq.s32.totalorder %s15, 1
    %p185 = scmp.ne.s32.totalorder %s180, %s182
    %p186 = scmp.eq.s32.totalorder %s15, 0
    %p187 = por %p185, %p186
    %p188 = scmp.ne.s32.totalorder %s180, %s182
    %p189 = scmp.eq.s32.totalorder %s20, 1
    %p190 = por %p188, %p189
    %p191 = scmp.ne.s32.totalorder %s182, %s183
    %p192 = scmp.eq.s32.totalorder %s20, 0
    %p193 = por %p191, %p192
    %p194 = scmp.ne.s32.totalorder %s182, %s183
    %p195 = scmp.eq.s32.totalorder %s21, 1
    %p196 = por %p194, %p195
    %p198 = scmp.ne.s32.totalorder %s183, %s197
    %p199 = scmp.eq.s32.totalorder %s21, 0
    %p200 = por %p198, %p199
    %s202 = sadd.s32 %s201, 1
    %p205 = scmp.eq.s32.totalorder %s15, 1
    %p206 = scmp.ne.s32.totalorder %s201, %s203
    %p207 = scmp.eq.s32.totalorder %s15, 0
    %p208 = por %p206, %p207
    %p209 = scmp.ne.s32.totalorder %s201, %s203
    %p210 = scmp.eq.s32.totalorder %s20, 1
    %p211 = por %p209, %p210
    %p212 = scmp.ne.s32.totalorder %s203, %s204
    %p213 = scmp.eq.s32.totalorder %s20, 0
    %p214 = por %p212, %p213
    %p215 = scmp.ne.s32.totalorder %s203, %s204
    %p216 = scmp.eq.s32.totalorder %s21, 1
    %p217 = por %p215, %p216
    %p219 = scmp.ne.s32.totalorder %s204, %s218
    %p220 = scmp.eq.s32.totalorder %s21, 0
    %p221 = por %p219, %p220
    %s222 = ssub.s32 %s15, %s22
    %p223 = scmp.eq.s32.totalorder %s222, 0
    %s225 = sadd.s32 %s224, 1
    %s226 = scalar_select %p223, %s224, %s225
    %p229 = pneg %p223
    %p230 = scmp.eq.s32.totalorder %s15, 1
    %p231 = por %p229, %p230
    %p232 = scmp.ne.s32.totalorder %s224, %s227
    %p233 = scmp.eq.s32.totalorder %s15, 0
    %p234 = por %p232, %p233
    %p235 = scmp.ne.s32.totalorder %s224, %s227
    %p236 = scmp.eq.s32.totalorder %s20, 1
    %p237 = por %p235, %p236
    %p238 = scmp.ne.s32.totalorder %s227, %s228
    %p239 = scmp.eq.s32.totalorder %s20, 0
    %p240 = por %p238, %p239
    %p241 = scmp.ne.s32.totalorder %s227, %s228
    %p242 = scmp.eq.s32.totalorder %s21, 1
    %p243 = por %p241, %p242
    %p245 = scmp.ne.s32.totalorder %s228, %s244
    %p246 = scmp.eq.s32.totalorder %s21, 0
    %p247 = por %p245, %p246
    %p248 = scmp.le.s32.totalorder 1, %s15
    %p249 = scmp.lt.s32.totalorder %s15, 3
    %p250 = pnand %p248, %p249
    %p251 = pneg %p250
    // Predicated region
    $region9: #{mfa_forward.1} parent=5 // pred_check
      _
    $region10: #{mfa_forward.1} parent=5 // pred_check_branch
      %253 = sbr.rel (%p250) target = $region12
    $region11: #{mfa_forward.1} parent=5 // pred_region
      %s254 = ssub.s32 %s15, 1
      // Predicated region
      $region13: #{mfa_forward.1} parent=11 // pred_check
        %p255 = pneg %p88
      $region14: #{mfa_forward.1} parent=11 // pred_check_branch
        %257 = sbr.rel (%p255) target = $region16
      $region15: #{mfa_forward.1} parent=11 // pred_region
        _
      $region16: #{mfa_forward.1} parent=11 // pred_fallthru
        _
      // Predicated region
      $region17: #{mfa_forward.1} parent=11 // pred_check
        %p258 = pneg %p109
      $region18: #{mfa_forward.1} parent=11 // pred_check_branch
        %260 = sbr.rel (%p258) target = $region20
      $region19: #{mfa_forward.1} parent=11 // pred_region
        _
      $region20: #{mfa_forward.1} parent=11 // pred_fallthru
        _
      // Predicated region
      $region21: #{mfa_forward.1} parent=11 // pred_check
        %p261 = pneg %p130
      $region22: #{mfa_forward.1} parent=11 // pred_check_branch
        %263 = sbr.rel (%p261) target = $region24
      $region23: #{mfa_forward.1} parent=11 // pred_region
        _
      $region24: #{mfa_forward.1} parent=11 // pred_fallthru
        _
      // Predicated region
      $region25: #{mfa_forward.1} parent=11 // pred_check
        %p264 = pneg %p151
      $region26: #{mfa_forward.1} parent=11 // pred_check_branch
        %266 = sbr.rel (%p264) target = $region28
      $region27: #{mfa_forward.1} parent=11 // pred_region
        _
      $region28: #{mfa_forward.1} parent=11 // pred_fallthru
        _
      // Predicated region
      $region29: #{mfa_forward.1} parent=11 // pred_check
        %p267 = pneg %p172
      $region30: #{mfa_forward.1} parent=11 // pred_check_branch
        %269 = sbr.rel (%p267) target = $region32
      $region31: #{mfa_forward.1} parent=11 // pred_region
        _
      $region32: #{mfa_forward.1} parent=11 // pred_fallthru
        _
      // Predicated region
      $region33: #{mfa_forward.1} parent=11 // pred_check
        %p270 = pneg %p193
      $region34: #{mfa_forward.1} parent=11 // pred_check_branch
        %272 = sbr.rel (%p270) target = $region36
      $region35: #{mfa_forward.1} parent=11 // pred_region
        _
      $region36: #{mfa_forward.1} parent=11 // pred_fallthru
        _
      // Predicated region
      $region37: #{mfa_forward.1} parent=11 // pred_check
        %p273 = pneg %p214
      $region38: #{mfa_forward.1} parent=11 // pred_check_branch
        %275 = sbr.rel (%p273) target = $region40
      $region39: #{mfa_forward.1} parent=11 // pred_region
        _
      $region40: #{mfa_forward.1} parent=11 // pred_fallthru
        _
    $region12: #{mfa_forward.1} parent=5 // pred_fallthru
      _
    %p276 = scmp.lt.s32.totalorder %s15, 2
    // Predicated region
    $region41: #{mfa_forward.1} parent=5 // pred_check
      %p277 = pneg %p276
    $region42: #{mfa_forward.1} parent=5 // pred_check_branch
      %279 = sbr.rel (%p277) target = $region44
    $region43: #{mfa_forward.1} parent=5 // pred_region
      // Predicated region
      $region45: #{mfa_forward.1} parent=43 // pred_check
        %p280 = pneg %p35
      $region46: #{mfa_forward.1} parent=43 // pred_check_branch
        %282 = sbr.rel (%p280) target = $region48
      $region47: #{mfa_forward.1} parent=43 // pred_region
        %p283 = scmp.lt.s32.totalorder %s15, 1
        %s284 = scalar_select %p283, %s15, 1
        %s285 = smul.addr %s284, 2
        %s286 = smul.addr %s285, 8
        %s287 = scalar_lea.vmem %s0, %s286
      $region48: #{mfa_forward.1} parent=43 // pred_fallthru
        _
      // Predicated region
      $region49: #{mfa_forward.1} parent=43 // pred_check
        %p288 = pneg %p61
      $region50: #{mfa_forward.1} parent=43 // pred_check_branch
        %290 = sbr.rel (%p288) target = $region52
      $region51: #{mfa_forward.1} parent=43 // pred_region
        %p291 = scmp.lt.s32.totalorder %s15, 1
        %s292 = scalar_select %p291, %s15, 1
        %s293 = smul.addr %s292, 2
        %s294 = smul.addr %s293, 4
        %s295 = scalar_lea.vmem %s1, %s294
      $region52: #{mfa_forward.1} parent=43 // pred_fallthru
        _
    $region44: #{mfa_forward.1} parent=5 // pred_fallthru
      _
    %p296 = scmp.le.s32.totalorder 1, %s15
    %p297 = scmp.lt.s32.totalorder %s15, 3
    %p298 = pnand %p296, %p297
    %p299 = pneg %p298
    // Predicated region
    $region53: #{mfa_forward.1} parent=5 // pred_check
      _
    $region54: #{mfa_forward.1} parent=5 // pred_check_branch
      %301 = sbr.rel (%p298) target = $region56
    $region55: #{mfa_forward.1} parent=5 // pred_region
      %s302 = ssub.s32 %s15, 1
      %p303 = scmp.lt.s32.totalorder %s20, 1
      %s304 = scalar_select %p303, %s20, 1
      %s305 = smul.addr %s304, 2
      %s306 = smul.addr %s305, 8
      %s307 = scalar_lea.vmem %s0, %s306
      %p308 = pneg %p41
      %p309 = pneg %p38
      %p310 = scmp.lt.s32.totalorder %s20, 1
      %s311 = scalar_select %p310, %s20, 1
      %s312 = smul.addr %s311, 2
      %s313 = smul.addr %s312, 4
      %s314 = scalar_lea.vmem %s1, %s313
      %p315 = pneg %p67
      %p316 = pneg %p64
      %p317 = pneg %p88
      %p318 = pneg %p85
      %p319 = pneg %p109
      %p320 = pneg %p106
      %p321 = pneg %p130
      %p322 = pneg %p127
      %p323 = pneg %p151
      %p324 = pneg %p148
      %p325 = pneg %p172
      %p326 = pneg %p169
      %p327 = pneg %p193
      %p328 = pneg %p190
      %p329 = pneg %p214
      %p330 = pneg %p211
      %p331 = pneg %p240
      %p332 = pneg %p237
      %p333 = scmp.lt.s32.totalorder %s20, 1
      %s334 = scalar_select %p333, %s20, 1
      %s335 = smul.addr %s334, 2
      %s336 = smul.addr %s335, 4
      %s337 = scalar_lea.vmem %s9, %s336
      %p338 = scmp.lt.s32.totalorder %s20, 1
      %s339 = scalar_select %p338, %s20, 1
      %s340 = smul.addr %s339, 2
      %s341 = smul.addr %s340, 8
      %s342 = scalar_lea.vmem %s0, %s341
      %p343 = scmp.lt.s32.totalorder %s20, 1
      %s344 = scalar_select %p343, %s20, 1
      %s345 = smul.addr %s344, 2
      %s346 = smul.addr %s345, 4
      %s347 = scalar_lea.vmem %s1, %s346
      %p348 = scmp.lt.s32.totalorder %s20, 1
      %s349 = scalar_select %p348, %s20, 1
      %s350 = smul.addr %s349, 2
      %s351 = smul.addr %s350, 4
      %s352 = scalar_lea.vmem %s9, %s351
      %v353 = vld [vmem:[%s342] sm:$0xff]
      %v354 = vld [vmem:[%s342 + $0x8] sm:$0xff]
      %v355 = vlaneseq
      %v356 = vand.u32 %v355, 127
      %vm357 = vcmp.lt.s32.totalorder %v356, 0
      %v358 = vsub.s32 0, %v356
      %v359 = vsel %vm357, %v358, %v356
      %v360 = vshrl.u32 %v359, 3
      %v361 = vand.u32 %v359, 7
      %v362 = vsub.s32 0, %v361
      %v363 = vsel %vm357, %v362, %v361
      %vm364 = vcmp.ne.s32.totalorder %v363, 0
      %vm365 = vcmp.lt.s32.totalorder %v363, 0
      %vm366 = vmand %vm365, %vm364
      %v367 = vadd.s32 %v363, 8
      %v368 = vsel %vm366, %v367, %v363
      %371 = vrot.lane.b32.xlu0 %v353, 9
      %v372 = vpop.permute.xlu0 %371
      %373 = vrot.lane.b32.xlu0 %v354, 9
      %v374 = vpop.permute.xlu0 %373
      %vm377 = vcmask 72704
      %v378 = vsel %vm377, 0.0, %v372
      %v379 = vsel %vm377, 0.0, %v374
      %vm380 = vcmp.ge.s32.totalorder %v368, 1
      %v381 = vsel %vm380, %v378, 0.0
      %v382 = vsel %vm380, %v379, 0.0
      %v383 = vld [vmem:[%s2] sm:$0xf]
      %384 = vrot.lane.b32.xlu0 %v353, 8
      %v385 = vpop.permute.xlu0 %384
      %386 = vrot.lane.b32.xlu0 %v354, 8
      %v387 = vpop.permute.xlu0 %386
      %vm390 = vcmask 64512
      %v391 = vsel %vm390, 0.0, %v385
      %v392 = vsel %vm390, 0.0, %v387
      %s393 = scalar_lea.vmem %s2, 4
      %v394 = vld [vmem:[%s393] sm:$0xf]
      %vm395 = vcmask 130048
      %v397 = vsel %vm395, %v394, 0
      %399 = vmatprep.subr.mxu0 0.0
      %400 = vmatpush1.msra.mxu0 0.0
      %401 = vmatprep.subr.mxu0 0.0
      %402 = vmatpush1.msra.mxu0 0.0
      %403 = vmatprep.subr.mxu0 0.0
      %404 = vmatpush1.msra.mxu0 0.0
      %405 = vmatprep.subr.mxu0 0.0
      %406 = vmatpush1.msra.mxu0 0.0
      %407 = vmatprep.subr.mxu0 0.0
      %408 = vmatpush1.msra.mxu0 0.0
      %409 = vmatprep.subr.mxu0 0.0
      %410 = vmatpush1.msra.mxu0 0.0
      %411 = vmatprep.subr.mxu0 0.0
      %412 = vmatpush1.msra.mxu0 0.0
      %413 = vmatprep.subr.mxu0 0.0
      %414 = vmatpush1.msra.mxu0 0.0
      %415 = vmatprep.subr.mxu0 0.0
      %416 = vmatpush1.msra.mxu0 0.0
      %417 = vmatprep.subr.mxu0 0.0
      %418 = vmatpush1.msra.mxu0 0.0
      %419 = vmatprep.subr.mxu0 0.0
      %420 = vmatpush1.msra.mxu0 0.0
      %421 = vmatprep.subr.mxu0 0.0
      %422 = vmatpush1.msra.mxu0 0.0
      %423 = vmatprep.subr.mxu0 0.0
      %424 = vmatpush1.msra.mxu0 0.0
      %425 = vmatprep.subr.mxu0 0.0
      %426 = vmatpush1.msra.mxu0 0.0
      %427 = vmatprep.subr.mxu0 0.0
      %428 = vmatpush1.msra.mxu0 %v392
      %429 = vmatprep.subr.mxu0 0.0
      %430 = vmatpush1.msra.mxu0 %v391
      %431 = vmatprep.subr.mxu0 0.0
      %432 = vmatpush2.msra.mxu0 0.0
      %433 = vmatprep.subr.mxu0 0.0
      %434 = vmatpush2.msra.mxu0 0.0
      %435 = vmatprep.subr.mxu0 0.0
      %436 = vmatpush2.msra.mxu0 0.0
      %437 = vmatprep.subr.mxu0 0.0
      %438 = vmatpush2.msra.mxu0 0.0
      %439 = vmatprep.subr.mxu0 0.0
      %440 = vmatpush2.msra.mxu0 0.0
      %441 = vmatprep.subr.mxu0 0.0
      %442 = vmatpush2.msra.mxu0 0.0
      %443 = vmatprep.subr.mxu0 0.0
      %444 = vmatpush2.msra.mxu0 0.0
      %445 = vmatprep.subr.mxu0 0.0
      %446 = vmatpush2.msra.mxu0 0.0
      %447 = vmatprep.subr.mxu0 0.0
      %448 = vmatpush2.msra.mxu0 0.0
      %449 = vmatprep.subr.mxu0 0.0
      %450 = vmatpush2.msra.mxu0 0.0
      %451 = vmatprep.subr.mxu0 0.0
      %452 = vmatpush2.msra.mxu0 0.0
      %453 = vmatprep.subr.mxu0 0.0
      %454 = vmatpush2.msra.mxu0 0.0
      %455 = vmatprep.subr.mxu0 0.0
      %456 = vmatpush2.msra.mxu0 0.0
      %457 = vmatprep.subr.mxu0 0.0
      %458 = vmatpush2.msra.mxu0 0.0
      %459 = vmatprep.subr.mxu0 0.0
      %460 = vmatpush2.msra.mxu0 0.0
      %461 = vmatprep.subr.mxu0 0.0
      %462 = vmatpush2.msra.mxu0 0.0
      %463 = vmatprep.mubr.f32.mxu0 0.0
      %464 = vmatmul.mubr.f32.gmra.mxu0 %v397
      %v465 = vpop.f32.mrf.mxu0
      %v466 = vadd.f32 0.0, %v465
      %v467 = vpop.f32.mrf.mxu0
      %468 = vdwg.mxu0
      %v470 = vsel %vm395, %v383, 0
      %472 = vmatprep.subr.mxu0 0.0
      %473 = vmatpush1.msra.mxu0 0.0
      %474 = vmatprep.subr.mxu0 0.0
      %475 = vmatpush1.msra.mxu0 0.0
      %476 = vmatprep.subr.mxu0 0.0
      %477 = vmatpush1.msra.mxu0 0.0
      %478 = vmatprep.subr.mxu0 0.0
      %479 = vmatpush1.msra.mxu0 0.0
      %480 = vmatprep.subr.mxu0 0.0
      %481 = vmatpush1.msra.mxu0 0.0
      %482 = vmatprep.subr.mxu0 0.0
      %483 = vmatpush1.msra.mxu0 0.0
      %484 = vmatprep.subr.mxu0 0.0
      %485 = vmatpush1.msra.mxu0 0.0
      %486 = vmatprep.subr.mxu0 0.0
      %487 = vmatpush1.msra.mxu0 0.0
      %488 = vmatprep.subr.mxu0 0.0
      %489 = vmatpush1.msra.mxu0 0.0
      %490 = vmatprep.subr.mxu0 0.0
      %491 = vmatpush1.msra.mxu0 0.0
      %492 = vmatprep.subr.mxu0 0.0
      %493 = vmatpush1.msra.mxu0 0.0
      %494 = vmatprep.subr.mxu0 0.0
      %495 = vmatpush1.msra.mxu0 0.0
      %496 = vmatprep.subr.mxu0 0.0
      %497 = vmatpush1.msra.mxu0 0.0
      %498 = vmatprep.subr.mxu0 0.0
      %499 = vmatpush1.msra.mxu0 0.0
      %500 = vmatprep.subr.mxu0 0.0
      %501 = vmatpush1.msra.mxu0 %v382
      %502 = vmatprep.subr.mxu0 0.0
      %503 = vmatpush1.msra.mxu0 %v381
      %504 = vmatprep.subr.mxu0 0.0
      %505 = vmatpush2.msra.mxu0 0.0
      %506 = vmatprep.subr.mxu0 0.0
      %507 = vmatpush2.msra.mxu0 0.0
      %508 = vmatprep.subr.mxu0 0.0
      %509 = vmatpush2.msra.mxu0 0.0
      %510 = vmatprep.subr.mxu0 0.0
      %511 = vmatpush2.msra.mxu0 0.0
      %512 = vmatprep.subr.mxu0 0.0
      %513 = vmatpush2.msra.mxu0 0.0
      %514 = vmatprep.subr.mxu0 0.0
      %515 = vmatpush2.msra.mxu0 0.0
      %516 = vmatprep.subr.mxu0 0.0
      %517 = vmatpush2.msra.mxu0 0.0
      %518 = vmatprep.subr.mxu0 0.0
      %519 = vmatpush2.msra.mxu0 0.0
      %520 = vmatprep.subr.mxu0 0.0
      %521 = vmatpush2.msra.mxu0 0.0
      %522 = vmatprep.subr.mxu0 0.0
      %523 = vmatpush2.msra.mxu0 0.0
      %524 = vmatprep.subr.mxu0 0.0
      %525 = vmatpush2.msra.mxu0 0.0
      %526 = vmatprep.subr.mxu0 0.0
      %527 = vmatpush2.msra.mxu0 0.0
      %528 = vmatprep.subr.mxu0 0.0
      %529 = vmatpush2.msra.mxu0 0.0
      %530 = vmatprep.subr.mxu0 0.0
      %531 = vmatpush2.msra.mxu0 0.0
      %532 = vmatprep.subr.mxu0 0.0
      %533 = vmatpush2.msra.mxu0 0.0
      %534 = vmatprep.subr.mxu0 0.0
      %535 = vmatpush2.msra.mxu0 0.0
      %536 = vmatprep.mubr.f32.mxu0 0.0
      %537 = vmatmul.mubr.f32.gmra.mxu0 %v470
      %v538 = vpop.f32.mrf.mxu0
      %v539 = vadd.f32 %v466, %v538
      %v540 = vpop.f32.mrf.mxu0
      %541 = vdwg.mxu0
      %542 = vrot.lane.b32.xlu0 %v353, 7
      %v543 = vpop.permute.xlu0 %542
      %544 = vrot.lane.b32.xlu0 %v354, 7
      %v545 = vpop.permute.xlu0 %544
      %vm548 = vcmask 56320
      %v549 = vsel %vm548, 0.0, %v543
      %v550 = vsel %vm548, 0.0, %v545
      %vm551 = vcmp.lt.s32.totalorder %v368, 7
      %v552 = vsel %vm551, %v549, 0.0
      %v553 = vsel %vm551, %v550, 0.0
      %s554 = scalar_lea.vmem %s2, 8
      %v555 = vld [vmem:[%s554] sm:$0xf]
      %v557 = vsel %vm395, %v555, 0
      %559 = vmatprep.subr.mxu0 0.0
      %560 = vmatpush1.msra.mxu0 0.0
      %561 = vmatprep.subr.mxu0 0.0
      %562 = vmatpush1.msra.mxu0 0.0
      %563 = vmatprep.subr.mxu0 0.0
      %564 = vmatpush1.msra.mxu0 0.0
      %565 = vmatprep.subr.mxu0 0.0
      %566 = vmatpush1.msra.mxu0 0.0
      %567 = vmatprep.subr.mxu0 0.0
      %568 = vmatpush1.msra.mxu0 0.0
      %569 = vmatprep.subr.mxu0 0.0
      %570 = vmatpush1.msra.mxu0 0.0
      %571 = vmatprep.subr.mxu0 0.0
      %572 = vmatpush1.msra.mxu0 0.0
      %573 = vmatprep.subr.mxu0 0.0
      %574 = vmatpush1.msra.mxu0 0.0
      %575 = vmatprep.subr.mxu0 0.0
      %576 = vmatpush1.msra.mxu0 0.0
      %577 = vmatprep.subr.mxu0 0.0
      %578 = vmatpush1.msra.mxu0 0.0
      %579 = vmatprep.subr.mxu0 0.0
      %580 = vmatpush1.msra.mxu0 0.0
      %581 = vmatprep.subr.mxu0 0.0
      %582 = vmatpush1.msra.mxu0 0.0
      %583 = vmatprep.subr.mxu0 0.0
      %584 = vmatpush1.msra.mxu0 0.0
      %585 = vmatprep.subr.mxu0 0.0
      %586 = vmatpush1.msra.mxu0 0.0
      %587 = vmatprep.subr.mxu0 0.0
      %588 = vmatpush1.msra.mxu0 %v553
      %589 = vmatprep.subr.mxu0 0.0
      %590 = vmatpush1.msra.mxu0 %v552
      %591 = vmatprep.subr.mxu0 0.0
      %592 = vmatpush2.msra.mxu0 0.0
      %593 = vmatprep.subr.mxu0 0.0
      %594 = vmatpush2.msra.mxu0 0.0
      %595 = vmatprep.subr.mxu0 0.0
      %596 = vmatpush2.msra.mxu0 0.0
      %597 = vmatprep.subr.mxu0 0.0
      %598 = vmatpush2.msra.mxu0 0.0
      %599 = vmatprep.subr.mxu0 0.0
      %600 = vmatpush2.msra.mxu0 0.0
      %601 = vmatprep.subr.mxu0 0.0
      %602 = vmatpush2.msra.mxu0 0.0
      %603 = vmatprep.subr.mxu0 0.0
      %604 = vmatpush2.msra.mxu0 0.0
      %605 = vmatprep.subr.mxu0 0.0
      %606 = vmatpush2.msra.mxu0 0.0
      %607 = vmatprep.subr.mxu0 0.0
      %608 = vmatpush2.msra.mxu0 0.0
      %609 = vmatprep.subr.mxu0 0.0
      %610 = vmatpush2.msra.mxu0 0.0
      %611 = vmatprep.subr.mxu0 0.0
      %612 = vmatpush2.msra.mxu0 0.0
      %613 = vmatprep.subr.mxu0 0.0
      %614 = vmatpush2.msra.mxu0 0.0
      %615 = vmatprep.subr.mxu0 0.0
      %616 = vmatpush2.msra.mxu0 0.0
      %617 = vmatprep.subr.mxu0 0.0
      %618 = vmatpush2.msra.mxu0 0.0
      %619 = vmatprep.subr.mxu0 0.0
      %620 = vmatpush2.msra.mxu0 0.0
      %621 = vmatprep.subr.mxu0 0.0
      %622 = vmatpush2.msra.mxu0 0.0
      %623 = vmatprep.mubr.f32.mxu0 0.0
      %624 = vmatmul.mubr.f32.gmra.mxu0 %v557
      %v625 = vpop.f32.mrf.mxu0
      %v626 = vadd.f32 0.0, %v625
      %v627 = vpop.f32.mrf.mxu0
      %628 = vdwg.mxu0
      %v629 = vadd.f32 %v539, %v626
      %630 = vrot.lane.b32.xlu0 %v353, 1
      %v631 = vpop.permute.xlu0 %630
      %632 = vrot.lane.b32.xlu0 %v354, 1
      %v633 = vpop.permute.xlu0 %632
      %vm636 = vcmask 7168
      %v637 = vsel %vm636, 0.0, %v631
      %v638 = vsel %vm636, 0.0, %v633
      %v639 = vsel %vm380, %v637, 0.0
      %v640 = vsel %vm380, %v638, 0.0
      %s641 = scalar_lea.vmem %s2, 12
      %v642 = vld [vmem:[%s641] sm:$0xf]
      %v644 = vsel %vm395, %v642, 0
      %646 = vmatprep.subr.mxu0 0.0
      %647 = vmatpush1.msra.mxu0 0.0
      %648 = vmatprep.subr.mxu0 0.0
      %649 = vmatpush1.msra.mxu0 0.0
      %650 = vmatprep.subr.mxu0 0.0
      %651 = vmatpush1.msra.mxu0 0.0
      %652 = vmatprep.subr.mxu0 0.0
      %653 = vmatpush1.msra.mxu0 0.0
      %654 = vmatprep.subr.mxu0 0.0
      %655 = vmatpush1.msra.mxu0 0.0
      %656 = vmatprep.subr.mxu0 0.0
      %657 = vmatpush1.msra.mxu0 0.0
      %658 = vmatprep.subr.mxu0 0.0
      %659 = vmatpush1.msra.mxu0 0.0
      %660 = vmatprep.subr.mxu0 0.0
      %661 = vmatpush1.msra.mxu0 0.0
      %662 = vmatprep.subr.mxu0 0.0
      %663 = vmatpush1.msra.mxu0 0.0
      %664 = vmatprep.subr.mxu0 0.0
      %665 = vmatpush1.msra.mxu0 0.0
      %666 = vmatprep.subr.mxu0 0.0
      %667 = vmatpush1.msra.mxu0 0.0
      %668 = vmatprep.subr.mxu0 0.0
      %669 = vmatpush1.msra.mxu0 0.0
      %670 = vmatprep.subr.mxu0 0.0
      %671 = vmatpush1.msra.mxu0 0.0
      %672 = vmatprep.subr.mxu0 0.0
      %673 = vmatpush1.msra.mxu0 0.0
      %674 = vmatprep.subr.mxu0 0.0
      %675 = vmatpush1.msra.mxu0 %v640
      %676 = vmatprep.subr.mxu0 0.0
      %677 = vmatpush1.msra.mxu0 %v639
      %678 = vmatprep.subr.mxu0 0.0
      %679 = vmatpush2.msra.mxu0 0.0
      %680 = vmatprep.subr.mxu0 0.0
      %681 = vmatpush2.msra.mxu0 0.0
      %682 = vmatprep.subr.mxu0 0.0
      %683 = vmatpush2.msra.mxu0 0.0
      %684 = vmatprep.subr.mxu0 0.0
      %685 = vmatpush2.msra.mxu0 0.0
      %686 = vmatprep.subr.mxu0 0.0
      %687 = vmatpush2.msra.mxu0 0.0
      %688 = vmatprep.subr.mxu0 0.0
      %689 = vmatpush2.msra.mxu0 0.0
      %690 = vmatprep.subr.mxu0 0.0
      %691 = vmatpush2.msra.mxu0 0.0
      %692 = vmatprep.subr.mxu0 0.0
      %693 = vmatpush2.msra.mxu0 0.0
      %694 = vmatprep.subr.mxu0 0.0
      %695 = vmatpush2.msra.mxu0 0.0
      %696 = vmatprep.subr.mxu0 0.0
      %697 = vmatpush2.msra.mxu0 0.0
      %698 = vmatprep.subr.mxu0 0.0
      %699 = vmatpush2.msra.mxu0 0.0
      %700 = vmatprep.subr.mxu0 0.0
      %701 = vmatpush2.msra.mxu0 0.0
      %702 = vmatprep.subr.mxu0 0.0
      %703 = vmatpush2.msra.mxu0 0.0
      %704 = vmatprep.subr.mxu0 0.0
      %705 = vmatpush2.msra.mxu0 0.0
      %706 = vmatprep.subr.mxu0 0.0
      %707 = vmatpush2.msra.mxu0 0.0
      %708 = vmatprep.subr.mxu0 0.0
      %709 = vmatpush2.msra.mxu0 0.0
      %710 = vmatprep.mubr.f32.mxu0 0.0
      %711 = vmatmul.mubr.f32.gmra.mxu0 %v644
      %v712 = vpop.f32.mrf.mxu0
      %v713 = vadd.f32 0.0, %v712
      %v714 = vpop.f32.mrf.mxu0
      %715 = vdwg.mxu0
      %v716 = vadd.f32 %v629, %v713
      %s717 = scalar_lea.vmem %s2, 16
      %v718 = vld [vmem:[%s717] sm:$0xf]
      %v720 = vsel %vm395, %v718, 0
      %722 = vmatprep.subr.mxu0 0.0
      %723 = vmatpush1.msra.mxu0 0.0
      %724 = vmatprep.subr.mxu0 0.0
      %725 = vmatpush1.msra.mxu0 0.0
      %726 = vmatprep.subr.mxu0 0.0
      %727 = vmatpush1.msra.mxu0 0.0
      %728 = vmatprep.subr.mxu0 0.0
      %729 = vmatpush1.msra.mxu0 0.0
      %730 = vmatprep.subr.mxu0 0.0
      %731 = vmatpush1.msra.mxu0 0.0
      %732 = vmatprep.subr.mxu0 0.0
      %733 = vmatpush1.msra.mxu0 0.0
      %734 = vmatprep.subr.mxu0 0.0
      %735 = vmatpush1.msra.mxu0 0.0
      %736 = vmatprep.subr.mxu0 0.0
      %737 = vmatpush1.msra.mxu0 0.0
      %738 = vmatprep.subr.mxu0 0.0
      %739 = vmatpush1.msra.mxu0 0.0
      %740 = vmatprep.subr.mxu0 0.0
      %741 = vmatpush1.msra.mxu0 0.0
      %742 = vmatprep.subr.mxu0 0.0
      %743 = vmatpush1.msra.mxu0 0.0
      %744 = vmatprep.subr.mxu0 0.0
      %745 = vmatpush1.msra.mxu0 0.0
      %746 = vmatprep.subr.mxu0 0.0
      %747 = vmatpush1.msra.mxu0 0.0
      %748 = vmatprep.subr.mxu0 0.0
      %749 = vmatpush1.msra.mxu0 0.0
      %750 = vmatprep.subr.mxu0 0.0
      %751 = vmatpush1.msra.mxu0 %v354
      %752 = vmatprep.subr.mxu0 0.0
      %753 = vmatpush1.msra.mxu0 %v353
      %754 = vmatprep.subr.mxu0 0.0
      %755 = vmatpush2.msra.mxu0 0.0
      %756 = vmatprep.subr.mxu0 0.0
      %757 = vmatpush2.msra.mxu0 0.0
      %758 = vmatprep.subr.mxu0 0.0
      %759 = vmatpush2.msra.mxu0 0.0
      %760 = vmatprep.subr.mxu0 0.0
      %761 = vmatpush2.msra.mxu0 0.0
      %762 = vmatprep.subr.mxu0 0.0
      %763 = vmatpush2.msra.mxu0 0.0
      %764 = vmatprep.subr.mxu0 0.0
      %765 = vmatpush2.msra.mxu0 0.0
      %766 = vmatprep.subr.mxu0 0.0
      %767 = vmatpush2.msra.mxu0 0.0
      %768 = vmatprep.subr.mxu0 0.0
      %769 = vmatpush2.msra.mxu0 0.0
      %770 = vmatprep.subr.mxu0 0.0
      %771 = vmatpush2.msra.mxu0 0.0
      %772 = vmatprep.subr.mxu0 0.0
      %773 = vmatpush2.msra.mxu0 0.0
      %774 = vmatprep.subr.mxu0 0.0
      %775 = vmatpush2.msra.mxu0 0.0
      %776 = vmatprep.subr.mxu0 0.0
      %777 = vmatpush2.msra.mxu0 0.0
      %778 = vmatprep.subr.mxu0 0.0
      %779 = vmatpush2.msra.mxu0 0.0
      %780 = vmatprep.subr.mxu0 0.0
      %781 = vmatpush2.msra.mxu0 0.0
      %782 = vmatprep.subr.mxu0 0.0
      %783 = vmatpush2.msra.mxu0 0.0
      %784 = vmatprep.subr.mxu0 0.0
      %785 = vmatpush2.msra.mxu0 0.0
      %786 = vmatprep.mubr.f32.mxu0 0.0
      %787 = vmatmul.mubr.f32.gmra.mxu0 %v720
      %v788 = vpop.f32.mrf.mxu0
      %v789 = vadd.f32 0.0, %v788
      %v790 = vpop.f32.mrf.mxu0
      %791 = vdwg.mxu0
      %v792 = vadd.f32 %v716, %v789
      %793 = vrot.lane.b32.xlu0 %v353, 127
      %v794 = vpop.permute.xlu0 %793
      %795 = vrot.lane.b32.xlu0 %v354, 127
      %v796 = vpop.permute.xlu0 %795
      %vm799 = vcmask 515072
      %v800 = vsel %vm799, %v794, 0.0
      %v801 = vsel %vm799, %v796, 0.0
      %v802 = vsel %vm551, %v800, 0.0
      %v803 = vsel %vm551, %v801, 0.0
      %s804 = scalar_lea.vmem %s2, 20
      %v805 = vld [vmem:[%s804] sm:$0xf]
      %v807 = vsel %vm395, %v805, 0
      %809 = vmatprep.subr.mxu0 0.0
      %810 = vmatpush1.msra.mxu0 0.0
      %811 = vmatprep.subr.mxu0 0.0
      %812 = vmatpush1.msra.mxu0 0.0
      %813 = vmatprep.subr.mxu0 0.0
      %814 = vmatpush1.msra.mxu0 0.0
      %815 = vmatprep.subr.mxu0 0.0
      %816 = vmatpush1.msra.mxu0 0.0
      %817 = vmatprep.subr.mxu0 0.0
      %818 = vmatpush1.msra.mxu0 0.0
      %819 = vmatprep.subr.mxu0 0.0
      %820 = vmatpush1.msra.mxu0 0.0
      %821 = vmatprep.subr.mxu0 0.0
      %822 = vmatpush1.msra.mxu0 0.0
      %823 = vmatprep.subr.mxu0 0.0
      %824 = vmatpush1.msra.mxu0 0.0
      %825 = vmatprep.subr.mxu0 0.0
      %826 = vmatpush1.msra.mxu0 0.0
      %827 = vmatprep.subr.mxu0 0.0
      %828 = vmatpush1.msra.mxu0 0.0
      %829 = vmatprep.subr.mxu0 0.0
      %830 = vmatpush1.msra.mxu0 0.0
      %831 = vmatprep.subr.mxu0 0.0
      %832 = vmatpush1.msra.mxu0 0.0
      %833 = vmatprep.subr.mxu0 0.0
      %834 = vmatpush1.msra.mxu0 0.0
      %835 = vmatprep.subr.mxu0 0.0
      %836 = vmatpush1.msra.mxu0 0.0
      %837 = vmatprep.subr.mxu0 0.0
      %838 = vmatpush1.msra.mxu0 %v803
      %839 = vmatprep.subr.mxu0 0.0
      %840 = vmatpush1.msra.mxu0 %v802
      %841 = vmatprep.subr.mxu0 0.0
      %842 = vmatpush2.msra.mxu0 0.0
      %843 = vmatprep.subr.mxu0 0.0
      %844 = vmatpush2.msra.mxu0 0.0
      %845 = vmatprep.subr.mxu0 0.0
      %846 = vmatpush2.msra.mxu0 0.0
      %847 = vmatprep.subr.mxu0 0.0
      %848 = vmatpush2.msra.mxu0 0.0
      %849 = vmatprep.subr.mxu0 0.0
      %850 = vmatpush2.msra.mxu0 0.0
      %851 = vmatprep.subr.mxu0 0.0
      %852 = vmatpush2.msra.mxu0 0.0
      %853 = vmatprep.subr.mxu0 0.0
      %854 = vmatpush2.msra.mxu0 0.0
      %855 = vmatprep.subr.mxu0 0.0
      %856 = vmatpush2.msra.mxu0 0.0
      %857 = vmatprep.subr.mxu0 0.0
      %858 = vmatpush2.msra.mxu0 0.0
      %859 = vmatprep.subr.mxu0 0.0
      %860 = vmatpush2.msra.mxu0 0.0
      %861 = vmatprep.subr.mxu0 0.0
      %862 = vmatpush2.msra.mxu0 0.0
      %863 = vmatprep.subr.mxu0 0.0
      %864 = vmatpush2.msra.mxu0 0.0
      %865 = vmatprep.subr.mxu0 0.0
      %866 = vmatpush2.msra.mxu0 0.0
      %867 = vmatprep.subr.mxu0 0.0
      %868 = vmatpush2.msra.mxu0 0.0
      %869 = vmatprep.subr.mxu0 0.0
      %870 = vmatpush2.msra.mxu0 0.0
      %871 = vmatprep.subr.mxu0 0.0
      %872 = vmatpush2.msra.mxu0 0.0
      %873 = vmatprep.mubr.f32.mxu0 0.0
      %874 = vmatmul.mubr.f32.gmra.mxu0 %v807
      %v875 = vpop.f32.mrf.mxu0
      %v876 = vadd.f32 0.0, %v875
      %v877 = vpop.f32.mrf.mxu0
      %878 = vdwg.mxu0
      %v879 = vadd.f32 %v792, %v876
      %880 = vrot.lane.b32.xlu0 %v353, 121
      %v881 = vpop.permute.xlu0 %880
      %882 = vrot.lane.b32.xlu0 %v354, 121
      %v883 = vpop.permute.xlu0 %882
      %vm886 = vcmask 465920
      %v887 = vsel %vm886, %v881, 0.0
      %v888 = vsel %vm886, %v883, 0.0
      %v889 = vsel %vm380, %v887, 0.0
      %v890 = vsel %vm380, %v888, 0.0
      %s891 = scalar_lea.vmem %s2, 24
      %v892 = vld [vmem:[%s891] sm:$0xf]
      %v894 = vsel %vm395, %v892, 0
      %896 = vmatprep.subr.mxu0 0.0
      %897 = vmatpush1.msra.mxu0 0.0
      %898 = vmatprep.subr.mxu0 0.0
      %899 = vmatpush1.msra.mxu0 0.0
      %900 = vmatprep.subr.mxu0 0.0
      %901 = vmatpush1.msra.mxu0 0.0
      %902 = vmatprep.subr.mxu0 0.0
      %903 = vmatpush1.msra.mxu0 0.0
      %904 = vmatprep.subr.mxu0 0.0
      %905 = vmatpush1.msra.mxu0 0.0
      %906 = vmatprep.subr.mxu0 0.0
      %907 = vmatpush1.msra.mxu0 0.0
      %908 = vmatprep.subr.mxu0 0.0
      %909 = vmatpush1.msra.mxu0 0.0
      %910 = vmatprep.subr.mxu0 0.0
      %911 = vmatpush1.msra.mxu0 0.0
      %912 = vmatprep.subr.mxu0 0.0
      %913 = vmatpush1.msra.mxu0 0.0
      %914 = vmatprep.subr.mxu0 0.0
      %915 = vmatpush1.msra.mxu0 0.0
      %916 = vmatprep.subr.mxu0 0.0
      %917 = vmatpush1.msra.mxu0 0.0
      %918 = vmatprep.subr.mxu0 0.0
      %919 = vmatpush1.msra.mxu0 0.0
      %920 = vmatprep.subr.mxu0 0.0
      %921 = vmatpush1.msra.mxu0 0.0
      %922 = vmatprep.subr.mxu0 0.0
      %923 = vmatpush1.msra.mxu0 0.0
      %924 = vmatprep.subr.mxu0 0.0
      %925 = vmatpush1.msra.mxu0 %v890
      %926 = vmatprep.subr.mxu0 0.0
      %927 = vmatpush1.msra.mxu0 %v889
      %928 = vmatprep.subr.mxu0 0.0
      %929 = vmatpush2.msra.mxu0 0.0
      %930 = vmatprep.subr.mxu0 0.0
      %931 = vmatpush2.msra.mxu0 0.0
      %932 = vmatprep.subr.mxu0 0.0
      %933 = vmatpush2.msra.mxu0 0.0
      %934 = vmatprep.subr.mxu0 0.0
      %935 = vmatpush2.msra.mxu0 0.0
      %936 = vmatprep.subr.mxu0 0.0
      %937 = vmatpush2.msra.mxu0 0.0
      %938 = vmatprep.subr.mxu0 0.0
      %939 = vmatpush2.msra.mxu0 0.0
      %940 = vmatprep.subr.mxu0 0.0
      %941 = vmatpush2.msra.mxu0 0.0
      %942 = vmatprep.subr.mxu0 0.0
      %943 = vmatpush2.msra.mxu0 0.0
      %944 = vmatprep.subr.mxu0 0.0
      %945 = vmatpush2.msra.mxu0 0.0
      %946 = vmatprep.subr.mxu0 0.0
      %947 = vmatpush2.msra.mxu0 0.0
      %948 = vmatprep.subr.mxu0 0.0
      %949 = vmatpush2.msra.mxu0 0.0
      %950 = vmatprep.subr.mxu0 0.0
      %951 = vmatpush2.msra.mxu0 0.0
      %952 = vmatprep.subr.mxu0 0.0
      %953 = vmatpush2.msra.mxu0 0.0
      %954 = vmatprep.subr.mxu0 0.0
      %955 = vmatpush2.msra.mxu0 0.0
      %956 = vmatprep.subr.mxu0 0.0
      %957 = vmatpush2.msra.mxu0 0.0
      %958 = vmatprep.subr.mxu0 0.0
      %959 = vmatpush2.msra.mxu0 0.0
      %960 = vmatprep.mubr.f32.mxu0 0.0
      %961 = vmatmul.mubr.f32.gmra.mxu0 %v894
      %v962 = vpop.f32.mrf.mxu0
      %v963 = vadd.f32 0.0, %v962
      %v964 = vpop.f32.mrf.mxu0
      %965 = vdwg.mxu0
      %v966 = vadd.f32 %v879, %v963
      %967 = vrot.lane.b32.xlu0 %v353, 120
      %v968 = vpop.permute.xlu0 %967
      %969 = vrot.lane.b32.xlu0 %v354, 120
      %v970 = vpop.permute.xlu0 %969
      %vm973 = vcmask 457728
      %v974 = vsel %vm973, %v968, 0.0
      %v975 = vsel %vm973, %v970, 0.0
      %s976 = scalar_lea.vmem %s2, 28
      %v977 = vld [vmem:[%s976] sm:$0xf]
      %v979 = vsel %vm395, %v977, 0
      %981 = vmatprep.subr.mxu0 0.0
      %982 = vmatpush1.msra.mxu0 0.0
      %983 = vmatprep.subr.mxu0 0.0
      %984 = vmatpush1.msra.mxu0 0.0
      %985 = vmatprep.subr.mxu0 0.0
      %986 = vmatpush1.msra.mxu0 0.0
      %987 = vmatprep.subr.mxu0 0.0
      %988 = vmatpush1.msra.mxu0 0.0
      %989 = vmatprep.subr.mxu0 0.0
      %990 = vmatpush1.msra.mxu0 0.0
      %991 = vmatprep.subr.mxu0 0.0
      %992 = vmatpush1.msra.mxu0 0.0
      %993 = vmatprep.subr.mxu0 0.0
      %994 = vmatpush1.msra.mxu0 0.0
      %995 = vmatprep.subr.mxu0 0.0
      %996 = vmatpush1.msra.mxu0 0.0
      %997 = vmatprep.subr.mxu0 0.0
      %998 = vmatpush1.msra.mxu0 0.0
      %999 = vmatprep.subr.mxu0 0.0
      %1000 = vmatpush1.msra.mxu0 0.0
      %1001 = vmatprep.subr.mxu0 0.0
      %1002 = vmatpush1.msra.mxu0 0.0
      %1003 = vmatprep.subr.mxu0 0.0
      %1004 = vmatpush1.msra.mxu0 0.0
      %1005 = vmatprep.subr.mxu0 0.0
      %1006 = vmatpush1.msra.mxu0 0.0
      %1007 = vmatprep.subr.mxu0 0.0
      %1008 = vmatpush1.msra.mxu0 0.0
      %1009 = vmatprep.subr.mxu0 0.0
      %1010 = vmatpush1.msra.mxu0 %v975
      %1011 = vmatprep.subr.mxu0 0.0
      %1012 = vmatpush1.msra.mxu0 %v974
      %1013 = vmatprep.subr.mxu0 0.0
      %1014 = vmatpush2.msra.mxu0 0.0
      %1015 = vmatprep.subr.mxu0 0.0
      %1016 = vmatpush2.msra.mxu0 0.0
      %1017 = vmatprep.subr.mxu0 0.0
      %1018 = vmatpush2.msra.mxu0 0.0
      %1019 = vmatprep.subr.mxu0 0.0
      %1020 = vmatpush2.msra.mxu0 0.0
      %1021 = vmatprep.subr.mxu0 0.0
      %1022 = vmatpush2.msra.mxu0 0.0
      %1023 = vmatprep.subr.mxu0 0.0
      %1024 = vmatpush2.msra.mxu0 0.0
      %1025 = vmatprep.subr.mxu0 0.0
      %1026 = vmatpush2.msra.mxu0 0.0
      %1027 = vmatprep.subr.mxu0 0.0
      %1028 = vmatpush2.msra.mxu0 0.0
      %1029 = vmatprep.subr.mxu0 0.0
      %1030 = vmatpush2.msra.mxu0 0.0
      %1031 = vmatprep.subr.mxu0 0.0
      %1032 = vmatpush2.msra.mxu0 0.0
      %1033 = vmatprep.subr.mxu0 0.0
      %1034 = vmatpush2.msra.mxu0 0.0
      %1035 = vmatprep.subr.mxu0 0.0
      %1036 = vmatpush2.msra.mxu0 0.0
      %1037 = vmatprep.subr.mxu0 0.0
      %1038 = vmatpush2.msra.mxu0 0.0
      %1039 = vmatprep.subr.mxu0 0.0
      %1040 = vmatpush2.msra.mxu0 0.0
      %1041 = vmatprep.subr.mxu0 0.0
      %1042 = vmatpush2.msra.mxu0 0.0
      %1043 = vmatprep.subr.mxu0 0.0
      %1044 = vmatpush2.msra.mxu0 0.0
      %1045 = vmatprep.mubr.f32.mxu0 0.0
      %1046 = vmatmul.mubr.f32.gmra.mxu0 %v979
      %v1047 = vpop.f32.mrf.mxu0
      %v1048 = vadd.f32 0.0, %v1047
      %v1049 = vpop.f32.mrf.mxu0
      %1050 = vdwg.mxu0
      %v1051 = vadd.f32 %v966, %v1048
      %1052 = vrot.lane.b32.xlu0 %v353, 119
      %v1053 = vpop.permute.xlu0 %1052
      %1054 = vrot.lane.b32.xlu0 %v354, 119
      %v1055 = vpop.permute.xlu0 %1054
      %vm1058 = vcmask 449536
      %v1059 = vsel %vm1058, %v1053, 0.0
      %v1060 = vsel %vm1058, %v1055, 0.0
      %v1061 = vsel %vm551, %v1059, 0.0
      %v1062 = vsel %vm551, %v1060, 0.0
      %s1063 = scalar_lea.vmem %s2, 32
      %v1064 = vld [vmem:[%s1063] sm:$0xf]
      %v1066 = vsel %vm395, %v1064, 0
      %1068 = vmatprep.subr.mxu0 0.0
      %1069 = vmatpush1.msra.mxu0 0.0
      %1070 = vmatprep.subr.mxu0 0.0
      %1071 = vmatpush1.msra.mxu0 0.0
      %1072 = vmatprep.subr.mxu0 0.0
      %1073 = vmatpush1.msra.mxu0 0.0
      %1074 = vmatprep.subr.mxu0 0.0
      %1075 = vmatpush1.msra.mxu0 0.0
      %1076 = vmatprep.subr.mxu0 0.0
      %1077 = vmatpush1.msra.mxu0 0.0
      %1078 = vmatprep.subr.mxu0 0.0
      %1079 = vmatpush1.msra.mxu0 0.0
      %1080 = vmatprep.subr.mxu0 0.0
      %1081 = vmatpush1.msra.mxu0 0.0
      %1082 = vmatprep.subr.mxu0 0.0
      %1083 = vmatpush1.msra.mxu0 0.0
      %1084 = vmatprep.subr.mxu0 0.0
      %1085 = vmatpush1.msra.mxu0 0.0
      %1086 = vmatprep.subr.mxu0 0.0
      %1087 = vmatpush1.msra.mxu0 0.0
      %1088 = vmatprep.subr.mxu0 0.0
      %1089 = vmatpush1.msra.mxu0 0.0
      %1090 = vmatprep.subr.mxu0 0.0
      %1091 = vmatpush1.msra.mxu0 0.0
      %1092 = vmatprep.subr.mxu0 0.0
      %1093 = vmatpush1.msra.mxu0 0.0
      %1094 = vmatprep.subr.mxu0 0.0
      %1095 = vmatpush1.msra.mxu0 0.0
      %1096 = vmatprep.subr.mxu0 0.0
      %1097 = vmatpush1.msra.mxu0 %v1062
      %1098 = vmatprep.subr.mxu0 0.0
      %1099 = vmatpush1.msra.mxu0 %v1061
      %1100 = vmatprep.subr.mxu0 0.0
      %1101 = vmatpush2.msra.mxu0 0.0
      %1102 = vmatprep.subr.mxu0 0.0
      %1103 = vmatpush2.msra.mxu0 0.0
      %1104 = vmatprep.subr.mxu0 0.0
      %1105 = vmatpush2.msra.mxu0 0.0
      %1106 = vmatprep.subr.mxu0 0.0
      %1107 = vmatpush2.msra.mxu0 0.0
      %1108 = vmatprep.subr.mxu0 0.0
      %1109 = vmatpush2.msra.mxu0 0.0
      %1110 = vmatprep.subr.mxu0 0.0
      %1111 = vmatpush2.msra.mxu0 0.0
      %1112 = vmatprep.subr.mxu0 0.0
      %1113 = vmatpush2.msra.mxu0 0.0
      %1114 = vmatprep.subr.mxu0 0.0
      %1115 = vmatpush2.msra.mxu0 0.0
      %1116 = vmatprep.subr.mxu0 0.0
      %1117 = vmatpush2.msra.mxu0 0.0
      %1118 = vmatprep.subr.mxu0 0.0
      %1119 = vmatpush2.msra.mxu0 0.0
      %1120 = vmatprep.subr.mxu0 0.0
      %1121 = vmatpush2.msra.mxu0 0.0
      %1122 = vmatprep.subr.mxu0 0.0
      %1123 = vmatpush2.msra.mxu0 0.0
      %1124 = vmatprep.subr.mxu0 0.0
      %1125 = vmatpush2.msra.mxu0 0.0
      %1126 = vmatprep.subr.mxu0 0.0
      %1127 = vmatpush2.msra.mxu0 0.0
      %1128 = vmatprep.subr.mxu0 0.0
      %1129 = vmatpush2.msra.mxu0 0.0
      %1130 = vmatprep.subr.mxu0 0.0
      %1131 = vmatpush2.msra.mxu0 0.0
      %1132 = vmatprep.mubr.f32.mxu0 0.0
      %1133 = vmatmul.mubr.f32.gmra.mxu0 %v1066
      %v1134 = vpop.f32.mrf.mxu0
      %v1135 = vadd.f32 0.0, %v1134
      %v1136 = vpop.f32.mrf.mxu0
      %1137 = vdwg.mxu0
      %v1138 = vadd.f32 %v1051, %v1135
      %v1139 = vld [vmem:[%s3] sm:$0xf]
      %1141 = vset.pattern.permute.xlu0 0
      %1142 = vperm.xlu0 %1141, %v1139
      %v1143 = vpop.permute.xlu0 %1142
      %v1145 = vadd.f32 %v1138, %v1143
      %v1146 = vmax.f32 %v1145, 0.0
      %1148 = vrot.lane.b32.xlu0 %v1146, 9
      %v1149 = vpop.permute.xlu0 %1148
      %v1151 = vsel %vm377, 0.0, %v1149
      %v1152 = vsel %vm380, %v1151, 0.0
      %v1153 = vld [vmem:[%s4] sm:$0xf]
      %1154 = vrot.lane.b32.xlu0 %v1146, 8
      %v1155 = vpop.permute.xlu0 %1154
      %v1157 = vsel %vm390, 0.0, %v1155
      %s1158 = scalar_lea.vmem %s4, 4
      %v1159 = vld [vmem:[%s1158] sm:$0xf]
      %vm1160 = vcmask 31744
      %v1162 = vsel %vm1160, %v1159, 0
      %vm1164 = vcmask 1043456
      %v1166 = vsel %vm1164, %v1157, 0
      %1168 = vmatprep.subr.mxu0 0.0
      %1169 = vmatpush1.msra.mxu0 0.0
      %1170 = vmatprep.subr.mxu0 0.0
      %1171 = vmatpush1.msra.mxu0 0.0
      %1172 = vmatprep.subr.mxu0 0.0
      %1173 = vmatpush1.msra.mxu0 0.0
      %1174 = vmatprep.subr.mxu0 0.0
      %1175 = vmatpush1.msra.mxu0 0.0
      %1176 = vmatprep.subr.mxu0 0.0
      %1177 = vmatpush1.msra.mxu0 0.0
      %1178 = vmatprep.subr.mxu0 0.0
      %1179 = vmatpush1.msra.mxu0 0.0
      %1180 = vmatprep.subr.mxu0 0.0
      %1181 = vmatpush1.msra.mxu0 0.0
      %1182 = vmatprep.subr.mxu0 0.0
      %1183 = vmatpush1.msra.mxu0 0.0
      %1184 = vmatprep.subr.mxu0 0.0
      %1185 = vmatpush1.msra.mxu0 0.0
      %1186 = vmatprep.subr.mxu0 0.0
      %1187 = vmatpush1.msra.mxu0 0.0
      %1188 = vmatprep.subr.mxu0 0.0
      %1189 = vmatpush1.msra.mxu0 0.0
      %1190 = vmatprep.subr.mxu0 0.0
      %1191 = vmatpush1.msra.mxu0 0.0
      %1192 = vmatprep.subr.mxu0 0.0
      %1193 = vmatpush1.msra.mxu0 0.0
      %1194 = vmatprep.subr.mxu0 0.0
      %1195 = vmatpush1.msra.mxu0 0.0
      %1196 = vmatprep.subr.mxu0 0.0
      %1197 = vmatpush1.msra.mxu0 0.0
      %1198 = vmatprep.subr.mxu0 0.0
      %1199 = vmatpush1.msra.mxu0 %v1166
      %1200 = vmatprep.subr.mxu0 0.0
      %1201 = vmatpush2.msra.mxu0 0.0
      %1202 = vmatprep.subr.mxu0 0.0
      %1203 = vmatpush2.msra.mxu0 0.0
      %1204 = vmatprep.subr.mxu0 0.0
      %1205 = vmatpush2.msra.mxu0 0.0
      %1206 = vmatprep.subr.mxu0 0.0
      %1207 = vmatpush2.msra.mxu0 0.0
      %1208 = vmatprep.subr.mxu0 0.0
      %1209 = vmatpush2.msra.mxu0 0.0
      %1210 = vmatprep.subr.mxu0 0.0
      %1211 = vmatpush2.msra.mxu0 0.0
      %1212 = vmatprep.subr.mxu0 0.0
      %1213 = vmatpush2.msra.mxu0 0.0
      %1214 = vmatprep.subr.mxu0 0.0
      %1215 = vmatpush2.msra.mxu0 0.0
      %1216 = vmatprep.subr.mxu0 0.0
      %1217 = vmatpush2.msra.mxu0 0.0
      %1218 = vmatprep.subr.mxu0 0.0
      %1219 = vmatpush2.msra.mxu0 0.0
      %1220 = vmatprep.subr.mxu0 0.0
      %1221 = vmatpush2.msra.mxu0 0.0
      %1222 = vmatprep.subr.mxu0 0.0
      %1223 = vmatpush2.msra.mxu0 0.0
      %1224 = vmatprep.subr.mxu0 0.0
      %1225 = vmatpush2.msra.mxu0 0.0
      %1226 = vmatprep.subr.mxu0 0.0
      %1227 = vmatpush2.msra.mxu0 0.0
      %1228 = vmatprep.subr.mxu0 0.0
      %1229 = vmatpush2.msra.mxu0 0.0
      %1230 = vmatprep.subr.mxu0 0.0
      %1231 = vmatpush2.msra.mxu0 0.0
      %1232 = vmatprep.mubr.f32.mxu0 0.0
      %1233 = vmatmul.mubr.f32.gmra.mxu0 %v1162
      %v1234 = vpop.f32.mrf.mxu0
      %v1235 = vadd.f32 0.0, %v1234
      %v1236 = vpop.f32.mrf.mxu0
      %1237 = vdwg.mxu0
      %v1239 = vsel %vm1160, %v1153, 0
      %v1242 = vsel %vm1164, %v1152, 0
      %1244 = vmatprep.subr.mxu0 0.0
      %1245 = vmatpush1.msra.mxu0 0.0
      %1246 = vmatprep.subr.mxu0 0.0
      %1247 = vmatpush1.msra.mxu0 0.0
      %1248 = vmatprep.subr.mxu0 0.0
      %1249 = vmatpush1.msra.mxu0 0.0
      %1250 = vmatprep.subr.mxu0 0.0
      %1251 = vmatpush1.msra.mxu0 0.0
      %1252 = vmatprep.subr.mxu0 0.0
      %1253 = vmatpush1.msra.mxu0 0.0
      %1254 = vmatprep.subr.mxu0 0.0
      %1255 = vmatpush1.msra.mxu0 0.0
      %1256 = vmatprep.subr.mxu0 0.0
      %1257 = vmatpush1.msra.mxu0 0.0
      %1258 = vmatprep.subr.mxu0 0.0
      %1259 = vmatpush1.msra.mxu0 0.0
      %1260 = vmatprep.subr.mxu0 0.0
      %1261 = vmatpush1.msra.mxu0 0.0
      %1262 = vmatprep.subr.mxu0 0.0
      %1263 = vmatpush1.msra.mxu0 0.0
      %1264 = vmatprep.subr.mxu0 0.0
      %1265 = vmatpush1.msra.mxu0 0.0
      %1266 = vmatprep.subr.mxu0 0.0
      %1267 = vmatpush1.msra.mxu0 0.0
      %1268 = vmatprep.subr.mxu0 0.0
      %1269 = vmatpush1.msra.mxu0 0.0
      %1270 = vmatprep.subr.mxu0 0.0
      %1271 = vmatpush1.msra.mxu0 0.0
      %1272 = vmatprep.subr.mxu0 0.0
      %1273 = vmatpush1.msra.mxu0 0.0
      %1274 = vmatprep.subr.mxu0 0.0
      %1275 = vmatpush1.msra.mxu0 %v1242
      %1276 = vmatprep.subr.mxu0 0.0
      %1277 = vmatpush2.msra.mxu0 0.0
      %1278 = vmatprep.subr.mxu0 0.0
      %1279 = vmatpush2.msra.mxu0 0.0
      %1280 = vmatprep.subr.mxu0 0.0
      %1281 = vmatpush2.msra.mxu0 0.0
      %1282 = vmatprep.subr.mxu0 0.0
      %1283 = vmatpush2.msra.mxu0 0.0
      %1284 = vmatprep.subr.mxu0 0.0
      %1285 = vmatpush2.msra.mxu0 0.0
      %1286 = vmatprep.subr.mxu0 0.0
      %1287 = vmatpush2.msra.mxu0 0.0
      %1288 = vmatprep.subr.mxu0 0.0
      %1289 = vmatpush2.msra.mxu0 0.0
      %1290 = vmatprep.subr.mxu0 0.0
      %1291 = vmatpush2.msra.mxu0 0.0
      %1292 = vmatprep.subr.mxu0 0.0
      %1293 = vmatpush2.msra.mxu0 0.0
      %1294 = vmatprep.subr.mxu0 0.0
      %1295 = vmatpush2.msra.mxu0 0.0
      %1296 = vmatprep.subr.mxu0 0.0
      %1297 = vmatpush2.msra.mxu0 0.0
      %1298 = vmatprep.subr.mxu0 0.0
      %1299 = vmatpush2.msra.mxu0 0.0
      %1300 = vmatprep.subr.mxu0 0.0
      %1301 = vmatpush2.msra.mxu0 0.0
      %1302 = vmatprep.subr.mxu0 0.0
      %1303 = vmatpush2.msra.mxu0 0.0
      %1304 = vmatprep.subr.mxu0 0.0
      %1305 = vmatpush2.msra.mxu0 0.0
      %1306 = vmatprep.subr.mxu0 0.0
      %1307 = vmatpush2.msra.mxu0 0.0
      %1308 = vmatprep.mubr.f32.mxu0 0.0
      %1309 = vmatmul.mubr.f32.gmra.mxu0 %v1239
      %v1310 = vpop.f32.mrf.mxu0
      %v1311 = vadd.f32 %v1235, %v1310
      %v1312 = vpop.f32.mrf.mxu0
      %1313 = vdwg.mxu0
      %1314 = vrot.lane.b32.xlu0 %v1146, 7
      %v1315 = vpop.permute.xlu0 %1314
      %v1317 = vsel %vm548, 0.0, %v1315
      %v1318 = vsel %vm551, %v1317, 0.0
      %s1319 = scalar_lea.vmem %s4, 8
      %v1320 = vld [vmem:[%s1319] sm:$0xf]
      %v1322 = vsel %vm1160, %v1320, 0
      %v1325 = vsel %vm1164, %v1318, 0
      %1327 = vmatprep.subr.mxu0 0.0
      %1328 = vmatpush1.msra.mxu0 0.0
      %1329 = vmatprep.subr.mxu0 0.0
      %1330 = vmatpush1.msra.mxu0 0.0
      %1331 = vmatprep.subr.mxu0 0.0
      %1332 = vmatpush1.msra.mxu0 0.0
      %1333 = vmatprep.subr.mxu0 0.0
      %1334 = vmatpush1.msra.mxu0 0.0
      %1335 = vmatprep.subr.mxu0 0.0
      %1336 = vmatpush1.msra.mxu0 0.0
      %1337 = vmatprep.subr.mxu0 0.0
      %1338 = vmatpush1.msra.mxu0 0.0
      %1339 = vmatprep.subr.mxu0 0.0
      %1340 = vmatpush1.msra.mxu0 0.0
      %1341 = vmatprep.subr.mxu0 0.0
      %1342 = vmatpush1.msra.mxu0 0.0
      %1343 = vmatprep.subr.mxu0 0.0
      %1344 = vmatpush1.msra.mxu0 0.0
      %1345 = vmatprep.subr.mxu0 0.0
      %1346 = vmatpush1.msra.mxu0 0.0
      %1347 = vmatprep.subr.mxu0 0.0
      %1348 = vmatpush1.msra.mxu0 0.0
      %1349 = vmatprep.subr.mxu0 0.0
      %1350 = vmatpush1.msra.mxu0 0.0
      %1351 = vmatprep.subr.mxu0 0.0
      %1352 = vmatpush1.msra.mxu0 0.0
      %1353 = vmatprep.subr.mxu0 0.0
      %1354 = vmatpush1.msra.mxu0 0.0
      %1355 = vmatprep.subr.mxu0 0.0
      %1356 = vmatpush1.msra.mxu0 0.0
      %1357 = vmatprep.subr.mxu0 0.0
      %1358 = vmatpush1.msra.mxu0 %v1325
      %1359 = vmatprep.subr.mxu0 0.0
      %1360 = vmatpush2.msra.mxu0 0.0
      %1361 = vmatprep.subr.mxu0 0.0
      %1362 = vmatpush2.msra.mxu0 0.0
      %1363 = vmatprep.subr.mxu0 0.0
      %1364 = vmatpush2.msra.mxu0 0.0
      %1365 = vmatprep.subr.mxu0 0.0
      %1366 = vmatpush2.msra.mxu0 0.0
      %1367 = vmatprep.subr.mxu0 0.0
      %1368 = vmatpush2.msra.mxu0 0.0
      %1369 = vmatprep.subr.mxu0 0.0
      %1370 = vmatpush2.msra.mxu0 0.0
      %1371 = vmatprep.subr.mxu0 0.0
      %1372 = vmatpush2.msra.mxu0 0.0
      %1373 = vmatprep.subr.mxu0 0.0
      %1374 = vmatpush2.msra.mxu0 0.0
      %1375 = vmatprep.subr.mxu0 0.0
      %1376 = vmatpush2.msra.mxu0 0.0
      %1377 = vmatprep.subr.mxu0 0.0
      %1378 = vmatpush2.msra.mxu0 0.0
      %1379 = vmatprep.subr.mxu0 0.0
      %1380 = vmatpush2.msra.mxu0 0.0
      %1381 = vmatprep.subr.mxu0 0.0
      %1382 = vmatpush2.msra.mxu0 0.0
      %1383 = vmatprep.subr.mxu0 0.0
      %1384 = vmatpush2.msra.mxu0 0.0
      %1385 = vmatprep.subr.mxu0 0.0
      %1386 = vmatpush2.msra.mxu0 0.0
      %1387 = vmatprep.subr.mxu0 0.0
      %1388 = vmatpush2.msra.mxu0 0.0
      %1389 = vmatprep.subr.mxu0 0.0
      %1390 = vmatpush2.msra.mxu0 0.0
      %1391 = vmatprep.mubr.f32.mxu0 0.0
      %1392 = vmatmul.mubr.f32.gmra.mxu0 %v1322
      %v1393 = vpop.f32.mrf.mxu0
      %v1394 = vadd.f32 0.0, %v1393
      %v1395 = vpop.f32.mrf.mxu0
      %1396 = vdwg.mxu0
      %v1397 = vadd.f32 %v1311, %v1394
      %1398 = vrot.lane.b32.xlu0 %v1146, 1
      %v1399 = vpop.permute.xlu0 %1398
      %v1401 = vsel %vm636, 0.0, %v1399
      %v1402 = vsel %vm380, %v1401, 0.0
      %s1403 = scalar_lea.vmem %s4, 12
      %v1404 = vld [vmem:[%s1403] sm:$0xf]
      %v1406 = vsel %vm1160, %v1404, 0
      %v1409 = vsel %vm1164, %v1402, 0
      %1411 = vmatprep.subr.mxu0 0.0
      %1412 = vmatpush1.msra.mxu0 0.0
      %1413 = vmatprep.subr.mxu0 0.0
      %1414 = vmatpush1.msra.mxu0 0.0
      %1415 = vmatprep.subr.mxu0 0.0
      %1416 = vmatpush1.msra.mxu0 0.0
      %1417 = vmatprep.subr.mxu0 0.0
      %1418 = vmatpush1.msra.mxu0 0.0
      %1419 = vmatprep.subr.mxu0 0.0
      %1420 = vmatpush1.msra.mxu0 0.0
      %1421 = vmatprep.subr.mxu0 0.0
      %1422 = vmatpush1.msra.mxu0 0.0
      %1423 = vmatprep.subr.mxu0 0.0
      %1424 = vmatpush1.msra.mxu0 0.0
      %1425 = vmatprep.subr.mxu0 0.0
      %1426 = vmatpush1.msra.mxu0 0.0
      %1427 = vmatprep.subr.mxu0 0.0
      %1428 = vmatpush1.msra.mxu0 0.0
      %1429 = vmatprep.subr.mxu0 0.0
      %1430 = vmatpush1.msra.mxu0 0.0
      %1431 = vmatprep.subr.mxu0 0.0
      %1432 = vmatpush1.msra.mxu0 0.0
      %1433 = vmatprep.subr.mxu0 0.0
      %1434 = vmatpush1.msra.mxu0 0.0
      %1435 = vmatprep.subr.mxu0 0.0
      %1436 = vmatpush1.msra.mxu0 0.0
      %1437 = vmatprep.subr.mxu0 0.0
      %1438 = vmatpush1.msra.mxu0 0.0
      %1439 = vmatprep.subr.mxu0 0.0
      %1440 = vmatpush1.msra.mxu0 0.0
      %1441 = vmatprep.subr.mxu0 0.0
      %1442 = vmatpush1.msra.mxu0 %v1409
      %1443 = vmatprep.subr.mxu0 0.0
      %1444 = vmatpush2.msra.mxu0 0.0
      %1445 = vmatprep.subr.mxu0 0.0
      %1446 = vmatpush2.msra.mxu0 0.0
      %1447 = vmatprep.subr.mxu0 0.0
      %1448 = vmatpush2.msra.mxu0 0.0
      %1449 = vmatprep.subr.mxu0 0.0
      %1450 = vmatpush2.msra.mxu0 0.0
      %1451 = vmatprep.subr.mxu0 0.0
      %1452 = vmatpush2.msra.mxu0 0.0
      %1453 = vmatprep.subr.mxu0 0.0
      %1454 = vmatpush2.msra.mxu0 0.0
      %1455 = vmatprep.subr.mxu0 0.0
      %1456 = vmatpush2.msra.mxu0 0.0
      %1457 = vmatprep.subr.mxu0 0.0
      %1458 = vmatpush2.msra.mxu0 0.0
      %1459 = vmatprep.subr.mxu0 0.0
      %1460 = vmatpush2.msra.mxu0 0.0
      %1461 = vmatprep.subr.mxu0 0.0
      %1462 = vmatpush2.msra.mxu0 0.0
      %1463 = vmatprep.subr.mxu0 0.0
      %1464 = vmatpush2.msra.mxu0 0.0
      %1465 = vmatprep.subr.mxu0 0.0
      %1466 = vmatpush2.msra.mxu0 0.0
      %1467 = vmatprep.subr.mxu0 0.0
      %1468 = vmatpush2.msra.mxu0 0.0
      %1469 = vmatprep.subr.mxu0 0.0
      %1470 = vmatpush2.msra.mxu0 0.0
      %1471 = vmatprep.subr.mxu0 0.0
      %1472 = vmatpush2.msra.mxu0 0.0
      %1473 = vmatprep.subr.mxu0 0.0
      %1474 = vmatpush2.msra.mxu0 0.0
      %1475 = vmatprep.mubr.f32.mxu0 0.0
      %1476 = vmatmul.mubr.f32.gmra.mxu0 %v1406
      %v1477 = vpop.f32.mrf.mxu0
      %v1478 = vadd.f32 0.0, %v1477
      %v1479 = vpop.f32.mrf.mxu0
      %1480 = vdwg.mxu0
      %v1481 = vadd.f32 %v1397, %v1478
      %s1482 = scalar_lea.vmem %s4, 16
      %v1483 = vld [vmem:[%s1482] sm:$0xf]
      %v1485 = vsel %vm1160, %v1483, 0
      %v1487 = vsel %vm1164, %v1146, 0
      %1489 = vmatprep.subr.mxu0 0.0
      %1490 = vmatpush1.msra.mxu0 0.0
      %1491 = vmatprep.subr.mxu0 0.0
      %1492 = vmatpush1.msra.mxu0 0.0
      %1493 = vmatprep.subr.mxu0 0.0
      %1494 = vmatpush1.msra.mxu0 0.0
      %1495 = vmatprep.subr.mxu0 0.0
      %1496 = vmatpush1.msra.mxu0 0.0
      %1497 = vmatprep.subr.mxu0 0.0
      %1498 = vmatpush1.msra.mxu0 0.0
      %1499 = vmatprep.subr.mxu0 0.0
      %1500 = vmatpush1.msra.mxu0 0.0
      %1501 = vmatprep.subr.mxu0 0.0
      %1502 = vmatpush1.msra.mxu0 0.0
      %1503 = vmatprep.subr.mxu0 0.0
      %1504 = vmatpush1.msra.mxu0 0.0
      %1505 = vmatprep.subr.mxu0 0.0
      %1506 = vmatpush1.msra.mxu0 0.0
      %1507 = vmatprep.subr.mxu0 0.0
      %1508 = vmatpush1.msra.mxu0 0.0
      %1509 = vmatprep.subr.mxu0 0.0
      %1510 = vmatpush1.msra.mxu0 0.0
      %1511 = vmatprep.subr.mxu0 0.0
      %1512 = vmatpush1.msra.mxu0 0.0
      %1513 = vmatprep.subr.mxu0 0.0
      %1514 = vmatpush1.msra.mxu0 0.0
      %1515 = vmatprep.subr.mxu0 0.0
      %1516 = vmatpush1.msra.mxu0 0.0
      %1517 = vmatprep.subr.mxu0 0.0
      %1518 = vmatpush1.msra.mxu0 0.0
      %1519 = vmatprep.subr.mxu0 0.0
      %1520 = vmatpush1.msra.mxu0 %v1487
      %1521 = vmatprep.subr.mxu0 0.0
      %1522 = vmatpush2.msra.mxu0 0.0
      %1523 = vmatprep.subr.mxu0 0.0
      %1524 = vmatpush2.msra.mxu0 0.0
      %1525 = vmatprep.subr.mxu0 0.0
      %1526 = vmatpush2.msra.mxu0 0.0
      %1527 = vmatprep.subr.mxu0 0.0
      %1528 = vmatpush2.msra.mxu0 0.0
      %1529 = vmatprep.subr.mxu0 0.0
      %1530 = vmatpush2.msra.mxu0 0.0
      %1531 = vmatprep.subr.mxu0 0.0
      %1532 = vmatpush2.msra.mxu0 0.0
      %1533 = vmatprep.subr.mxu0 0.0
      %1534 = vmatpush2.msra.mxu0 0.0
      %1535 = vmatprep.subr.mxu0 0.0
      %1536 = vmatpush2.msra.mxu0 0.0
      %1537 = vmatprep.subr.mxu0 0.0
      %1538 = vmatpush2.msra.mxu0 0.0
      %1539 = vmatprep.subr.mxu0 0.0
      %1540 = vmatpush2.msra.mxu0 0.0
      %1541 = vmatprep.subr.mxu0 0.0
      %1542 = vmatpush2.msra.mxu0 0.0
      %1543 = vmatprep.subr.mxu0 0.0
      %1544 = vmatpush2.msra.mxu0 0.0
      %1545 = vmatprep.subr.mxu0 0.0
      %1546 = vmatpush2.msra.mxu0 0.0
      %1547 = vmatprep.subr.mxu0 0.0
      %1548 = vmatpush2.msra.mxu0 0.0
      %1549 = vmatprep.subr.mxu0 0.0
      %1550 = vmatpush2.msra.mxu0 0.0
      %1551 = vmatprep.subr.mxu0 0.0
      %1552 = vmatpush2.msra.mxu0 0.0
      %1553 = vmatprep.mubr.f32.mxu0 0.0
      %1554 = vmatmul.mubr.f32.gmra.mxu0 %v1485
      %v1555 = vpop.f32.mrf.mxu0
      %v1556 = vadd.f32 0.0, %v1555
      %v1557 = vpop.f32.mrf.mxu0
      %1558 = vdwg.mxu0
      %v1559 = vadd.f32 %v1481, %v1556
      %1560 = vrot.lane.b32.xlu0 %v1146, 127
      %v1561 = vpop.permute.xlu0 %1560
      %v1563 = vsel %vm799, %v1561, 0.0
      %v1564 = vsel %vm551, %v1563, 0.0
      %s1565 = scalar_lea.vmem %s4, 20
      %v1566 = vld [vmem:[%s1565] sm:$0xf]
      %v1568 = vsel %vm1160, %v1566, 0
      %v1571 = vsel %vm1164, %v1564, 0
      %1573 = vmatprep.subr.mxu0 0.0
      %1574 = vmatpush1.msra.mxu0 0.0
      %1575 = vmatprep.subr.mxu0 0.0
      %1576 = vmatpush1.msra.mxu0 0.0
      %1577 = vmatprep.subr.mxu0 0.0
      %1578 = vmatpush1.msra.mxu0 0.0
      %1579 = vmatprep.subr.mxu0 0.0
      %1580 = vmatpush1.msra.mxu0 0.0
      %1581 = vmatprep.subr.mxu0 0.0
      %1582 = vmatpush1.msra.mxu0 0.0
      %1583 = vmatprep.subr.mxu0 0.0
      %1584 = vmatpush1.msra.mxu0 0.0
      %1585 = vmatprep.subr.mxu0 0.0
      %1586 = vmatpush1.msra.mxu0 0.0
      %1587 = vmatprep.subr.mxu0 0.0
      %1588 = vmatpush1.msra.mxu0 0.0
      %1589 = vmatprep.subr.mxu0 0.0
      %1590 = vmatpush1.msra.mxu0 0.0
      %1591 = vmatprep.subr.mxu0 0.0
      %1592 = vmatpush1.msra.mxu0 0.0
      %1593 = vmatprep.subr.mxu0 0.0
      %1594 = vmatpush1.msra.mxu0 0.0
      %1595 = vmatprep.subr.mxu0 0.0
      %1596 = vmatpush1.msra.mxu0 0.0
      %1597 = vmatprep.subr.mxu0 0.0
      %1598 = vmatpush1.msra.mxu0 0.0
      %1599 = vmatprep.subr.mxu0 0.0
      %1600 = vmatpush1.msra.mxu0 0.0
      %1601 = vmatprep.subr.mxu0 0.0
      %1602 = vmatpush1.msra.mxu0 0.0
      %1603 = vmatprep.subr.mxu0 0.0
      %1604 = vmatpush1.msra.mxu0 %v1571
      %1605 = vmatprep.subr.mxu0 0.0
      %1606 = vmatpush2.msra.mxu0 0.0
      %1607 = vmatprep.subr.mxu0 0.0
      %1608 = vmatpush2.msra.mxu0 0.0
      %1609 = vmatprep.subr.mxu0 0.0
      %1610 = vmatpush2.msra.mxu0 0.0
      %1611 = vmatprep.subr.mxu0 0.0
      %1612 = vmatpush2.msra.mxu0 0.0
      %1613 = vmatprep.subr.mxu0 0.0
      %1614 = vmatpush2.msra.mxu0 0.0
      %1615 = vmatprep.subr.mxu0 0.0
      %1616 = vmatpush2.msra.mxu0 0.0
      %1617 = vmatprep.subr.mxu0 0.0
      %1618 = vmatpush2.msra.mxu0 0.0
      %1619 = vmatprep.subr.mxu0 0.0
      %1620 = vmatpush2.msra.mxu0 0.0
      %1621 = vmatprep.subr.mxu0 0.0
      %1622 = vmatpush2.msra.mxu0 0.0
      %1623 = vmatprep.subr.mxu0 0.0
      %1624 = vmatpush2.msra.mxu0 0.0
      %1625 = vmatprep.subr.mxu0 0.0
      %1626 = vmatpush2.msra.mxu0 0.0
      %1627 = vmatprep.subr.mxu0 0.0
      %1628 = vmatpush2.msra.mxu0 0.0
      %1629 = vmatprep.subr.mxu0 0.0
      %1630 = vmatpush2.msra.mxu0 0.0
      %1631 = vmatprep.subr.mxu0 0.0
      %1632 = vmatpush2.msra.mxu0 0.0
      %1633 = vmatprep.subr.mxu0 0.0
      %1634 = vmatpush2.msra.mxu0 0.0
      %1635 = vmatprep.subr.mxu0 0.0
      %1636 = vmatpush2.msra.mxu0 0.0
      %1637 = vmatprep.mubr.f32.mxu0 0.0
      %1638 = vmatmul.mubr.f32.gmra.mxu0 %v1568
      %v1639 = vpop.f32.mrf.mxu0
      %v1640 = vadd.f32 0.0, %v1639
      %v1641 = vpop.f32.mrf.mxu0
      %1642 = vdwg.mxu0
      %v1643 = vadd.f32 %v1559, %v1640
      %1644 = vrot.lane.b32.xlu0 %v1146, 121
      %v1645 = vpop.permute.xlu0 %1644
      %v1647 = vsel %vm886, %v1645, 0.0
      %v1648 = vsel %vm380, %v1647, 0.0
      %s1649 = scalar_lea.vmem %s4, 24
      %v1650 = vld [vmem:[%s1649] sm:$0xf]
      %v1652 = vsel %vm1160, %v1650, 0
      %v1655 = vsel %vm1164, %v1648, 0
      %1657 = vmatprep.subr.mxu0 0.0
      %1658 = vmatpush1.msra.mxu0 0.0
      %1659 = vmatprep.subr.mxu0 0.0
      %1660 = vmatpush1.msra.mxu0 0.0
      %1661 = vmatprep.subr.mxu0 0.0
      %1662 = vmatpush1.msra.mxu0 0.0
      %1663 = vmatprep.subr.mxu0 0.0
      %1664 = vmatpush1.msra.mxu0 0.0
      %1665 = vmatprep.subr.mxu0 0.0
      %1666 = vmatpush1.msra.mxu0 0.0
      %1667 = vmatprep.subr.mxu0 0.0
      %1668 = vmatpush1.msra.mxu0 0.0
      %1669 = vmatprep.subr.mxu0 0.0
      %1670 = vmatpush1.msra.mxu0 0.0
      %1671 = vmatprep.subr.mxu0 0.0
      %1672 = vmatpush1.msra.mxu0 0.0
      %1673 = vmatprep.subr.mxu0 0.0
      %1674 = vmatpush1.msra.mxu0 0.0
      %1675 = vmatprep.subr.mxu0 0.0
      %1676 = vmatpush1.msra.mxu0 0.0
      %1677 = vmatprep.subr.mxu0 0.0
      %1678 = vmatpush1.msra.mxu0 0.0
      %1679 = vmatprep.subr.mxu0 0.0
      %1680 = vmatpush1.msra.mxu0 0.0
      %1681 = vmatprep.subr.mxu0 0.0
      %1682 = vmatpush1.msra.mxu0 0.0
      %1683 = vmatprep.subr.mxu0 0.0
      %1684 = vmatpush1.msra.mxu0 0.0
      %1685 = vmatprep.subr.mxu0 0.0
      %1686 = vmatpush1.msra.mxu0 0.0
      %1687 = vmatprep.subr.mxu0 0.0
      %1688 = vmatpush1.msra.mxu0 %v1655
      %1689 = vmatprep.subr.mxu0 0.0
      %1690 = vmatpush2.msra.mxu0 0.0
      %1691 = vmatprep.subr.mxu0 0.0
      %1692 = vmatpush2.msra.mxu0 0.0
      %1693 = vmatprep.subr.mxu0 0.0
      %1694 = vmatpush2.msra.mxu0 0.0
      %1695 = vmatprep.subr.mxu0 0.0
      %1696 = vmatpush2.msra.mxu0 0.0
      %1697 = vmatprep.subr.mxu0 0.0
      %1698 = vmatpush2.msra.mxu0 0.0
      %1699 = vmatprep.subr.mxu0 0.0
      %1700 = vmatpush2.msra.mxu0 0.0
      %1701 = vmatprep.subr.mxu0 0.0
      %1702 = vmatpush2.msra.mxu0 0.0
      %1703 = vmatprep.subr.mxu0 0.0
      %1704 = vmatpush2.msra.mxu0 0.0
      %1705 = vmatprep.subr.mxu0 0.0
      %1706 = vmatpush2.msra.mxu0 0.0
      %1707 = vmatprep.subr.mxu0 0.0
      %1708 = vmatpush2.msra.mxu0 0.0
      %1709 = vmatprep.subr.mxu0 0.0
      %1710 = vmatpush2.msra.mxu0 0.0
      %1711 = vmatprep.subr.mxu0 0.0
      %1712 = vmatpush2.msra.mxu0 0.0
      %1713 = vmatprep.subr.mxu0 0.0
      %1714 = vmatpush2.msra.mxu0 0.0
      %1715 = vmatprep.subr.mxu0 0.0
      %1716 = vmatpush2.msra.mxu0 0.0
      %1717 = vmatprep.subr.mxu0 0.0
      %1718 = vmatpush2.msra.mxu0 0.0
      %1719 = vmatprep.subr.mxu0 0.0
      %1720 = vmatpush2.msra.mxu0 0.0
      %1721 = vmatprep.mubr.f32.mxu0 0.0
      %1722 = vmatmul.mubr.f32.gmra.mxu0 %v1652
      %v1723 = vpop.f32.mrf.mxu0
      %v1724 = vadd.f32 0.0, %v1723
      %v1725 = vpop.f32.mrf.mxu0
      %1726 = vdwg.mxu0
      %v1727 = vadd.f32 %v1643, %v1724
      %1728 = vrot.lane.b32.xlu0 %v1146, 120
      %v1729 = vpop.permute.xlu0 %1728
      %v1731 = vsel %vm973, %v1729, 0.0
      %s1732 = scalar_lea.vmem %s4, 28
      %v1733 = vld [vmem:[%s1732] sm:$0xf]
      %v1735 = vsel %vm1160, %v1733, 0
      %v1738 = vsel %vm1164, %v1731, 0
      %1740 = vmatprep.subr.mxu0 0.0
      %1741 = vmatpush1.msra.mxu0 0.0
      %1742 = vmatprep.subr.mxu0 0.0
      %1743 = vmatpush1.msra.mxu0 0.0
      %1744 = vmatprep.subr.mxu0 0.0
      %1745 = vmatpush1.msra.mxu0 0.0
      %1746 = vmatprep.subr.mxu0 0.0
      %1747 = vmatpush1.msra.mxu0 0.0
      %1748 = vmatprep.subr.mxu0 0.0
      %1749 = vmatpush1.msra.mxu0 0.0
      %1750 = vmatprep.subr.mxu0 0.0
      %1751 = vmatpush1.msra.mxu0 0.0
      %1752 = vmatprep.subr.mxu0 0.0
      %1753 = vmatpush1.msra.mxu0 0.0
      %1754 = vmatprep.subr.mxu0 0.0
      %1755 = vmatpush1.msra.mxu0 0.0
      %1756 = vmatprep.subr.mxu0 0.0
      %1757 = vmatpush1.msra.mxu0 0.0
      %1758 = vmatprep.subr.mxu0 0.0
      %1759 = vmatpush1.msra.mxu0 0.0
      %1760 = vmatprep.subr.mxu0 0.0
      %1761 = vmatpush1.msra.mxu0 0.0
      %1762 = vmatprep.subr.mxu0 0.0
      %1763 = vmatpush1.msra.mxu0 0.0
      %1764 = vmatprep.subr.mxu0 0.0
      %1765 = vmatpush1.msra.mxu0 0.0
      %1766 = vmatprep.subr.mxu0 0.0
      %1767 = vmatpush1.msra.mxu0 0.0
      %1768 = vmatprep.subr.mxu0 0.0
      %1769 = vmatpush1.msra.mxu0 0.0
      %1770 = vmatprep.subr.mxu0 0.0
      %1771 = vmatpush1.msra.mxu0 %v1738
      %1772 = vmatprep.subr.mxu0 0.0
      %1773 = vmatpush2.msra.mxu0 0.0
      %1774 = vmatprep.subr.mxu0 0.0
      %1775 = vmatpush2.msra.mxu0 0.0
      %1776 = vmatprep.subr.mxu0 0.0
      %1777 = vmatpush2.msra.mxu0 0.0
      %1778 = vmatprep.subr.mxu0 0.0
      %1779 = vmatpush2.msra.mxu0 0.0
      %1780 = vmatprep.subr.mxu0 0.0
      %1781 = vmatpush2.msra.mxu0 0.0
      %1782 = vmatprep.subr.mxu0 0.0
      %1783 = vmatpush2.msra.mxu0 0.0
      %1784 = vmatprep.subr.mxu0 0.0
      %1785 = vmatpush2.msra.mxu0 0.0
      %1786 = vmatprep.subr.mxu0 0.0
      %1787 = vmatpush2.msra.mxu0 0.0
      %1788 = vmatprep.subr.mxu0 0.0
      %1789 = vmatpush2.msra.mxu0 0.0
      %1790 = vmatprep.subr.mxu0 0.0
      %1791 = vmatpush2.msra.mxu0 0.0
      %1792 = vmatprep.subr.mxu0 0.0
      %1793 = vmatpush2.msra.mxu0 0.0
      %1794 = vmatprep.subr.mxu0 0.0
      %1795 = vmatpush2.msra.mxu0 0.0
      %1796 = vmatprep.subr.mxu0 0.0
      %1797 = vmatpush2.msra.mxu0 0.0
      %1798 = vmatprep.subr.mxu0 0.0
      %1799 = vmatpush2.msra.mxu0 0.0
      %1800 = vmatprep.subr.mxu0 0.0
      %1801 = vmatpush2.msra.mxu0 0.0
      %1802 = vmatprep.subr.mxu0 0.0
      %1803 = vmatpush2.msra.mxu0 0.0
      %1804 = vmatprep.mubr.f32.mxu0 0.0
      %1805 = vmatmul.mubr.f32.gmra.mxu0 %v1735
      %v1806 = vpop.f32.mrf.mxu0
      %v1807 = vadd.f32 0.0, %v1806
      %v1808 = vpop.f32.mrf.mxu0
      %1809 = vdwg.mxu0
      %v1810 = vadd.f32 %v1727, %v1807
      %1811 = vrot.lane.b32.xlu0 %v1146, 119
      %v1812 = vpop.permute.xlu0 %1811
      %v1814 = vsel %vm1058, %v1812, 0.0
      %v1815 = vsel %vm551, %v1814, 0.0
      %s1816 = scalar_lea.vmem %s4, 32
      %v1817 = vld [vmem:[%s1816] sm:$0xf]
      %v1819 = vsel %vm1160, %v1817, 0
      %v1822 = vsel %vm1164, %v1815, 0
      %1824 = vmatprep.subr.mxu0 0.0
      %1825 = vmatpush1.msra.mxu0 0.0
      %1826 = vmatprep.subr.mxu0 0.0
      %1827 = vmatpush1.msra.mxu0 0.0
      %1828 = vmatprep.subr.mxu0 0.0
      %1829 = vmatpush1.msra.mxu0 0.0
      %1830 = vmatprep.subr.mxu0 0.0
      %1831 = vmatpush1.msra.mxu0 0.0
      %1832 = vmatprep.subr.mxu0 0.0
      %1833 = vmatpush1.msra.mxu0 0.0
      %1834 = vmatprep.subr.mxu0 0.0
      %1835 = vmatpush1.msra.mxu0 0.0
      %1836 = vmatprep.subr.mxu0 0.0
      %1837 = vmatpush1.msra.mxu0 0.0
      %1838 = vmatprep.subr.mxu0 0.0
      %1839 = vmatpush1.msra.mxu0 0.0
      %1840 = vmatprep.subr.mxu0 0.0
      %1841 = vmatpush1.msra.mxu0 0.0
      %1842 = vmatprep.subr.mxu0 0.0
      %1843 = vmatpush1.msra.mxu0 0.0
      %1844 = vmatprep.subr.mxu0 0.0
      %1845 = vmatpush1.msra.mxu0 0.0
      %1846 = vmatprep.subr.mxu0 0.0
      %1847 = vmatpush1.msra.mxu0 0.0
      %1848 = vmatprep.subr.mxu0 0.0
      %1849 = vmatpush1.msra.mxu0 0.0
      %1850 = vmatprep.subr.mxu0 0.0
      %1851 = vmatpush1.msra.mxu0 0.0
      %1852 = vmatprep.subr.mxu0 0.0
      %1853 = vmatpush1.msra.mxu0 0.0
      %1854 = vmatprep.subr.mxu0 0.0
      %1855 = vmatpush1.msra.mxu0 %v1822
      %1856 = vmatprep.subr.mxu0 0.0
      %1857 = vmatpush2.msra.mxu0 0.0
      %1858 = vmatprep.subr.mxu0 0.0
      %1859 = vmatpush2.msra.mxu0 0.0
      %1860 = vmatprep.subr.mxu0 0.0
      %1861 = vmatpush2.msra.mxu0 0.0
      %1862 = vmatprep.subr.mxu0 0.0
      %1863 = vmatpush2.msra.mxu0 0.0
      %1864 = vmatprep.subr.mxu0 0.0
      %1865 = vmatpush2.msra.mxu0 0.0
      %1866 = vmatprep.subr.mxu0 0.0
      %1867 = vmatpush2.msra.mxu0 0.0
      %1868 = vmatprep.subr.mxu0 0.0
      %1869 = vmatpush2.msra.mxu0 0.0
      %1870 = vmatprep.subr.mxu0 0.0
      %1871 = vmatpush2.msra.mxu0 0.0
      %1872 = vmatprep.subr.mxu0 0.0
      %1873 = vmatpush2.msra.mxu0 0.0
      %1874 = vmatprep.subr.mxu0 0.0
      %1875 = vmatpush2.msra.mxu0 0.0
      %1876 = vmatprep.subr.mxu0 0.0
      %1877 = vmatpush2.msra.mxu0 0.0
      %1878 = vmatprep.subr.mxu0 0.0
      %1879 = vmatpush2.msra.mxu0 0.0
      %1880 = vmatprep.subr.mxu0 0.0
      %1881 = vmatpush2.msra.mxu0 0.0
      %1882 = vmatprep.subr.mxu0 0.0
      %1883 = vmatpush2.msra.mxu0 0.0
      %1884 = vmatprep.subr.mxu0 0.0
      %1885 = vmatpush2.msra.mxu0 0.0
      %1886 = vmatprep.subr.mxu0 0.0
      %1887 = vmatpush2.msra.mxu0 0.0
      %1888 = vmatprep.mubr.f32.mxu0 0.0
      %1889 = vmatmul.mubr.f32.gmra.mxu0 %v1819
      %v1890 = vpop.f32.mrf.mxu0
      %v1891 = vadd.f32 0.0, %v1890
      %v1892 = vpop.f32.mrf.mxu0
      %1893 = vdwg.mxu0
      %v1894 = vadd.f32 %v1810, %v1891
      %v1895 = vld [vmem:[%s5] sm:$0xf]
      %1897 = vset.pattern.permute.xlu0 0
      %1898 = vperm.xlu0 %1897, %v1895
      %v1899 = vpop.permute.xlu0 %1898
      %v1901 = vadd.f32 %v1894, %v1899
      %v1902 = vmax.f32 %v1901, 0.0
      %1904 = vrot.lane.b32.xlu0 %v1902, 9
      %v1905 = vpop.permute.xlu0 %1904
      %v1907 = vsel %vm377, 0.0, %v1905
      %v1908 = vsel %vm380, %v1907, 0.0
      %v1909 = vld [vmem:[%s6] sm:$0xf]
      %1910 = vrot.lane.b32.xlu0 %v1902, 8
      %v1911 = vpop.permute.xlu0 %1910
      %v1913 = vsel %vm390, 0.0, %v1911
      %s1914 = scalar_lea.vmem %s6, 4
      %v1915 = vld [vmem:[%s1914] sm:$0xf]
      %v1917 = vsel %vm1160, %v1915, 0
      %v1920 = vsel %vm1164, %v1913, 0
      %1922 = vmatprep.subr.mxu0 0.0
      %1923 = vmatpush1.msra.mxu0 0.0
      %1924 = vmatprep.subr.mxu0 0.0
      %1925 = vmatpush1.msra.mxu0 0.0
      %1926 = vmatprep.subr.mxu0 0.0
      %1927 = vmatpush1.msra.mxu0 0.0
      %1928 = vmatprep.subr.mxu0 0.0
      %1929 = vmatpush1.msra.mxu0 0.0
      %1930 = vmatprep.subr.mxu0 0.0
      %1931 = vmatpush1.msra.mxu0 0.0
      %1932 = vmatprep.subr.mxu0 0.0
      %1933 = vmatpush1.msra.mxu0 0.0
      %1934 = vmatprep.subr.mxu0 0.0
      %1935 = vmatpush1.msra.mxu0 0.0
      %1936 = vmatprep.subr.mxu0 0.0
      %1937 = vmatpush1.msra.mxu0 0.0
      %1938 = vmatprep.subr.mxu0 0.0
      %1939 = vmatpush1.msra.mxu0 0.0
      %1940 = vmatprep.subr.mxu0 0.0
      %1941 = vmatpush1.msra.mxu0 0.0
      %1942 = vmatprep.subr.mxu0 0.0
      %1943 = vmatpush1.msra.mxu0 0.0
      %1944 = vmatprep.subr.mxu0 0.0
      %1945 = vmatpush1.msra.mxu0 0.0
      %1946 = vmatprep.subr.mxu0 0.0
      %1947 = vmatpush1.msra.mxu0 0.0
      %1948 = vmatprep.subr.mxu0 0.0
      %1949 = vmatpush1.msra.mxu0 0.0
      %1950 = vmatprep.subr.mxu0 0.0
      %1951 = vmatpush1.msra.mxu0 0.0
      %1952 = vmatprep.subr.mxu0 0.0
      %1953 = vmatpush1.msra.mxu0 %v1920
      %1954 = vmatprep.subr.mxu0 0.0
      %1955 = vmatpush2.msra.mxu0 0.0
      %1956 = vmatprep.subr.mxu0 0.0
      %1957 = vmatpush2.msra.mxu0 0.0
      %1958 = vmatprep.subr.mxu0 0.0
      %1959 = vmatpush2.msra.mxu0 0.0
      %1960 = vmatprep.subr.mxu0 0.0
      %1961 = vmatpush2.msra.mxu0 0.0
      %1962 = vmatprep.subr.mxu0 0.0
      %1963 = vmatpush2.msra.mxu0 0.0
      %1964 = vmatprep.subr.mxu0 0.0
      %1965 = vmatpush2.msra.mxu0 0.0
      %1966 = vmatprep.subr.mxu0 0.0
      %1967 = vmatpush2.msra.mxu0 0.0
      %1968 = vmatprep.subr.mxu0 0.0
      %1969 = vmatpush2.msra.mxu0 0.0
      %1970 = vmatprep.subr.mxu0 0.0
      %1971 = vmatpush2.msra.mxu0 0.0
      %1972 = vmatprep.subr.mxu0 0.0
      %1973 = vmatpush2.msra.mxu0 0.0
      %1974 = vmatprep.subr.mxu0 0.0
      %1975 = vmatpush2.msra.mxu0 0.0
      %1976 = vmatprep.subr.mxu0 0.0
      %1977 = vmatpush2.msra.mxu0 0.0
      %1978 = vmatprep.subr.mxu0 0.0
      %1979 = vmatpush2.msra.mxu0 0.0
      %1980 = vmatprep.subr.mxu0 0.0
      %1981 = vmatpush2.msra.mxu0 0.0
      %1982 = vmatprep.subr.mxu0 0.0
      %1983 = vmatpush2.msra.mxu0 0.0
      %1984 = vmatprep.subr.mxu0 0.0
      %1985 = vmatpush2.msra.mxu0 0.0
      %1986 = vmatprep.mubr.f32.mxu0 0.0
      %1987 = vmatmul.mubr.f32.gmra.mxu0 %v1917
      %v1988 = vpop.f32.mrf.mxu0
      %v1989 = vadd.f32 0.0, %v1988
      %v1990 = vpop.f32.mrf.mxu0
      %1991 = vdwg.mxu0
      %v1993 = vsel %vm1160, %v1909, 0
      %v1996 = vsel %vm1164, %v1908, 0
      %1998 = vmatprep.subr.mxu0 0.0
      %1999 = vmatpush1.msra.mxu0 0.0
      %2000 = vmatprep.subr.mxu0 0.0
      %2001 = vmatpush1.msra.mxu0 0.0
      %2002 = vmatprep.subr.mxu0 0.0
      %2003 = vmatpush1.msra.mxu0 0.0
      %2004 = vmatprep.subr.mxu0 0.0
      %2005 = vmatpush1.msra.mxu0 0.0
      %2006 = vmatprep.subr.mxu0 0.0
      %2007 = vmatpush1.msra.mxu0 0.0
      %2008 = vmatprep.subr.mxu0 0.0
      %2009 = vmatpush1.msra.mxu0 0.0
      %2010 = vmatprep.subr.mxu0 0.0
      %2011 = vmatpush1.msra.mxu0 0.0
      %2012 = vmatprep.subr.mxu0 0.0
      %2013 = vmatpush1.msra.mxu0 0.0
      %2014 = vmatprep.subr.mxu0 0.0
      %2015 = vmatpush1.msra.mxu0 0.0
      %2016 = vmatprep.subr.mxu0 0.0
      %2017 = vmatpush1.msra.mxu0 0.0
      %2018 = vmatprep.subr.mxu0 0.0
      %2019 = vmatpush1.msra.mxu0 0.0
      %2020 = vmatprep.subr.mxu0 0.0
      %2021 = vmatpush1.msra.mxu0 0.0
      %2022 = vmatprep.subr.mxu0 0.0
      %2023 = vmatpush1.msra.mxu0 0.0
      %2024 = vmatprep.subr.mxu0 0.0
      %2025 = vmatpush1.msra.mxu0 0.0
      %2026 = vmatprep.subr.mxu0 0.0
      %2027 = vmatpush1.msra.mxu0 0.0
      %2028 = vmatprep.subr.mxu0 0.0
      %2029 = vmatpush1.msra.mxu0 %v1996
      %2030 = vmatprep.subr.mxu0 0.0
      %2031 = vmatpush2.msra.mxu0 0.0
      %2032 = vmatprep.subr.mxu0 0.0
      %2033 = vmatpush2.msra.mxu0 0.0
      %2034 = vmatprep.subr.mxu0 0.0
      %2035 = vmatpush2.msra.mxu0 0.0
      %2036 = vmatprep.subr.mxu0 0.0
      %2037 = vmatpush2.msra.mxu0 0.0
      %2038 = vmatprep.subr.mxu0 0.0
      %2039 = vmatpush2.msra.mxu0 0.0
      %2040 = vmatprep.subr.mxu0 0.0
      %2041 = vmatpush2.msra.mxu0 0.0
      %2042 = vmatprep.subr.mxu0 0.0
      %2043 = vmatpush2.msra.mxu0 0.0
      %2044 = vmatprep.subr.mxu0 0.0
      %2045 = vmatpush2.msra.mxu0 0.0
      %2046 = vmatprep.subr.mxu0 0.0
      %2047 = vmatpush2.msra.mxu0 0.0
      %2048 = vmatprep.subr.mxu0 0.0
      %2049 = vmatpush2.msra.mxu0 0.0
      %2050 = vmatprep.subr.mxu0 0.0
      %2051 = vmatpush2.msra.mxu0 0.0
      %2052 = vmatprep.subr.mxu0 0.0
      %2053 = vmatpush2.msra.mxu0 0.0
      %2054 = vmatprep.subr.mxu0 0.0
      %2055 = vmatpush2.msra.mxu0 0.0
      %2056 = vmatprep.subr.mxu0 0.0
      %2057 = vmatpush2.msra.mxu0 0.0
      %2058 = vmatprep.subr.mxu0 0.0
      %2059 = vmatpush2.msra.mxu0 0.0
      %2060 = vmatprep.subr.mxu0 0.0
      %2061 = vmatpush2.msra.mxu0 0.0
      %2062 = vmatprep.mubr.f32.mxu0 0.0
      %2063 = vmatmul.mubr.f32.gmra.mxu0 %v1993
      %v2064 = vpop.f32.mrf.mxu0
      %v2065 = vadd.f32 %v1989, %v2064
      %v2066 = vpop.f32.mrf.mxu0
      %2067 = vdwg.mxu0
      %2068 = vrot.lane.b32.xlu0 %v1902, 7
      %v2069 = vpop.permute.xlu0 %2068
      %v2071 = vsel %vm548, 0.0, %v2069
      %v2072 = vsel %vm551, %v2071, 0.0
      %s2073 = scalar_lea.vmem %s6, 8
      %v2074 = vld [vmem:[%s2073] sm:$0xf]
      %v2076 = vsel %vm1160, %v2074, 0
      %v2079 = vsel %vm1164, %v2072, 0
      %2081 = vmatprep.subr.mxu0 0.0
      %2082 = vmatpush1.msra.mxu0 0.0
      %2083 = vmatprep.subr.mxu0 0.0
      %2084 = vmatpush1.msra.mxu0 0.0
      %2085 = vmatprep.subr.mxu0 0.0
      %2086 = vmatpush1.msra.mxu0 0.0
      %2087 = vmatprep.subr.mxu0 0.0
      %2088 = vmatpush1.msra.mxu0 0.0
      %2089 = vmatprep.subr.mxu0 0.0
      %2090 = vmatpush1.msra.mxu0 0.0
      %2091 = vmatprep.subr.mxu0 0.0
      %2092 = vmatpush1.msra.mxu0 0.0
      %2093 = vmatprep.subr.mxu0 0.0
      %2094 = vmatpush1.msra.mxu0 0.0
      %2095 = vmatprep.subr.mxu0 0.0
      %2096 = vmatpush1.msra.mxu0 0.0
      %2097 = vmatprep.subr.mxu0 0.0
      %2098 = vmatpush1.msra.mxu0 0.0
      %2099 = vmatprep.subr.mxu0 0.0
      %2100 = vmatpush1.msra.mxu0 0.0
      %2101 = vmatprep.subr.mxu0 0.0
      %2102 = vmatpush1.msra.mxu0 0.0
      %2103 = vmatprep.subr.mxu0 0.0
      %2104 = vmatpush1.msra.mxu0 0.0
      %2105 = vmatprep.subr.mxu0 0.0
      %2106 = vmatpush1.msra.mxu0 0.0
      %2107 = vmatprep.subr.mxu0 0.0
      %2108 = vmatpush1.msra.mxu0 0.0
      %2109 = vmatprep.subr.mxu0 0.0
      %2110 = vmatpush1.msra.mxu0 0.0
      %2111 = vmatprep.subr.mxu0 0.0
      %2112 = vmatpush1.msra.mxu0 %v2079
      %2113 = vmatprep.subr.mxu0 0.0
      %2114 = vmatpush2.msra.mxu0 0.0
      %2115 = vmatprep.subr.mxu0 0.0
      %2116 = vmatpush2.msra.mxu0 0.0
      %2117 = vmatprep.subr.mxu0 0.0
      %2118 = vmatpush2.msra.mxu0 0.0
      %2119 = vmatprep.subr.mxu0 0.0
      %2120 = vmatpush2.msra.mxu0 0.0
      %2121 = vmatprep.subr.mxu0 0.0
      %2122 = vmatpush2.msra.mxu0 0.0
      %2123 = vmatprep.subr.mxu0 0.0
      %2124 = vmatpush2.msra.mxu0 0.0
      %2125 = vmatprep.subr.mxu0 0.0
      %2126 = vmatpush2.msra.mxu0 0.0
      %2127 = vmatprep.subr.mxu0 0.0
      %2128 = vmatpush2.msra.mxu0 0.0
      %2129 = vmatprep.subr.mxu0 0.0
      %2130 = vmatpush2.msra.mxu0 0.0
      %2131 = vmatprep.subr.mxu0 0.0
      %2132 = vmatpush2.msra.mxu0 0.0
      %2133 = vmatprep.subr.mxu0 0.0
      %2134 = vmatpush2.msra.mxu0 0.0
      %2135 = vmatprep.subr.mxu0 0.0
      %2136 = vmatpush2.msra.mxu0 0.0
      %2137 = vmatprep.subr.mxu0 0.0
      %2138 = vmatpush2.msra.mxu0 0.0
      %2139 = vmatprep.subr.mxu0 0.0
      %2140 = vmatpush2.msra.mxu0 0.0
      %2141 = vmatprep.subr.mxu0 0.0
      %2142 = vmatpush2.msra.mxu0 0.0
      %2143 = vmatprep.subr.mxu0 0.0
      %2144 = vmatpush2.msra.mxu0 0.0
      %2145 = vmatprep.mubr.f32.mxu0 0.0
      %2146 = vmatmul.mubr.f32.gmra.mxu0 %v2076
      %v2147 = vpop.f32.mrf.mxu0
      %v2148 = vadd.f32 0.0, %v2147
      %v2149 = vpop.f32.mrf.mxu0
      %2150 = vdwg.mxu0
      %v2151 = vadd.f32 %v2065, %v2148
      %2152 = vrot.lane.b32.xlu0 %v1902, 1
      %v2153 = vpop.permute.xlu0 %2152
      %v2155 = vsel %vm636, 0.0, %v2153
      %v2156 = vsel %vm380, %v2155, 0.0
      %s2157 = scalar_lea.vmem %s6, 12
      %v2158 = vld [vmem:[%s2157] sm:$0xf]
      %v2160 = vsel %vm1160, %v2158, 0
      %v2163 = vsel %vm1164, %v2156, 0
      %2165 = vmatprep.subr.mxu0 0.0
      %2166 = vmatpush1.msra.mxu0 0.0
      %2167 = vmatprep.subr.mxu0 0.0
      %2168 = vmatpush1.msra.mxu0 0.0
      %2169 = vmatprep.subr.mxu0 0.0
      %2170 = vmatpush1.msra.mxu0 0.0
      %2171 = vmatprep.subr.mxu0 0.0
      %2172 = vmatpush1.msra.mxu0 0.0
      %2173 = vmatprep.subr.mxu0 0.0
      %2174 = vmatpush1.msra.mxu0 0.0
      %2175 = vmatprep.subr.mxu0 0.0
      %2176 = vmatpush1.msra.mxu0 0.0
      %2177 = vmatprep.subr.mxu0 0.0
      %2178 = vmatpush1.msra.mxu0 0.0
      %2179 = vmatprep.subr.mxu0 0.0
      %2180 = vmatpush1.msra.mxu0 0.0
      %2181 = vmatprep.subr.mxu0 0.0
      %2182 = vmatpush1.msra.mxu0 0.0
      %2183 = vmatprep.subr.mxu0 0.0
      %2184 = vmatpush1.msra.mxu0 0.0
      %2185 = vmatprep.subr.mxu0 0.0
      %2186 = vmatpush1.msra.mxu0 0.0
      %2187 = vmatprep.subr.mxu0 0.0
      %2188 = vmatpush1.msra.mxu0 0.0
      %2189 = vmatprep.subr.mxu0 0.0
      %2190 = vmatpush1.msra.mxu0 0.0
      %2191 = vmatprep.subr.mxu0 0.0
      %2192 = vmatpush1.msra.mxu0 0.0
      %2193 = vmatprep.subr.mxu0 0.0
      %2194 = vmatpush1.msra.mxu0 0.0
      %2195 = vmatprep.subr.mxu0 0.0
      %2196 = vmatpush1.msra.mxu0 %v2163
      %2197 = vmatprep.subr.mxu0 0.0
      %2198 = vmatpush2.msra.mxu0 0.0
      %2199 = vmatprep.subr.mxu0 0.0
      %2200 = vmatpush2.msra.mxu0 0.0
      %2201 = vmatprep.subr.mxu0 0.0
      %2202 = vmatpush2.msra.mxu0 0.0
      %2203 = vmatprep.subr.mxu0 0.0
      %2204 = vmatpush2.msra.mxu0 0.0
      %2205 = vmatprep.subr.mxu0 0.0
      %2206 = vmatpush2.msra.mxu0 0.0
      %2207 = vmatprep.subr.mxu0 0.0
      %2208 = vmatpush2.msra.mxu0 0.0
      %2209 = vmatprep.subr.mxu0 0.0
      %2210 = vmatpush2.msra.mxu0 0.0
      %2211 = vmatprep.subr.mxu0 0.0
      %2212 = vmatpush2.msra.mxu0 0.0
      %2213 = vmatprep.subr.mxu0 0.0
      %2214 = vmatpush2.msra.mxu0 0.0
      %2215 = vmatprep.subr.mxu0 0.0
      %2216 = vmatpush2.msra.mxu0 0.0
      %2217 = vmatprep.subr.mxu0 0.0
      %2218 = vmatpush2.msra.mxu0 0.0
      %2219 = vmatprep.subr.mxu0 0.0
      %2220 = vmatpush2.msra.mxu0 0.0
      %2221 = vmatprep.subr.mxu0 0.0
      %2222 = vmatpush2.msra.mxu0 0.0
      %2223 = vmatprep.subr.mxu0 0.0
      %2224 = vmatpush2.msra.mxu0 0.0
      %2225 = vmatprep.subr.mxu0 0.0
      %2226 = vmatpush2.msra.mxu0 0.0
      %2227 = vmatprep.subr.mxu0 0.0
      %2228 = vmatpush2.msra.mxu0 0.0
      %2229 = vmatprep.mubr.f32.mxu0 0.0
      %2230 = vmatmul.mubr.f32.gmra.mxu0 %v2160
      %v2231 = vpop.f32.mrf.mxu0
      %v2232 = vadd.f32 0.0, %v2231
      %v2233 = vpop.f32.mrf.mxu0
      %2234 = vdwg.mxu0
      %v2235 = vadd.f32 %v2151, %v2232
      %s2236 = scalar_lea.vmem %s6, 16
      %v2237 = vld [vmem:[%s2236] sm:$0xf]
      %v2239 = vsel %vm1160, %v2237, 0
      %v2241 = vsel %vm1164, %v1902, 0
      %2243 = vmatprep.subr.mxu0 0.0
      %2244 = vmatpush1.msra.mxu0 0.0
      %2245 = vmatprep.subr.mxu0 0.0
      %2246 = vmatpush1.msra.mxu0 0.0
      %2247 = vmatprep.subr.mxu0 0.0
      %2248 = vmatpush1.msra.mxu0 0.0
      %2249 = vmatprep.subr.mxu0 0.0
      %2250 = vmatpush1.msra.mxu0 0.0
      %2251 = vmatprep.subr.mxu0 0.0
      %2252 = vmatpush1.msra.mxu0 0.0
      %2253 = vmatprep.subr.mxu0 0.0
      %2254 = vmatpush1.msra.mxu0 0.0
      %2255 = vmatprep.subr.mxu0 0.0
      %2256 = vmatpush1.msra.mxu0 0.0
      %2257 = vmatprep.subr.mxu0 0.0
      %2258 = vmatpush1.msra.mxu0 0.0
      %2259 = vmatprep.subr.mxu0 0.0
      %2260 = vmatpush1.msra.mxu0 0.0
      %2261 = vmatprep.subr.mxu0 0.0
      %2262 = vmatpush1.msra.mxu0 0.0
      %2263 = vmatprep.subr.mxu0 0.0
      %2264 = vmatpush1.msra.mxu0 0.0
      %2265 = vmatprep.subr.mxu0 0.0
      %2266 = vmatpush1.msra.mxu0 0.0
      %2267 = vmatprep.subr.mxu0 0.0
      %2268 = vmatpush1.msra.mxu0 0.0
      %2269 = vmatprep.subr.mxu0 0.0
      %2270 = vmatpush1.msra.mxu0 0.0
      %2271 = vmatprep.subr.mxu0 0.0
      %2272 = vmatpush1.msra.mxu0 0.0
      %2273 = vmatprep.subr.mxu0 0.0
      %2274 = vmatpush1.msra.mxu0 %v2241
      %2275 = vmatprep.subr.mxu0 0.0
      %2276 = vmatpush2.msra.mxu0 0.0
      %2277 = vmatprep.subr.mxu0 0.0
      %2278 = vmatpush2.msra.mxu0 0.0
      %2279 = vmatprep.subr.mxu0 0.0
      %2280 = vmatpush2.msra.mxu0 0.0
      %2281 = vmatprep.subr.mxu0 0.0
      %2282 = vmatpush2.msra.mxu0 0.0
      %2283 = vmatprep.subr.mxu0 0.0
      %2284 = vmatpush2.msra.mxu0 0.0
      %2285 = vmatprep.subr.mxu0 0.0
      %2286 = vmatpush2.msra.mxu0 0.0
      %2287 = vmatprep.subr.mxu0 0.0
      %2288 = vmatpush2.msra.mxu0 0.0
      %2289 = vmatprep.subr.mxu0 0.0
      %2290 = vmatpush2.msra.mxu0 0.0
      %2291 = vmatprep.subr.mxu0 0.0
      %2292 = vmatpush2.msra.mxu0 0.0
      %2293 = vmatprep.subr.mxu0 0.0
      %2294 = vmatpush2.msra.mxu0 0.0
      %2295 = vmatprep.subr.mxu0 0.0
      %2296 = vmatpush2.msra.mxu0 0.0
      %2297 = vmatprep.subr.mxu0 0.0
      %2298 = vmatpush2.msra.mxu0 0.0
      %2299 = vmatprep.subr.mxu0 0.0
      %2300 = vmatpush2.msra.mxu0 0.0
      %2301 = vmatprep.subr.mxu0 0.0
      %2302 = vmatpush2.msra.mxu0 0.0
      %2303 = vmatprep.subr.mxu0 0.0
      %2304 = vmatpush2.msra.mxu0 0.0
      %2305 = vmatprep.subr.mxu0 0.0
      %2306 = vmatpush2.msra.mxu0 0.0
      %2307 = vmatprep.mubr.f32.mxu0 0.0
      %2308 = vmatmul.mubr.f32.gmra.mxu0 %v2239
      %v2309 = vpop.f32.mrf.mxu0
      %v2310 = vadd.f32 0.0, %v2309
      %v2311 = vpop.f32.mrf.mxu0
      %2312 = vdwg.mxu0
      %v2313 = vadd.f32 %v2235, %v2310
      %2314 = vrot.lane.b32.xlu0 %v1902, 127
      %v2315 = vpop.permute.xlu0 %2314
      %v2317 = vsel %vm799, %v2315, 0.0
      %v2318 = vsel %vm551, %v2317, 0.0
      %s2319 = scalar_lea.vmem %s6, 20
      %v2320 = vld [vmem:[%s2319] sm:$0xf]
      %v2322 = vsel %vm1160, %v2320, 0
      %v2325 = vsel %vm1164, %v2318, 0
      %2327 = vmatprep.subr.mxu0 0.0
      %2328 = vmatpush1.msra.mxu0 0.0
      %2329 = vmatprep.subr.mxu0 0.0
      %2330 = vmatpush1.msra.mxu0 0.0
      %2331 = vmatprep.subr.mxu0 0.0
      %2332 = vmatpush1.msra.mxu0 0.0
      %2333 = vmatprep.subr.mxu0 0.0
      %2334 = vmatpush1.msra.mxu0 0.0
      %2335 = vmatprep.subr.mxu0 0.0
      %2336 = vmatpush1.msra.mxu0 0.0
      %2337 = vmatprep.subr.mxu0 0.0
      %2338 = vmatpush1.msra.mxu0 0.0
      %2339 = vmatprep.subr.mxu0 0.0
      %2340 = vmatpush1.msra.mxu0 0.0
      %2341 = vmatprep.subr.mxu0 0.0
      %2342 = vmatpush1.msra.mxu0 0.0
      %2343 = vmatprep.subr.mxu0 0.0
      %2344 = vmatpush1.msra.mxu0 0.0
      %2345 = vmatprep.subr.mxu0 0.0
      %2346 = vmatpush1.msra.mxu0 0.0
      %2347 = vmatprep.subr.mxu0 0.0
      %2348 = vmatpush1.msra.mxu0 0.0
      %2349 = vmatprep.subr.mxu0 0.0
      %2350 = vmatpush1.msra.mxu0 0.0
      %2351 = vmatprep.subr.mxu0 0.0
      %2352 = vmatpush1.msra.mxu0 0.0
      %2353 = vmatprep.subr.mxu0 0.0
      %2354 = vmatpush1.msra.mxu0 0.0
      %2355 = vmatprep.subr.mxu0 0.0
      %2356 = vmatpush1.msra.mxu0 0.0
      %2357 = vmatprep.subr.mxu0 0.0
      %2358 = vmatpush1.msra.mxu0 %v2325
      %2359 = vmatprep.subr.mxu0 0.0
      %2360 = vmatpush2.msra.mxu0 0.0
      %2361 = vmatprep.subr.mxu0 0.0
      %2362 = vmatpush2.msra.mxu0 0.0
      %2363 = vmatprep.subr.mxu0 0.0
      %2364 = vmatpush2.msra.mxu0 0.0
      %2365 = vmatprep.subr.mxu0 0.0
      %2366 = vmatpush2.msra.mxu0 0.0
      %2367 = vmatprep.subr.mxu0 0.0
      %2368 = vmatpush2.msra.mxu0 0.0
      %2369 = vmatprep.subr.mxu0 0.0
      %2370 = vmatpush2.msra.mxu0 0.0
      %2371 = vmatprep.subr.mxu0 0.0
      %2372 = vmatpush2.msra.mxu0 0.0
      %2373 = vmatprep.subr.mxu0 0.0
      %2374 = vmatpush2.msra.mxu0 0.0
      %2375 = vmatprep.subr.mxu0 0.0
      %2376 = vmatpush2.msra.mxu0 0.0
      %2377 = vmatprep.subr.mxu0 0.0
      %2378 = vmatpush2.msra.mxu0 0.0
      %2379 = vmatprep.subr.mxu0 0.0
      %2380 = vmatpush2.msra.mxu0 0.0
      %2381 = vmatprep.subr.mxu0 0.0
      %2382 = vmatpush2.msra.mxu0 0.0
      %2383 = vmatprep.subr.mxu0 0.0
      %2384 = vmatpush2.msra.mxu0 0.0
      %2385 = vmatprep.subr.mxu0 0.0
      %2386 = vmatpush2.msra.mxu0 0.0
      %2387 = vmatprep.subr.mxu0 0.0
      %2388 = vmatpush2.msra.mxu0 0.0
      %2389 = vmatprep.subr.mxu0 0.0
      %2390 = vmatpush2.msra.mxu0 0.0
      %2391 = vmatprep.mubr.f32.mxu0 0.0
      %2392 = vmatmul.mubr.f32.gmra.mxu0 %v2322
      %v2393 = vpop.f32.mrf.mxu0
      %v2394 = vadd.f32 0.0, %v2393
      %v2395 = vpop.f32.mrf.mxu0
      %2396 = vdwg.mxu0
      %v2397 = vadd.f32 %v2313, %v2394
      %2398 = vrot.lane.b32.xlu0 %v1902, 121
      %v2399 = vpop.permute.xlu0 %2398
      %v2401 = vsel %vm886, %v2399, 0.0
      %v2402 = vsel %vm380, %v2401, 0.0
      %s2403 = scalar_lea.vmem %s6, 24
      %v2404 = vld [vmem:[%s2403] sm:$0xf]
      %v2406 = vsel %vm1160, %v2404, 0
      %v2409 = vsel %vm1164, %v2402, 0
      %2411 = vmatprep.subr.mxu0 0.0
      %2412 = vmatpush1.msra.mxu0 0.0
      %2413 = vmatprep.subr.mxu0 0.0
      %2414 = vmatpush1.msra.mxu0 0.0
      %2415 = vmatprep.subr.mxu0 0.0
      %2416 = vmatpush1.msra.mxu0 0.0
      %2417 = vmatprep.subr.mxu0 0.0
      %2418 = vmatpush1.msra.mxu0 0.0
      %2419 = vmatprep.subr.mxu0 0.0
      %2420 = vmatpush1.msra.mxu0 0.0
      %2421 = vmatprep.subr.mxu0 0.0
      %2422 = vmatpush1.msra.mxu0 0.0
      %2423 = vmatprep.subr.mxu0 0.0
      %2424 = vmatpush1.msra.mxu0 0.0
      %2425 = vmatprep.subr.mxu0 0.0
      %2426 = vmatpush1.msra.mxu0 0.0
      %2427 = vmatprep.subr.mxu0 0.0
      %2428 = vmatpush1.msra.mxu0 0.0
      %2429 = vmatprep.subr.mxu0 0.0
      %2430 = vmatpush1.msra.mxu0 0.0
      %2431 = vmatprep.subr.mxu0 0.0
      %2432 = vmatpush1.msra.mxu0 0.0
      %2433 = vmatprep.subr.mxu0 0.0
      %2434 = vmatpush1.msra.mxu0 0.0
      %2435 = vmatprep.subr.mxu0 0.0
      %2436 = vmatpush1.msra.mxu0 0.0
      %2437 = vmatprep.subr.mxu0 0.0
      %2438 = vmatpush1.msra.mxu0 0.0
      %2439 = vmatprep.subr.mxu0 0.0
      %2440 = vmatpush1.msra.mxu0 0.0
      %2441 = vmatprep.subr.mxu0 0.0
      %2442 = vmatpush1.msra.mxu0 %v2409
      %2443 = vmatprep.subr.mxu0 0.0
      %2444 = vmatpush2.msra.mxu0 0.0
      %2445 = vmatprep.subr.mxu0 0.0
      %2446 = vmatpush2.msra.mxu0 0.0
      %2447 = vmatprep.subr.mxu0 0.0
      %2448 = vmatpush2.msra.mxu0 0.0
      %2449 = vmatprep.subr.mxu0 0.0
      %2450 = vmatpush2.msra.mxu0 0.0
      %2451 = vmatprep.subr.mxu0 0.0
      %2452 = vmatpush2.msra.mxu0 0.0
      %2453 = vmatprep.subr.mxu0 0.0
      %2454 = vmatpush2.msra.mxu0 0.0
      %2455 = vmatprep.subr.mxu0 0.0
      %2456 = vmatpush2.msra.mxu0 0.0
      %2457 = vmatprep.subr.mxu0 0.0
      %2458 = vmatpush2.msra.mxu0 0.0
      %2459 = vmatprep.subr.mxu0 0.0
      %2460 = vmatpush2.msra.mxu0 0.0
      %2461 = vmatprep.subr.mxu0 0.0
      %2462 = vmatpush2.msra.mxu0 0.0
      %2463 = vmatprep.subr.mxu0 0.0
      %2464 = vmatpush2.msra.mxu0 0.0
      %2465 = vmatprep.subr.mxu0 0.0
      %2466 = vmatpush2.msra.mxu0 0.0
      %2467 = vmatprep.subr.mxu0 0.0
      %2468 = vmatpush2.msra.mxu0 0.0
      %2469 = vmatprep.subr.mxu0 0.0
      %2470 = vmatpush2.msra.mxu0 0.0
      %2471 = vmatprep.subr.mxu0 0.0
      %2472 = vmatpush2.msra.mxu0 0.0
      %2473 = vmatprep.subr.mxu0 0.0
      %2474 = vmatpush2.msra.mxu0 0.0
      %2475 = vmatprep.mubr.f32.mxu0 0.0
      %2476 = vmatmul.mubr.f32.gmra.mxu0 %v2406
      %v2477 = vpop.f32.mrf.mxu0
      %v2478 = vadd.f32 0.0, %v2477
      %v2479 = vpop.f32.mrf.mxu0
      %2480 = vdwg.mxu0
      %v2481 = vadd.f32 %v2397, %v2478
      %2482 = vrot.lane.b32.xlu0 %v1902, 120
      %v2483 = vpop.permute.xlu0 %2482
      %v2485 = vsel %vm973, %v2483, 0.0
      %s2486 = scalar_lea.vmem %s6, 28
      %v2487 = vld [vmem:[%s2486] sm:$0xf]
      %v2489 = vsel %vm1160, %v2487, 0
      %v2492 = vsel %vm1164, %v2485, 0
      %2494 = vmatprep.subr.mxu0 0.0
      %2495 = vmatpush1.msra.mxu0 0.0
      %2496 = vmatprep.subr.mxu0 0.0
      %2497 = vmatpush1.msra.mxu0 0.0
      %2498 = vmatprep.subr.mxu0 0.0
      %2499 = vmatpush1.msra.mxu0 0.0
      %2500 = vmatprep.subr.mxu0 0.0
      %2501 = vmatpush1.msra.mxu0 0.0
      %2502 = vmatprep.subr.mxu0 0.0
      %2503 = vmatpush1.msra.mxu0 0.0
      %2504 = vmatprep.subr.mxu0 0.0
      %2505 = vmatpush1.msra.mxu0 0.0
      %2506 = vmatprep.subr.mxu0 0.0
      %2507 = vmatpush1.msra.mxu0 0.0
      %2508 = vmatprep.subr.mxu0 0.0
      %2509 = vmatpush1.msra.mxu0 0.0
      %2510 = vmatprep.subr.mxu0 0.0
      %2511 = vmatpush1.msra.mxu0 0.0
      %2512 = vmatprep.subr.mxu0 0.0
      %2513 = vmatpush1.msra.mxu0 0.0
      %2514 = vmatprep.subr.mxu0 0.0
      %2515 = vmatpush1.msra.mxu0 0.0
      %2516 = vmatprep.subr.mxu0 0.0
      %2517 = vmatpush1.msra.mxu0 0.0
      %2518 = vmatprep.subr.mxu0 0.0
      %2519 = vmatpush1.msra.mxu0 0.0
      %2520 = vmatprep.subr.mxu0 0.0
      %2521 = vmatpush1.msra.mxu0 0.0
      %2522 = vmatprep.subr.mxu0 0.0
      %2523 = vmatpush1.msra.mxu0 0.0
      %2524 = vmatprep.subr.mxu0 0.0
      %2525 = vmatpush1.msra.mxu0 %v2492
      %2526 = vmatprep.subr.mxu0 0.0
      %2527 = vmatpush2.msra.mxu0 0.0
      %2528 = vmatprep.subr.mxu0 0.0
      %2529 = vmatpush2.msra.mxu0 0.0
      %2530 = vmatprep.subr.mxu0 0.0
      %2531 = vmatpush2.msra.mxu0 0.0
      %2532 = vmatprep.subr.mxu0 0.0
      %2533 = vmatpush2.msra.mxu0 0.0
      %2534 = vmatprep.subr.mxu0 0.0
      %2535 = vmatpush2.msra.mxu0 0.0
      %2536 = vmatprep.subr.mxu0 0.0
      %2537 = vmatpush2.msra.mxu0 0.0
      %2538 = vmatprep.subr.mxu0 0.0
      %2539 = vmatpush2.msra.mxu0 0.0
      %2540 = vmatprep.subr.mxu0 0.0
      %2541 = vmatpush2.msra.mxu0 0.0
      %2542 = vmatprep.subr.mxu0 0.0
      %2543 = vmatpush2.msra.mxu0 0.0
      %2544 = vmatprep.subr.mxu0 0.0
      %2545 = vmatpush2.msra.mxu0 0.0
      %2546 = vmatprep.subr.mxu0 0.0
      %2547 = vmatpush2.msra.mxu0 0.0
      %2548 = vmatprep.subr.mxu0 0.0
      %2549 = vmatpush2.msra.mxu0 0.0
      %2550 = vmatprep.subr.mxu0 0.0
      %2551 = vmatpush2.msra.mxu0 0.0
      %2552 = vmatprep.subr.mxu0 0.0
      %2553 = vmatpush2.msra.mxu0 0.0
      %2554 = vmatprep.subr.mxu0 0.0
      %2555 = vmatpush2.msra.mxu0 0.0
      %2556 = vmatprep.subr.mxu0 0.0
      %2557 = vmatpush2.msra.mxu0 0.0
      %2558 = vmatprep.mubr.f32.mxu0 0.0
      %2559 = vmatmul.mubr.f32.gmra.mxu0 %v2489
      %v2560 = vpop.f32.mrf.mxu0
      %v2561 = vadd.f32 0.0, %v2560
      %v2562 = vpop.f32.mrf.mxu0
      %2563 = vdwg.mxu0
      %v2564 = vadd.f32 %v2481, %v2561
      %2565 = vrot.lane.b32.xlu0 %v1902, 119
      %v2566 = vpop.permute.xlu0 %2565
      %v2568 = vsel %vm1058, %v2566, 0.0
      %v2569 = vsel %vm551, %v2568, 0.0
      %s2570 = scalar_lea.vmem %s6, 32
      %v2571 = vld [vmem:[%s2570] sm:$0xf]
      %v2573 = vsel %vm1160, %v2571, 0
      %v2576 = vsel %vm1164, %v2569, 0
      %2578 = vmatprep.subr.mxu0 0.0
      %2579 = vmatpush1.msra.mxu0 0.0
      %2580 = vmatprep.subr.mxu0 0.0
      %2581 = vmatpush1.msra.mxu0 0.0
      %2582 = vmatprep.subr.mxu0 0.0
      %2583 = vmatpush1.msra.mxu0 0.0
      %2584 = vmatprep.subr.mxu0 0.0
      %2585 = vmatpush1.msra.mxu0 0.0
      %2586 = vmatprep.subr.mxu0 0.0
      %2587 = vmatpush1.msra.mxu0 0.0
      %2588 = vmatprep.subr.mxu0 0.0
      %2589 = vmatpush1.msra.mxu0 0.0
      %2590 = vmatprep.subr.mxu0 0.0
      %2591 = vmatpush1.msra.mxu0 0.0
      %2592 = vmatprep.subr.mxu0 0.0
      %2593 = vmatpush1.msra.mxu0 0.0
      %2594 = vmatprep.subr.mxu0 0.0
      %2595 = vmatpush1.msra.mxu0 0.0
      %2596 = vmatprep.subr.mxu0 0.0
      %2597 = vmatpush1.msra.mxu0 0.0
      %2598 = vmatprep.subr.mxu0 0.0
      %2599 = vmatpush1.msra.mxu0 0.0
      %2600 = vmatprep.subr.mxu0 0.0
      %2601 = vmatpush1.msra.mxu0 0.0
      %2602 = vmatprep.subr.mxu0 0.0
      %2603 = vmatpush1.msra.mxu0 0.0
      %2604 = vmatprep.subr.mxu0 0.0
      %2605 = vmatpush1.msra.mxu0 0.0
      %2606 = vmatprep.subr.mxu0 0.0
      %2607 = vmatpush1.msra.mxu0 0.0
      %2608 = vmatprep.subr.mxu0 0.0
      %2609 = vmatpush1.msra.mxu0 %v2576
      %2610 = vmatprep.subr.mxu0 0.0
      %2611 = vmatpush2.msra.mxu0 0.0
      %2612 = vmatprep.subr.mxu0 0.0
      %2613 = vmatpush2.msra.mxu0 0.0
      %2614 = vmatprep.subr.mxu0 0.0
      %2615 = vmatpush2.msra.mxu0 0.0
      %2616 = vmatprep.subr.mxu0 0.0
      %2617 = vmatpush2.msra.mxu0 0.0
      %2618 = vmatprep.subr.mxu0 0.0
      %2619 = vmatpush2.msra.mxu0 0.0
      %2620 = vmatprep.subr.mxu0 0.0
      %2621 = vmatpush2.msra.mxu0 0.0
      %2622 = vmatprep.subr.mxu0 0.0
      %2623 = vmatpush2.msra.mxu0 0.0
      %2624 = vmatprep.subr.mxu0 0.0
      %2625 = vmatpush2.msra.mxu0 0.0
      %2626 = vmatprep.subr.mxu0 0.0
      %2627 = vmatpush2.msra.mxu0 0.0
      %2628 = vmatprep.subr.mxu0 0.0
      %2629 = vmatpush2.msra.mxu0 0.0
      %2630 = vmatprep.subr.mxu0 0.0
      %2631 = vmatpush2.msra.mxu0 0.0
      %2632 = vmatprep.subr.mxu0 0.0
      %2633 = vmatpush2.msra.mxu0 0.0
      %2634 = vmatprep.subr.mxu0 0.0
      %2635 = vmatpush2.msra.mxu0 0.0
      %2636 = vmatprep.subr.mxu0 0.0
      %2637 = vmatpush2.msra.mxu0 0.0
      %2638 = vmatprep.subr.mxu0 0.0
      %2639 = vmatpush2.msra.mxu0 0.0
      %2640 = vmatprep.subr.mxu0 0.0
      %2641 = vmatpush2.msra.mxu0 0.0
      %2642 = vmatprep.mubr.f32.mxu0 0.0
      %2643 = vmatmul.mubr.f32.gmra.mxu0 %v2573
      %v2644 = vpop.f32.mrf.mxu0
      %v2645 = vadd.f32 0.0, %v2644
      %v2646 = vpop.f32.mrf.mxu0
      %2647 = vdwg.mxu0
      %v2648 = vadd.f32 %v2564, %v2645
      %v2649 = vld [vmem:[%s7] sm:$0xf]
      %2651 = vset.pattern.permute.xlu0 0
      %2652 = vperm.xlu0 %2651, %v2649
      %v2653 = vpop.permute.xlu0 %2652
      %v2655 = vadd.f32 %v2648, %v2653
      %v2656 = vsub.f32 0.0, %v2655
      %v2657 = vmul.f32 %v2656, 1.442695
      %v2658 = vpow.pop %v2657
      %v2659 = vadd.f32 %v2658, 1.0
      %v2660 = vrcp.pop %v2659
      %v2661 = vmul.f32 1.0, %v2660
      %v2662 = vld [vmem:[%s8] sm:$0xff]
      %v2663 = vld [vmem:[%s8 + $0x8] sm:$0xff]
      %v2664 = vld [vmem:[%s8 + $0x10] sm:$0xff]
      %v2665 = vld [vmem:[%s8 + $0x18] sm:$0xff]
      %v2666 = vld [vmem:[%s8 + $0x20] sm:$0xff]
      %v2667 = vld [vmem:[%s8 + $0x28] sm:$0xff]
      %v2668 = vld [vmem:[%s8 + $0x30] sm:$0xff]
      %v2669 = vld [vmem:[%s8 + $0x38] sm:$0xff]
      %v2670 = vld [vmem:[%s8 + $0x40] sm:$0xff]
      %v2671 = vld [vmem:[%s8 + $0x48] sm:$0xff]
      %v2672 = vld [vmem:[%s8 + $0x50] sm:$0xff]
      %v2673 = vld [vmem:[%s8 + $0x58] sm:$0xff]
      %v2674 = vld [vmem:[%s8 + $0x60] sm:$0xff]
      %v2675 = vld [vmem:[%s8 + $0x68] sm:$0xff]
      %v2676 = vld [vmem:[%s8 + $0x70] sm:$0xff]
      %v2677 = vld [vmem:[%s8 + $0x78] sm:$0xff]
      %vm2678 = vcmask 523264
      %v2680 = vsel %vm2678, %v2661, 0
      %2682 = vmatprep.subr.mxu0 0.0
      %2683 = vmatpush1.msra.mxu0 0.0
      %2684 = vmatprep.subr.mxu0 0.0
      %2685 = vmatpush1.msra.mxu0 0.0
      %2686 = vmatprep.subr.mxu0 0.0
      %2687 = vmatpush1.msra.mxu0 0.0
      %2688 = vmatprep.subr.mxu0 0.0
      %2689 = vmatpush1.msra.mxu0 0.0
      %2690 = vmatprep.subr.mxu0 0.0
      %2691 = vmatpush1.msra.mxu0 0.0
      %2692 = vmatprep.subr.mxu0 0.0
      %2693 = vmatpush1.msra.mxu0 0.0
      %2694 = vmatprep.subr.mxu0 0.0
      %2695 = vmatpush1.msra.mxu0 0.0
      %2696 = vmatprep.subr.mxu0 0.0
      %2697 = vmatpush1.msra.mxu0 0.0
      %2698 = vmatprep.subr.mxu0 %v2677
      %2699 = vmatpush1.msra.mxu0 %v2676
      %2700 = vmatprep.subr.mxu0 %v2675
      %2701 = vmatpush1.msra.mxu0 %v2674
      %2702 = vmatprep.subr.mxu0 %v2673
      %2703 = vmatpush1.msra.mxu0 %v2672
      %2704 = vmatprep.subr.mxu0 %v2671
      %2705 = vmatpush1.msra.mxu0 %v2670
      %2706 = vmatprep.subr.mxu0 %v2669
      %2707 = vmatpush1.msra.mxu0 %v2668
      %2708 = vmatprep.subr.mxu0 %v2667
      %2709 = vmatpush1.msra.mxu0 %v2666
      %2710 = vmatprep.subr.mxu0 %v2665
      %2711 = vmatpush1.msra.mxu0 %v2664
      %2712 = vmatprep.subr.mxu0 %v2663
      %2713 = vmatpush1.msra.mxu0 %v2662
      %2714 = vmatprep.subr.mxu0 0.0
      %2715 = vmatpush2.msra.mxu0 0.0
      %2716 = vmatprep.subr.mxu0 0.0
      %2717 = vmatpush2.msra.mxu0 0.0
      %2718 = vmatprep.subr.mxu0 0.0
      %2719 = vmatpush2.msra.mxu0 0.0
      %2720 = vmatprep.subr.mxu0 0.0
      %2721 = vmatpush2.msra.mxu0 0.0
      %2722 = vmatprep.subr.mxu0 0.0
      %2723 = vmatpush2.msra.mxu0 0.0
      %2724 = vmatprep.subr.mxu0 0.0
      %2725 = vmatpush2.msra.mxu0 0.0
      %2726 = vmatprep.subr.mxu0 0.0
      %2727 = vmatpush2.msra.mxu0 0.0
      %2728 = vmatprep.subr.mxu0 0.0
      %2729 = vmatpush2.msra.mxu0 0.0
      %2730 = vmatprep.subr.mxu0 0.0
      %2731 = vmatpush2.msra.mxu0 0.0
      %2732 = vmatprep.subr.mxu0 0.0
      %2733 = vmatpush2.msra.mxu0 0.0
      %2734 = vmatprep.subr.mxu0 0.0
      %2735 = vmatpush2.msra.mxu0 0.0
      %2736 = vmatprep.subr.mxu0 0.0
      %2737 = vmatpush2.msra.mxu0 0.0
      %2738 = vmatprep.subr.mxu0 0.0
      %2739 = vmatpush2.msra.mxu0 0.0
      %2740 = vmatprep.subr.mxu0 0.0
      %2741 = vmatpush2.msra.mxu0 0.0
      %2742 = vmatprep.subr.mxu0 0.0
      %2743 = vmatpush2.msra.mxu0 0.0
      %2744 = vmatprep.subr.mxu0 0.0
      %2745 = vmatpush2.msra.mxu0 0.0
      %2746 = vmatprep.mubr.f32.mxu0 0.0
      %2747 = vmatmul.mubr.f32.gmra.mxu0 %v2680
      %v2748 = vpop.f32.mrf.mxu0
      %v2749 = vadd.f32 0.0, %v2748
      %v2750 = vpop.f32.mrf.mxu0
      %v2751 = vadd.f32 0.0, %v2750
      %2752 = vdwg.mxu0
      %v2753 = vld [vmem:[%s347] sm:$0xff]
      %v2755 = vcombine.high %v2753, %v2753
      %v2757 = vmul.f32 %v2749, %v2753
      %v2758 = vmul.f32 %v2751, %v2755
      %v2761 = vcombine.low %v2757, %v2758
      %2763 = vst [vmem:[%s352] sm:$0xff] %v2761
      %p2764 = scmp.lt.s32.totalorder %s20, 1
      %s2765 = scalar_select %p2764, %s20, 1
      %s2766 = smul.addr %s2765, 2
      %s2767 = smul.addr %s2766, 4
      %s2768 = scalar_lea.vmem %s9, %s2767
      // Predicated region
      $region57: #{mfa_forward.1} parent=55 // pred_check
        %p2769 = pneg %p237
      $region58: #{mfa_forward.1} parent=55 // pred_check_branch
        %2771 = sbr.rel (%p2769) target = $region60
      $region59: #{mfa_forward.1} parent=55 // pred_region
        _
      $region60: #{mfa_forward.1} parent=55 // pred_fallthru
        _
    $region56: #{mfa_forward.1} parent=5 // pred_fallthru
      _
    %p2772 = scmp.le.s32.totalorder 2, %s15
    // Predicated region
    $region61: #{mfa_forward.1} parent=5 // pred_check
      %p2773 = pneg %p2772
    $region62: #{mfa_forward.1} parent=5 // pred_check_branch
      %2775 = sbr.rel (%p2773) target = $region64
    $region63: #{mfa_forward.1} parent=5 // pred_region
      %s2776 = ssub.s32 %s15, 2
      // Predicated region
      $region65: #{mfa_forward.1} parent=63 // pred_check
        %p2777 = pneg %p243
      $region66: #{mfa_forward.1} parent=63 // pred_check_branch
        %2779 = sbr.rel (%p2777) target = $region68
      $region67: #{mfa_forward.1} parent=63 // pred_region
        %p2780 = scmp.lt.s32.totalorder %s21, 1
        %s2781 = scalar_select %p2780, %s21, 1
        %s2782 = smul.addr %s2781, 2
        %s2783 = smul.addr %s2782, 4
        %s2784 = scalar_lea.vmem %s9, %s2783
      $region68: #{mfa_forward.1} parent=63 // pred_fallthru
        _
    $region64: #{mfa_forward.1} parent=5 // pred_fallthru
      _
  $region6: #{mfa_forward.1} parent=0 // loop_footer
    %s19 = sadd.s32 1, %s15
  $region7: #{mfa_forward.1} parent=0 // loop_footer_branch
    %14 = sbr.rel target = $region3
  $region8: #{mfa_forward.1} parent=0 // loop_exit
    _

</llo_original>
